<compile_context>
chip_gen: v7x
topology: tpu7x:2x2x1
jax: 0.10.0
libtpu: 0.0.40
codegen_flags: <defaults>
</compile_context>

<pallas_src>
import functools
import math

import jax
import jax.numpy as jnp
from jax.experimental import pallas as pl
from jax.experimental.pallas import tpu as pltpu

CLAMP = 1.0e6
NEG_BIAS = -1.0e9  # stands in for the -inf key_padding_mask fill (exp underflows to exact 0)


# ----------------------------------------------------------------------------
# Fused decoder-layer kernel: single invocation, everything resident in VMEM.
# ----------------------------------------------------------------------------
def _decoder_layer_kernel(
    # activations / labels
    tgt_ref,        # (L, D)      f32, L = bs*R*M, row = ((b*R)+r)*M + m
    mem_ref,        # (bs*S, D)   f32
    qlab_ref,       # (L, 4)      f32 rows: [b, r, m, valid]
    klab_ref,       # (4, L)      f32 rows: [b, r, m, r2r_key_pad_bias]
    mlab_ref,       # (2, bs*S)   f32 rows: [b, mem_pad_bias]
    mpos_ref,       # (L, D)      f32 (m_pos tiled per row)
    ln_ref,         # (8, D)      f32 rows: [g1,b1,g2,b2,g3,b3,g4,b4]
    # r2r attention weights (WqkvT (D,3D) bf16, bqkv (1,3D) f32, WoT (D,D) bf16, bo (1,D) f32)
    r2r_wqkv_ref, r2r_bqkv_ref, r2r_wo_ref, r2r_bo_ref,
    # m2m attention weights
    m2m_wqkv_ref, m2m_bqkv_ref, m2m_wo_ref, m2m_bo_ref,
    # cross attention weights
    ca_wqkv_ref, ca_bqkv_ref, ca_wo_ref, ca_bo_ref,
    # ffn weights (pre-transposed, bf16) + biases (f32)
    w1_ref, b1_ref, w2_ref, b2_ref,
    # output
    o_ref,          # (L, D) f32
    *, num_heads):
    D = tgt_ref.shape[-1]
    H = num_heads
    hd = D // H
    bf16 = jnp.bfloat16

    def layer_norm(x, g, b):
        mu = jnp.mean(x, axis=-1, keepdims=True)
        xc = x - mu
        var = jnp.mean(xc * xc, axis=-1, keepdims=True)
        return xc * jax.lax.rsqrt(var + 1e-5) * g + b

    def softmax(s):
        s = s - jnp.max(s, axis=-1, keepdims=True)
        p = jnp.exp(s)
        return p * pl.reciprocal(jnp.sum(p, axis=-1, keepdims=True), approx=True)

    def sdpa(q, k, v, bias, wo_t):
        # q: (Lq, D), k/v: (Lk, D), bias: (Lq, Lk) additive.  The 1/sqrt(hd)
        # scale is already folded into the q projection.  Per-head partial
        # output projections are summed -> no lane concatenate.
        q16, k16, v16 = q.astype(bf16), k.astype(bf16), v.astype(bf16)
        out = None
        for h in range(H):
            sl = slice(h * hd, (h + 1) * hd)
            s = jax.lax.dot_general(
                q16[:, sl], k16[:, sl],
                dimension_numbers=(((1,), (1,)), ((), ())),
                preferred_element_type=jnp.float32)                       # (Lq, Lk)
            p = softmax(s + bias)
            oh = jnp.dot(p.astype(bf16), v16[:, sl],
                         preferred_element_type=jnp.float32)              # (Lq, hd)
            contrib = jnp.dot(oh.astype(bf16), wo_t[sl, :],
                              preferred_element_type=jnp.float32)         # (Lq, D)
            out = contrib if out is None else out + contrib
        return out

    ln = ln_ref[...]

    # ---- build block-diagonal additive biases in-kernel (no O(N^2) HBM) -----
    qlab = qlab_ref[...]
    klab = klab_ref[...]
    mlab = mlab_ref[...]
    q_b, q_r, q_m = qlab[:, 0:1], qlab[:, 1:2], qlab[:, 2:3]
    valid = qlab[:, 3:4]                                                   # (L, 1) 0/1
    k_b, k_r, k_m = klab[0:1, :], klab[1:2, :], klab[2:3, :]
    k_pad = klab[3:4, :]                                                   # (1, L) 0 / NEG_BIAS
    r2r_bias = jnp.where((q_b == k_b) & (q_m == k_m), k_pad, NEG_BIAS)     # (L, L)
    m2m_bias = jnp.where((q_b == k_b) & (q_r == k_r), 0.0, NEG_BIAS)       # (L, L)
    ca_bias = jnp.where(q_b == mlab[0:1, :], mlab[1:2, :], NEG_BIAS)       # (L, bs*S)

    # ---- stage 1: r2r self-attention (block-diagonal over (b, m)) -----------
    x = jnp.clip(tgt_ref[...], -CLAMP, CLAMP)                              # (L, D) f32
    xn = layer_norm(x, ln[0:1, :], ln[1:2, :])
    qkv = jnp.dot(xn.astype(bf16), r2r_wqkv_ref[...],
                  preferred_element_type=jnp.float32) + r2r_bqkv_ref[...]  # (L, 3D)
    attn = sdpa(qkv[:, :D], qkv[:, D:2 * D], qkv[:, 2 * D:],
                r2r_bias, r2r_wo_ref[...])
    x = x + attn + r2r_bo_ref[...]

    # ---- stage 2: m2m self-attention (block-diagonal over (b, r)) -----------
    xc = jnp.clip(x, -CLAMP, CLAMP)
    xn = layer_norm(xc, ln[2:3, :], ln[3:4, :])
    qk_in = (xn + mpos_ref[...]).astype(bf16)                              # m_pos on q,k only
    wqkv = m2m_wqkv_ref[...]
    bqkv = m2m_bqkv_ref[...]
    qk = jnp.dot(qk_in, wqkv[:, :2 * D],
                 preferred_element_type=jnp.float32) + bqkv[:, :2 * D]
    v = jnp.dot(xn.astype(bf16), wqkv[:, 2 * D:],
                preferred_element_type=jnp.float32) + bqkv[:, 2 * D:]
    attn = sdpa(qk[:, :D], qk[:, D:], v, m2m_bias, m2m_wo_ref[...]) + m2m_bo_ref[...]
    # reference scatters only valid rows into a zero tensor -> 0/1 multiplier
    x = valid * (xc + attn)

    # ---- stage 3: cross attention to memory ----------------------------------
    xn = layer_norm(x, ln[4:5, :], ln[5:6, :])
    wqkv = ca_wqkv_ref[...]
    bqkv = ca_bqkv_ref[...]
    q = jnp.dot(xn.astype(bf16), wqkv[:, :D],
                preferred_element_type=jnp.float32) + bqkv[:, :D]
    kv = jnp.dot(mem_ref[...].astype(bf16), wqkv[:, D:],
                 preferred_element_type=jnp.float32) + bqkv[:, D:]
    attn = sdpa(q, kv[:, :D], kv[:, D:], ca_bias, ca_wo_ref[...])
    x = x + attn + ca_bo_ref[...]

    # ---- stage 4: FFN ---------------------------------------------------------
    xn = layer_norm(x, ln[6:7, :], ln[7:8, :])
    h1 = jnp.maximum(
        jnp.dot(xn.astype(bf16), w1_ref[...],
                preferred_element_type=jnp.float32) + b1_ref[...], 0.0)
    x = x + jnp.dot(h1.astype(bf16), w2_ref[...],
                    preferred_element_type=jnp.float32) + b2_ref[...]

    o_ref[...] = jnp.clip(x, -CLAMP, CLAMP)


# ----------------------------------------------------------------------------
# Wrapper: build O(N) label vectors + call the fused kernel once (grid=()).
# ----------------------------------------------------------------------------
def decoder_layer_forward(params, tgt, memory, tgt_key_padding_mask,
                          memory_key_padding_mask, m_pos, *, num_heads):
    bs, R, M, D = tgt.shape
    S = memory.shape[1]
    N = R * M
    L = bs * N
    f32 = jnp.float32

    tgt_flat = tgt.reshape(L, D).astype(f32)          # row = ((b*R)+r)*M + m (free view)
    mem_flat = memory.reshape(bs * S, D).astype(f32)

    # TODO(synk): the PyTorch early "return None if a tgt row is fully masked"
    # is host-side data-dependent control flow and is not reproduced here.

    n = jnp.arange(L)
    b_i = n // N
    r_i = (n % N) // M
    m_i = n % M

    # r2r key padding: PyTorch uses kpm.repeat(M, 1) against the (b m) attention
    # batch, i.e. sequence (b, m) reads mask row (b*M + m) % bs -- reproduced
    # exactly.  Since q and k are gated to the same (b, m) block, the per-key
    # bias below is sufficient.
    eff_b = (b_i * M + m_i) % bs
    key_pad = tgt_key_padding_mask[eff_b, r_i]                             # (L,)
    key_pad_bias = jnp.where(key_pad, NEG_BIAS, 0.0).astype(f32)

    valid = (~tgt_key_padding_mask[b_i, r_i]).astype(f32)                  # (L,)

    q_labels = jnp.stack(
        [b_i.astype(f32), r_i.astype(f32), m_i.astype(f32), valid], axis=1)   # (L, 4)
    k_labels = jnp.stack(
        [b_i.astype(f32), r_i.astype(f32), m_i.astype(f32), key_pad_bias], axis=0)  # (4, L)

    mem_b = (jnp.arange(bs * S) // S).astype(f32)
    mem_pad_bias = jnp.where(memory_key_padding_mask.reshape(-1),
                             NEG_BIAS, 0.0).astype(f32)
    mem_labels = jnp.stack([mem_b, mem_pad_bias], axis=0)                  # (2, bs*S)

    mpos_rows = jnp.tile(m_pos.reshape(M, D).astype(f32), (bs * R, 1))     # (L, D)

    args = [tgt_flat, mem_flat, q_labels, k_labels, mem_labels, mpos_rows,
            params["ln"]]
    for name in ("r2r", "m2m", "cross"):
        p = params[name]
        args += [p["wqkv"], p["bqkv"], p["wo"], p["bo"]]
    args += [params["ffn_w1"], params["ffn_b1"], params["ffn_w2"], params["ffn_b2"]]

    vmem = pl.BlockSpec(memory_space=pltpu.MemorySpace.VMEM)
    kern = functools.partial(_decoder_layer_kernel, num_heads=num_heads)
    out = pl.pallas_call(
        kern,
        out_shape=jax.ShapeDtypeStruct((L, D), f32),
        in_specs=[vmem] * len(args),
        out_specs=vmem,
    )(*args)
    return out.reshape(bs, R, M, D)


# ----------------------------------------------------------------------------
# One-time parameter packing: fuse QKV, pre-transpose, fold 1/sqrt(hd) into Wq,
# cast MXU weight operands to bf16 (biases stay f32 for the VPU adds).
# ----------------------------------------------------------------------------
def pack_mha_params(wq, bq, wk, bk, wv, bv, wo, bo, num_heads):
    d = wq.shape[0]
    scale = 1.0 / math.sqrt(d // num_heads)
    return {
        "wqkv": jnp.concatenate([wq * scale, wk, wv], axis=0).T.astype(jnp.bfloat16),
        "bqkv": jnp.concatenate([bq * scale, bk, bv]).reshape(1, 3 * d).astype(jnp.float32),
        "wo": jnp.transpose(wo).astype(jnp.bfloat16),           # (D, D) = Wo^T
        "bo": bo.reshape(1, d).astype(jnp.float32),
    }


def init_params(key, dim, mlp_ratio, num_heads):
    ks = iter(jax.random.split(key, 40))

    def lin(out_d, in_d):
        w = jax.random.normal(next(ks), (out_d, in_d), jnp.float32) * 0.02
        b = jax.random.normal(next(ks), (out_d,), jnp.float32) * 0.02
        return w, b

    def mha_packed():
        wq, bq = lin(dim, dim)
        wk, bk = lin(dim, dim)
        wv, bv = lin(dim, dim)
        wo, bo = lin(dim, dim)
        return pack_mha_params(wq, bq, wk, bk, wv, bv, wo, bo, num_heads)

    gammas = [jnp.ones((dim,), jnp.float32) for _ in range(4)]
    betas = [jnp.zeros((dim,), jnp.float32) for _ in range(4)]
    ln_pack = jnp.stack([v for gb in zip(gammas, betas) for v in gb], axis=0)  # (8, D)

    w1, b1 = lin(dim * mlp_ratio, dim)
    w2, b2 = lin(dim, dim * mlp_ratio)

    return {
        "ln": ln_pack,
        "r2r": mha_packed(),
        "m2m": mha_packed(),
        "cross": mha_packed(),
        "ffn_w1": w1.T.astype(jnp.bfloat16),                    # (D, Dh)
        "ffn_b1": b1.reshape(1, dim * mlp_ratio).astype(jnp.float32),
        "ffn_w2": w2.T.astype(jnp.bfloat16),                    # (Dh, D)
        "ffn_b2": b2.reshape(1, dim).astype(jnp.float32),
    }


if __name__ == "__main__":
    bs, R, M, D = 2, 4, 6, 32
    num_heads, mlp_ratio = 2, 4
    n_mem = 8

    key = jax.random.PRNGKey(0)
    k_param, k_tgt, k_mem, k_pos = jax.random.split(key, 4)

    params = init_params(k_param, D, mlp_ratio, num_heads)
    tgt = jax.random.normal(k_tgt, (bs, R, M, D), jnp.float32)
    memory = jax.random.normal(k_mem, (bs, n_mem, D), jnp.float32)
    m_pos = jax.random.normal(k_pos, (1, M, D), jnp.float32) * 0.1

    # key_padding_mask: True = ignore. No tgt row is all-True (module would return None).
    tgt_kpm = jnp.array([[False, False, True, False],
                         [False, True, False, False]], dtype=bool)
    mem_kpm = jnp.array([[False] * 6 + [True, True],
                         [False] * 7 + [True]], dtype=bool)

    fwd = jax.jit(functools.partial(decoder_layer_forward, num_heads=num_heads))
    out = fwd(params, tgt, memory, tgt_kpm, mem_kpm, m_pos)
    out = jax.block_until_ready(out)

    assert out.shape == (bs, R, M, D)
    assert bool(jnp.all(jnp.isfinite(out)))
    print("KERNEL_OK")
</pallas_src>

<mosaic_0001>
module attributes {stable_mosaic.version = 11 : i64} {
  func.func @_decoder_layer_kernel(%arg0: memref<48x32xf32, #tpu.memory_space<vmem>>, %arg1: memref<16x32xf32, #tpu.memory_space<vmem>>, %arg2: memref<48x4xf32, #tpu.memory_space<vmem>>, %arg3: memref<4x48xf32, #tpu.memory_space<vmem>>, %arg4: memref<2x16xf32, #tpu.memory_space<vmem>>, %arg5: memref<48x32xf32, #tpu.memory_space<vmem>>, %arg6: memref<8x32xf32, #tpu.memory_space<vmem>>, %arg7: memref<32x96xbf16, #tpu.memory_space<vmem>>, %arg8: memref<1x96xf32, #tpu.memory_space<vmem>>, %arg9: memref<32x32xbf16, #tpu.memory_space<vmem>>, %arg10: memref<1x32xf32, #tpu.memory_space<vmem>>, %arg11: memref<32x96xbf16, #tpu.memory_space<vmem>>, %arg12: memref<1x96xf32, #tpu.memory_space<vmem>>, %arg13: memref<32x32xbf16, #tpu.memory_space<vmem>>, %arg14: memref<1x32xf32, #tpu.memory_space<vmem>>, %arg15: memref<32x96xbf16, #tpu.memory_space<vmem>>, %arg16: memref<1x96xf32, #tpu.memory_space<vmem>>, %arg17: memref<32x32xbf16, #tpu.memory_space<vmem>>, %arg18: memref<1x32xf32, #tpu.memory_space<vmem>>, %arg19: memref<32x128xbf16, #tpu.memory_space<vmem>>, %arg20: memref<1x128xf32, #tpu.memory_space<vmem>>, %arg21: memref<128x32xbf16, #tpu.memory_space<vmem>>, %arg22: memref<1x32xf32, #tpu.memory_space<vmem>>, %arg23: memref<48x32xf32, #tpu.memory_space<vmem>>) attributes {dimension_semantics = [], scalar_prefetch = 0 : i64, scratch_operands = 0 : i64, tpu.core_type = #tpu.core_type<tc>} {
    %c0 = arith.constant 0 : index
    %c0_0 = arith.constant 0 : index
    %0 = vector.load %arg6[%c0, %c0_0] : memref<8x32xf32, #tpu.memory_space<vmem>>, vector<8x32xf32>
    %c0_1 = arith.constant 0 : index
    %c0_2 = arith.constant 0 : index
    %1 = vector.load %arg2[%c0_1, %c0_2] : memref<48x4xf32, #tpu.memory_space<vmem>>, vector<48x4xf32>
    %c0_3 = arith.constant 0 : index
    %c0_4 = arith.constant 0 : index
    %2 = vector.load %arg3[%c0_3, %c0_4] : memref<4x48xf32, #tpu.memory_space<vmem>>, vector<4x48xf32>
    %c0_5 = arith.constant 0 : index
    %c0_6 = arith.constant 0 : index
    %3 = vector.load %arg4[%c0_5, %c0_6] : memref<2x16xf32, #tpu.memory_space<vmem>>, vector<2x16xf32>
    %4 = vector.extract_strided_slice %1 {offsets = [0, 0], sizes = [48, 1], strides = [1, 1]} : vector<48x4xf32> to vector<48x1xf32>
    %5 = vector.extract_strided_slice %1 {offsets = [0, 1], sizes = [48, 1], strides = [1, 1]} : vector<48x4xf32> to vector<48x1xf32>
    %6 = vector.extract_strided_slice %1 {offsets = [0, 2], sizes = [48, 1], strides = [1, 1]} : vector<48x4xf32> to vector<48x1xf32>
    %7 = vector.extract_strided_slice %1 {offsets = [0, 3], sizes = [48, 1], strides = [1, 1]} : vector<48x4xf32> to vector<48x1xf32>
    %8 = vector.extract_strided_slice %2 {offsets = [0, 0], sizes = [1, 48], strides = [1, 1]} : vector<4x48xf32> to vector<1x48xf32>
    %9 = vector.extract_strided_slice %2 {offsets = [1, 0], sizes = [1, 48], strides = [1, 1]} : vector<4x48xf32> to vector<1x48xf32>
    %10 = vector.extract_strided_slice %2 {offsets = [2, 0], sizes = [1, 48], strides = [1, 1]} : vector<4x48xf32> to vector<1x48xf32>
    %11 = vector.extract_strided_slice %2 {offsets = [3, 0], sizes = [1, 48], strides = [1, 1]} : vector<4x48xf32> to vector<1x48xf32>
    %12 = vector.broadcast %4 : vector<48x1xf32> to vector<48x48xf32>
    %13 = vector.broadcast %8 : vector<1x48xf32> to vector<48x48xf32>
    %14 = arith.cmpf oeq, %12, %13 : vector<48x48xf32>
    %15 = vector.broadcast %6 : vector<48x1xf32> to vector<48x48xf32>
    %16 = vector.broadcast %10 : vector<1x48xf32> to vector<48x48xf32>
    %17 = arith.cmpf oeq, %15, %16 : vector<48x48xf32>
    %18 = arith.andi %14, %17 : vector<48x48xi1>
    %cst = arith.constant -1.000000e+09 : f32
    %19 = vector.shape_cast %11 : vector<1x48xf32> to vector<1x48xf32>
    %20 = vector.broadcast %19 : vector<1x48xf32> to vector<48x48xf32>
    %21 = vector.broadcast %cst : f32 to vector<48x48xf32>
    %22 = arith.select %18, %20, %21 : vector<48x48xi1>, vector<48x48xf32>
    %23 = vector.broadcast %4 : vector<48x1xf32> to vector<48x48xf32>
    %24 = vector.broadcast %8 : vector<1x48xf32> to vector<48x48xf32>
    %25 = arith.cmpf oeq, %23, %24 : vector<48x48xf32>
    %26 = vector.broadcast %5 : vector<48x1xf32> to vector<48x48xf32>
    %27 = vector.broadcast %9 : vector<1x48xf32> to vector<48x48xf32>
    %28 = arith.cmpf oeq, %26, %27 : vector<48x48xf32>
    %29 = arith.andi %25, %28 : vector<48x48xi1>
    %cst_7 = arith.constant 0.000000e+00 : f32
    %cst_8 = arith.constant -1.000000e+09 : f32
    %30 = vector.broadcast %cst_7 : f32 to vector<48x48xf32>
    %31 = vector.broadcast %cst_8 : f32 to vector<48x48xf32>
    %32 = arith.select %29, %30, %31 : vector<48x48xi1>, vector<48x48xf32>
    %33 = vector.extract_strided_slice %3 {offsets = [0, 0], sizes = [1, 16], strides = [1, 1]} : vector<2x16xf32> to vector<1x16xf32>
    %34 = vector.broadcast %4 : vector<48x1xf32> to vector<48x16xf32>
    %35 = vector.broadcast %33 : vector<1x16xf32> to vector<48x16xf32>
    %36 = arith.cmpf oeq, %34, %35 : vector<48x16xf32>
    %37 = vector.extract_strided_slice %3 {offsets = [1, 0], sizes = [1, 16], strides = [1, 1]} : vector<2x16xf32> to vector<1x16xf32>
    %cst_9 = arith.constant -1.000000e+09 : f32
    %38 = vector.shape_cast %37 : vector<1x16xf32> to vector<1x16xf32>
    %39 = vector.broadcast %38 : vector<1x16xf32> to vector<48x16xf32>
    %40 = vector.broadcast %cst_9 : f32 to vector<48x16xf32>
    %41 = arith.select %36, %39, %40 : vector<48x16xi1>, vector<48x16xf32>
    %c0_10 = arith.constant 0 : index
    %c0_11 = arith.constant 0 : index
    %42 = vector.load %arg0[%c0_10, %c0_11] : memref<48x32xf32, #tpu.memory_space<vmem>>, vector<48x32xf32>
    %cst_12 = arith.constant -1.000000e+06 : f32
    %cst_13 = arith.constant 1.000000e+06 : f32
    %43 = vector.broadcast %cst_12 : f32 to vector<48x32xf32>
    %44 = arith.maximumf %43, %42 : vector<48x32xf32>
    %45 = vector.broadcast %cst_13 : f32 to vector<48x32xf32>
    %46 = arith.minimumf %45, %44 : vector<48x32xf32>
    %47 = vector.extract_strided_slice %0 {offsets = [0, 0], sizes = [1, 32], strides = [1, 1]} : vector<8x32xf32> to vector<1x32xf32>
    %48 = vector.extract_strided_slice %0 {offsets = [1, 0], sizes = [1, 32], strides = [1, 1]} : vector<8x32xf32> to vector<1x32xf32>
    %cst_14 = arith.constant dense<0.000000e+00> : vector<48xf32>
    %49 = vector.multi_reduction <add>, %46, %cst_14 [1] : vector<48x32xf32> to vector<48xf32>
    %50 = vector.shape_cast %49 : vector<48xf32> to vector<48x1xf32>
    %cst_15 = arith.constant 3.200000e+01 : f32
    %51 = vector.broadcast %cst_15 : f32 to vector<48x1xf32>
    %52 = arith.divf %50, %51 : vector<48x1xf32>
    %53 = vector.broadcast %52 : vector<48x1xf32> to vector<48x32xf32>
    %54 = arith.subf %46, %53 : vector<48x32xf32>
    %55 = arith.mulf %54, %54 : vector<48x32xf32>
    %cst_16 = arith.constant dense<0.000000e+00> : vector<48xf32>
    %56 = vector.multi_reduction <add>, %55, %cst_16 [1] : vector<48x32xf32> to vector<48xf32>
    %57 = vector.shape_cast %56 : vector<48xf32> to vector<48x1xf32>
    %cst_17 = arith.constant 3.200000e+01 : f32
    %58 = vector.broadcast %cst_17 : f32 to vector<48x1xf32>
    %59 = arith.divf %57, %58 : vector<48x1xf32>
    %cst_18 = arith.constant 9.99999974E-6 : f32
    %60 = vector.broadcast %cst_18 : f32 to vector<48x1xf32>
    %61 = arith.addf %59, %60 : vector<48x1xf32>
    %62 = math.rsqrt %61 : vector<48x1xf32>
    %63 = vector.broadcast %62 : vector<48x1xf32> to vector<48x32xf32>
    %64 = arith.mulf %54, %63 : vector<48x32xf32>
    %65 = vector.broadcast %47 : vector<1x32xf32> to vector<48x32xf32>
    %66 = arith.mulf %64, %65 : vector<48x32xf32>
    %67 = vector.broadcast %48 : vector<1x32xf32> to vector<48x32xf32>
    %68 = arith.addf %66, %67 : vector<48x32xf32>
    %69 = arith.truncf %68 : vector<48x32xf32> to vector<48x32xbf16>
    %c0_19 = arith.constant 0 : index
    %c0_20 = arith.constant 0 : index
    %70 = vector.load %arg7[%c0_19, %c0_20] : memref<32x96xbf16, #tpu.memory_space<vmem>>, vector<32x96xbf16>
    %cst_21 = arith.constant dense<0.000000e+00> : vector<48x96xf32>
    %71 = tpu.matmul %69, %70, %cst_21 {dimension_numbers = #tpu.dot_dimension_numbers<[1], [0], [0], [1], [0, 0, 1, 1], [], []>} : vector<48x32xbf16>, vector<32x96xbf16>, vector<48x96xf32> -> vector<48x96xf32>
    %c0_22 = arith.constant 0 : index
    %c0_23 = arith.constant 0 : index
    %72 = vector.load %arg8[%c0_22, %c0_23] : memref<1x96xf32, #tpu.memory_space<vmem>>, vector<1x96xf32>
    %73 = vector.broadcast %72 : vector<1x96xf32> to vector<48x96xf32>
    %74 = arith.addf %71, %73 : vector<48x96xf32>
    %75 = vector.extract_strided_slice %74 {offsets = [0, 0], sizes = [48, 32], strides = [1, 1]} : vector<48x96xf32> to vector<48x32xf32>
    %76 = vector.extract_strided_slice %74 {offsets = [0, 32], sizes = [48, 32], strides = [1, 1]} : vector<48x96xf32> to vector<48x32xf32>
    %77 = vector.extract_strided_slice %74 {offsets = [0, 64], sizes = [48, 32], strides = [1, 1]} : vector<48x96xf32> to vector<48x32xf32>
    %c0_24 = arith.constant 0 : index
    %c0_25 = arith.constant 0 : index
    %78 = vector.load %arg9[%c0_24, %c0_25] : memref<32x32xbf16, #tpu.memory_space<vmem>>, vector<32x32xbf16>
    %79 = arith.truncf %75 : vector<48x32xf32> to vector<48x32xbf16>
    %80 = arith.truncf %76 : vector<48x32xf32> to vector<48x32xbf16>
    %81 = arith.truncf %77 : vector<48x32xf32> to vector<48x32xbf16>
    %82 = vector.extract_strided_slice %79 {offsets = [0, 0], sizes = [48, 16], strides = [1, 1]} : vector<48x32xbf16> to vector<48x16xbf16>
    %83 = vector.extract_strided_slice %80 {offsets = [0, 0], sizes = [48, 16], strides = [1, 1]} : vector<48x32xbf16> to vector<48x16xbf16>
    %cst_26 = arith.constant dense<0.000000e+00> : vector<48x48xf32>
    %84 = tpu.matmul %82, %83, %cst_26 {dimension_numbers = #tpu.dot_dimension_numbers<[1], [1], [0], [0], [0, 0, 1, 0], [], []>} : vector<48x16xbf16>, vector<48x16xbf16>, vector<48x48xf32> -> vector<48x48xf32>
    %85 = arith.addf %84, %22 : vector<48x48xf32>
    %cst_27 = arith.constant dense<0xFF800000> : vector<48xf32>
    %86 = vector.multi_reduction <maximumf>, %85, %cst_27 [1] : vector<48x48xf32> to vector<48xf32>
    %87 = vector.shape_cast %86 : vector<48xf32> to vector<48x1xf32>
    %88 = vector.broadcast %87 : vector<48x1xf32> to vector<48x48xf32>
    %89 = arith.subf %85, %88 : vector<48x48xf32>
    %90 = math.exp %89 : vector<48x48xf32>
    %cst_28 = arith.constant dense<0.000000e+00> : vector<48xf32>
    %91 = vector.multi_reduction <add>, %90, %cst_28 [1] : vector<48x48xf32> to vector<48xf32>
    %92 = vector.shape_cast %91 : vector<48xf32> to vector<48x1xf32>
    %93 = tpu.reciprocal %92 {approx = true} : vector<48x1xf32> -> vector<48x1xf32>
    %94 = vector.broadcast %93 : vector<48x1xf32> to vector<48x48xf32>
    %95 = arith.mulf %90, %94 : vector<48x48xf32>
    %96 = arith.truncf %95 : vector<48x48xf32> to vector<48x48xbf16>
    %97 = vector.extract_strided_slice %81 {offsets = [0, 0], sizes = [48, 16], strides = [1, 1]} : vector<48x32xbf16> to vector<48x16xbf16>
    %cst_29 = arith.constant dense<0.000000e+00> : vector<48x16xf32>
    %98 = tpu.matmul %96, %97, %cst_29 {dimension_numbers = #tpu.dot_dimension_numbers<[1], [0], [0], [1], [0, 0, 1, 1], [], []>} : vector<48x48xbf16>, vector<48x16xbf16>, vector<48x16xf32> -> vector<48x16xf32>
    %99 = arith.truncf %98 : vector<48x16xf32> to vector<48x16xbf16>
    %100 = vector.extract_strided_slice %78 {offsets = [0, 0], sizes = [16, 32], strides = [1, 1]} : vector<32x32xbf16> to vector<16x32xbf16>
    %cst_30 = arith.constant dense<0.000000e+00> : vector<48x32xf32>
    %101 = tpu.matmul %99, %100, %cst_30 {dimension_numbers = #tpu.dot_dimension_numbers<[1], [0], [0], [1], [0, 0, 1, 1], [], []>} : vector<48x16xbf16>, vector<16x32xbf16>, vector<48x32xf32> -> vector<48x32xf32>
    %102 = vector.extract_strided_slice %79 {offsets = [0, 16], sizes = [48, 16], strides = [1, 1]} : vector<48x32xbf16> to vector<48x16xbf16>
    %103 = vector.extract_strided_slice %80 {offsets = [0, 16], sizes = [48, 16], strides = [1, 1]} : vector<48x32xbf16> to vector<48x16xbf16>
    %cst_31 = arith.constant dense<0.000000e+00> : vector<48x48xf32>
    %104 = tpu.matmul %102, %103, %cst_31 {dimension_numbers = #tpu.dot_dimension_numbers<[1], [1], [0], [0], [0, 0, 1, 0], [], []>} : vector<48x16xbf16>, vector<48x16xbf16>, vector<48x48xf32> -> vector<48x48xf32>
    %105 = arith.addf %104, %22 : vector<48x48xf32>
    %cst_32 = arith.constant dense<0xFF800000> : vector<48xf32>
    %106 = vector.multi_reduction <maximumf>, %105, %cst_32 [1] : vector<48x48xf32> to vector<48xf32>
    %107 = vector.shape_cast %106 : vector<48xf32> to vector<48x1xf32>
    %108 = vector.broadcast %107 : vector<48x1xf32> to vector<48x48xf32>
    %109 = arith.subf %105, %108 : vector<48x48xf32>
    %110 = math.exp %109 : vector<48x48xf32>
    %cst_33 = arith.constant dense<0.000000e+00> : vector<48xf32>
    %111 = vector.multi_reduction <add>, %110, %cst_33 [1] : vector<48x48xf32> to vector<48xf32>
    %112 = vector.shape_cast %111 : vector<48xf32> to vector<48x1xf32>
    %113 = tpu.reciprocal %112 {approx = true} : vector<48x1xf32> -> vector<48x1xf32>
    %114 = vector.broadcast %113 : vector<48x1xf32> to vector<48x48xf32>
    %115 = arith.mulf %110, %114 : vector<48x48xf32>
    %116 = arith.truncf %115 : vector<48x48xf32> to vector<48x48xbf16>
    %117 = vector.extract_strided_slice %81 {offsets = [0, 16], sizes = [48, 16], strides = [1, 1]} : vector<48x32xbf16> to vector<48x16xbf16>
    %cst_34 = arith.constant dense<0.000000e+00> : vector<48x16xf32>
    %118 = tpu.matmul %116, %117, %cst_34 {dimension_numbers = #tpu.dot_dimension_numbers<[1], [0], [0], [1], [0, 0, 1, 1], [], []>} : vector<48x48xbf16>, vector<48x16xbf16>, vector<48x16xf32> -> vector<48x16xf32>
    %119 = arith.truncf %118 : vector<48x16xf32> to vector<48x16xbf16>
    %120 = vector.extract_strided_slice %78 {offsets = [16, 0], sizes = [16, 32], strides = [1, 1]} : vector<32x32xbf16> to vector<16x32xbf16>
    %cst_35 = arith.constant dense<0.000000e+00> : vector<48x32xf32>
    %121 = tpu.matmul %119, %120, %cst_35 {dimension_numbers = #tpu.dot_dimension_numbers<[1], [0], [0], [1], [0, 0, 1, 1], [], []>} : vector<48x16xbf16>, vector<16x32xbf16>, vector<48x32xf32> -> vector<48x32xf32>
    %122 = arith.addf %101, %121 : vector<48x32xf32>
    %123 = arith.addf %46, %122 : vector<48x32xf32>
    %c0_36 = arith.constant 0 : index
    %c0_37 = arith.constant 0 : index
    %124 = vector.load %arg10[%c0_36, %c0_37] : memref<1x32xf32, #tpu.memory_space<vmem>>, vector<1x32xf32>
    %125 = vector.broadcast %124 : vector<1x32xf32> to vector<48x32xf32>
    %126 = arith.addf %123, %125 : vector<48x32xf32>
    %cst_38 = arith.constant -1.000000e+06 : f32
    %cst_39 = arith.constant 1.000000e+06 : f32
    %127 = vector.broadcast %cst_38 : f32 to vector<48x32xf32>
    %128 = arith.maximumf %127, %126 : vector<48x32xf32>
    %129 = vector.broadcast %cst_39 : f32 to vector<48x32xf32>
    %130 = arith.minimumf %129, %128 : vector<48x32xf32>
    %131 = vector.extract_strided_slice %0 {offsets = [2, 0], sizes = [1, 32], strides = [1, 1]} : vector<8x32xf32> to vector<1x32xf32>
    %132 = vector.extract_strided_slice %0 {offsets = [3, 0], sizes = [1, 32], strides = [1, 1]} : vector<8x32xf32> to vector<1x32xf32>
    %cst_40 = arith.constant dense<0.000000e+00> : vector<48xf32>
    %133 = vector.multi_reduction <add>, %130, %cst_40 [1] : vector<48x32xf32> to vector<48xf32>
    %134 = vector.shape_cast %133 : vector<48xf32> to vector<48x1xf32>
    %cst_41 = arith.constant 3.200000e+01 : f32
    %135 = vector.broadcast %cst_41 : f32 to vector<48x1xf32>
    %136 = arith.divf %134, %135 : vector<48x1xf32>
    %137 = vector.broadcast %136 : vector<48x1xf32> to vector<48x32xf32>
    %138 = arith.subf %130, %137 : vector<48x32xf32>
    %139 = arith.mulf %138, %138 : vector<48x32xf32>
    %cst_42 = arith.constant dense<0.000000e+00> : vector<48xf32>
    %140 = vector.multi_reduction <add>, %139, %cst_42 [1] : vector<48x32xf32> to vector<48xf32>
    %141 = vector.shape_cast %140 : vector<48xf32> to vector<48x1xf32>
    %cst_43 = arith.constant 3.200000e+01 : f32
    %142 = vector.broadcast %cst_43 : f32 to vector<48x1xf32>
    %143 = arith.divf %141, %142 : vector<48x1xf32>
    %cst_44 = arith.constant 9.99999974E-6 : f32
    %144 = vector.broadcast %cst_44 : f32 to vector<48x1xf32>
    %145 = arith.addf %143, %144 : vector<48x1xf32>
    %146 = math.rsqrt %145 : vector<48x1xf32>
    %147 = vector.broadcast %146 : vector<48x1xf32> to vector<48x32xf32>
    %148 = arith.mulf %138, %147 : vector<48x32xf32>
    %149 = vector.broadcast %131 : vector<1x32xf32> to vector<48x32xf32>
    %150 = arith.mulf %148, %149 : vector<48x32xf32>
    %151 = vector.broadcast %132 : vector<1x32xf32> to vector<48x32xf32>
    %152 = arith.addf %150, %151 : vector<48x32xf32>
    %c0_45 = arith.constant 0 : index
    %c0_46 = arith.constant 0 : index
    %153 = vector.load %arg5[%c0_45, %c0_46] : memref<48x32xf32, #tpu.memory_space<vmem>>, vector<48x32xf32>
    %154 = arith.addf %152, %153 : vector<48x32xf32>
    %155 = arith.truncf %154 : vector<48x32xf32> to vector<48x32xbf16>
    %c0_47 = arith.constant 0 : index
    %c0_48 = arith.constant 0 : index
    %156 = vector.load %arg11[%c0_47, %c0_48] : memref<32x96xbf16, #tpu.memory_space<vmem>>, vector<32x96xbf16>
    %c0_49 = arith.constant 0 : index
    %c0_50 = arith.constant 0 : index
    %157 = vector.load %arg12[%c0_49, %c0_50] : memref<1x96xf32, #tpu.memory_space<vmem>>, vector<1x96xf32>
    %158 = vector.extract_strided_slice %156 {offsets = [0, 0], sizes = [32, 64], strides = [1, 1]} : vector<32x96xbf16> to vector<32x64xbf16>
    %cst_51 = arith.constant dense<0.000000e+00> : vector<48x64xf32>
    %159 = tpu.matmul %155, %158, %cst_51 {dimension_numbers = #tpu.dot_dimension_numbers<[1], [0], [0], [1], [0, 0, 1, 1], [], []>} : vector<48x32xbf16>, vector<32x64xbf16>, vector<48x64xf32> -> vector<48x64xf32>
    %160 = vector.extract_strided_slice %157 {offsets = [0, 0], sizes = [1, 64], strides = [1, 1]} : vector<1x96xf32> to vector<1x64xf32>
    %161 = vector.broadcast %160 : vector<1x64xf32> to vector<48x64xf32>
    %162 = arith.addf %159, %161 : vector<48x64xf32>
    %163 = arith.truncf %152 : vector<48x32xf32> to vector<48x32xbf16>
    %164 = vector.extract_strided_slice %156 {offsets = [0, 64], sizes = [32, 32], strides = [1, 1]} : vector<32x96xbf16> to vector<32x32xbf16>
    %cst_52 = arith.constant dense<0.000000e+00> : vector<48x32xf32>
    %165 = tpu.matmul %163, %164, %cst_52 {dimension_numbers = #tpu.dot_dimension_numbers<[1], [0], [0], [1], [0, 0, 1, 1], [], []>} : vector<48x32xbf16>, vector<32x32xbf16>, vector<48x32xf32> -> vector<48x32xf32>
    %166 = vector.extract_strided_slice %157 {offsets = [0, 64], sizes = [1, 32], strides = [1, 1]} : vector<1x96xf32> to vector<1x32xf32>
    %167 = vector.broadcast %166 : vector<1x32xf32> to vector<48x32xf32>
    %168 = arith.addf %165, %167 : vector<48x32xf32>
    %169 = vector.extract_strided_slice %162 {offsets = [0, 0], sizes = [48, 32], strides = [1, 1]} : vector<48x64xf32> to vector<48x32xf32>
    %170 = vector.extract_strided_slice %162 {offsets = [0, 32], sizes = [48, 32], strides = [1, 1]} : vector<48x64xf32> to vector<48x32xf32>
    %c0_53 = arith.constant 0 : index
    %c0_54 = arith.constant 0 : index
    %171 = vector.load %arg13[%c0_53, %c0_54] : memref<32x32xbf16, #tpu.memory_space<vmem>>, vector<32x32xbf16>
    %172 = arith.truncf %169 : vector<48x32xf32> to vector<48x32xbf16>
    %173 = arith.truncf %170 : vector<48x32xf32> to vector<48x32xbf16>
    %174 = arith.truncf %168 : vector<48x32xf32> to vector<48x32xbf16>
    %175 = vector.extract_strided_slice %172 {offsets = [0, 0], sizes = [48, 16], strides = [1, 1]} : vector<48x32xbf16> to vector<48x16xbf16>
    %176 = vector.extract_strided_slice %173 {offsets = [0, 0], sizes = [48, 16], strides = [1, 1]} : vector<48x32xbf16> to vector<48x16xbf16>
    %cst_55 = arith.constant dense<0.000000e+00> : vector<48x48xf32>
    %177 = tpu.matmul %175, %176, %cst_55 {dimension_numbers = #tpu.dot_dimension_numbers<[1], [1], [0], [0], [0, 0, 1, 0], [], []>} : vector<48x16xbf16>, vector<48x16xbf16>, vector<48x48xf32> -> vector<48x48xf32>
    %178 = arith.addf %177, %32 : vector<48x48xf32>
    %cst_56 = arith.constant dense<0xFF800000> : vector<48xf32>
    %179 = vector.multi_reduction <maximumf>, %178, %cst_56 [1] : vector<48x48xf32> to vector<48xf32>
    %180 = vector.shape_cast %179 : vector<48xf32> to vector<48x1xf32>
    %181 = vector.broadcast %180 : vector<48x1xf32> to vector<48x48xf32>
    %182 = arith.subf %178, %181 : vector<48x48xf32>
    %183 = math.exp %182 : vector<48x48xf32>
    %cst_57 = arith.constant dense<0.000000e+00> : vector<48xf32>
    %184 = vector.multi_reduction <add>, %183, %cst_57 [1] : vector<48x48xf32> to vector<48xf32>
    %185 = vector.shape_cast %184 : vector<48xf32> to vector<48x1xf32>
    %186 = tpu.reciprocal %185 {approx = true} : vector<48x1xf32> -> vector<48x1xf32>
    %187 = vector.broadcast %186 : vector<48x1xf32> to vector<48x48xf32>
    %188 = arith.mulf %183, %187 : vector<48x48xf32>
    %189 = arith.truncf %188 : vector<48x48xf32> to vector<48x48xbf16>
    %190 = vector.extract_strided_slice %174 {offsets = [0, 0], sizes = [48, 16], strides = [1, 1]} : vector<48x32xbf16> to vector<48x16xbf16>
    %cst_58 = arith.constant dense<0.000000e+00> : vector<48x16xf32>
    %191 = tpu.matmul %189, %190, %cst_58 {dimension_numbers = #tpu.dot_dimension_numbers<[1], [0], [0], [1], [0, 0, 1, 1], [], []>} : vector<48x48xbf16>, vector<48x16xbf16>, vector<48x16xf32> -> vector<48x16xf32>
    %192 = arith.truncf %191 : vector<48x16xf32> to vector<48x16xbf16>
    %193 = vector.extract_strided_slice %171 {offsets = [0, 0], sizes = [16, 32], strides = [1, 1]} : vector<32x32xbf16> to vector<16x32xbf16>
    %cst_59 = arith.constant dense<0.000000e+00> : vector<48x32xf32>
    %194 = tpu.matmul %192, %193, %cst_59 {dimension_numbers = #tpu.dot_dimension_numbers<[1], [0], [0], [1], [0, 0, 1, 1], [], []>} : vector<48x16xbf16>, vector<16x32xbf16>, vector<48x32xf32> -> vector<48x32xf32>
    %195 = vector.extract_strided_slice %172 {offsets = [0, 16], sizes = [48, 16], strides = [1, 1]} : vector<48x32xbf16> to vector<48x16xbf16>
    %196 = vector.extract_strided_slice %173 {offsets = [0, 16], sizes = [48, 16], strides = [1, 1]} : vector<48x32xbf16> to vector<48x16xbf16>
    %cst_60 = arith.constant dense<0.000000e+00> : vector<48x48xf32>
    %197 = tpu.matmul %195, %196, %cst_60 {dimension_numbers = #tpu.dot_dimension_numbers<[1], [1], [0], [0], [0, 0, 1, 0], [], []>} : vector<48x16xbf16>, vector<48x16xbf16>, vector<48x48xf32> -> vector<48x48xf32>
    %198 = arith.addf %197, %32 : vector<48x48xf32>
    %cst_61 = arith.constant dense<0xFF800000> : vector<48xf32>
    %199 = vector.multi_reduction <maximumf>, %198, %cst_61 [1] : vector<48x48xf32> to vector<48xf32>
    %200 = vector.shape_cast %199 : vector<48xf32> to vector<48x1xf32>
    %201 = vector.broadcast %200 : vector<48x1xf32> to vector<48x48xf32>
    %202 = arith.subf %198, %201 : vector<48x48xf32>
    %203 = math.exp %202 : vector<48x48xf32>
    %cst_62 = arith.constant dense<0.000000e+00> : vector<48xf32>
    %204 = vector.multi_reduction <add>, %203, %cst_62 [1] : vector<48x48xf32> to vector<48xf32>
    %205 = vector.shape_cast %204 : vector<48xf32> to vector<48x1xf32>
    %206 = tpu.reciprocal %205 {approx = true} : vector<48x1xf32> -> vector<48x1xf32>
    %207 = vector.broadcast %206 : vector<48x1xf32> to vector<48x48xf32>
    %208 = arith.mulf %203, %207 : vector<48x48xf32>
    %209 = arith.truncf %208 : vector<48x48xf32> to vector<48x48xbf16>
    %210 = vector.extract_strided_slice %174 {offsets = [0, 16], sizes = [48, 16], strides = [1, 1]} : vector<48x32xbf16> to vector<48x16xbf16>
    %cst_63 = arith.constant dense<0.000000e+00> : vector<48x16xf32>
    %211 = tpu.matmul %209, %210, %cst_63 {dimension_numbers = #tpu.dot_dimension_numbers<[1], [0], [0], [1], [0, 0, 1, 1], [], []>} : vector<48x48xbf16>, vector<48x16xbf16>, vector<48x16xf32> -> vector<48x16xf32>
    %212 = arith.truncf %211 : vector<48x16xf32> to vector<48x16xbf16>
    %213 = vector.extract_strided_slice %171 {offsets = [16, 0], sizes = [16, 32], strides = [1, 1]} : vector<32x32xbf16> to vector<16x32xbf16>
    %cst_64 = arith.constant dense<0.000000e+00> : vector<48x32xf32>
    %214 = tpu.matmul %212, %213, %cst_64 {dimension_numbers = #tpu.dot_dimension_numbers<[1], [0], [0], [1], [0, 0, 1, 1], [], []>} : vector<48x16xbf16>, vector<16x32xbf16>, vector<48x32xf32> -> vector<48x32xf32>
    %215 = arith.addf %194, %214 : vector<48x32xf32>
    %c0_65 = arith.constant 0 : index
    %c0_66 = arith.constant 0 : index
    %216 = vector.load %arg14[%c0_65, %c0_66] : memref<1x32xf32, #tpu.memory_space<vmem>>, vector<1x32xf32>
    %217 = vector.broadcast %216 : vector<1x32xf32> to vector<48x32xf32>
    %218 = arith.addf %215, %217 : vector<48x32xf32>
    %219 = arith.addf %130, %218 : vector<48x32xf32>
    %220 = vector.broadcast %7 : vector<48x1xf32> to vector<48x32xf32>
    %221 = arith.mulf %220, %219 : vector<48x32xf32>
    %222 = vector.extract_strided_slice %0 {offsets = [4, 0], sizes = [1, 32], strides = [1, 1]} : vector<8x32xf32> to vector<1x32xf32>
    %223 = vector.extract_strided_slice %0 {offsets = [5, 0], sizes = [1, 32], strides = [1, 1]} : vector<8x32xf32> to vector<1x32xf32>
    %cst_67 = arith.constant dense<0.000000e+00> : vector<48xf32>
    %224 = vector.multi_reduction <add>, %221, %cst_67 [1] : vector<48x32xf32> to vector<48xf32>
    %225 = vector.shape_cast %224 : vector<48xf32> to vector<48x1xf32>
    %cst_68 = arith.constant 3.200000e+01 : f32
    %226 = vector.broadcast %cst_68 : f32 to vector<48x1xf32>
    %227 = arith.divf %225, %226 : vector<48x1xf32>
    %228 = vector.broadcast %227 : vector<48x1xf32> to vector<48x32xf32>
    %229 = arith.subf %221, %228 : vector<48x32xf32>
    %230 = arith.mulf %229, %229 : vector<48x32xf32>
    %cst_69 = arith.constant dense<0.000000e+00> : vector<48xf32>
    %231 = vector.multi_reduction <add>, %230, %cst_69 [1] : vector<48x32xf32> to vector<48xf32>
    %232 = vector.shape_cast %231 : vector<48xf32> to vector<48x1xf32>
    %cst_70 = arith.constant 3.200000e+01 : f32
    %233 = vector.broadcast %cst_70 : f32 to vector<48x1xf32>
    %234 = arith.divf %232, %233 : vector<48x1xf32>
    %cst_71 = arith.constant 9.99999974E-6 : f32
    %235 = vector.broadcast %cst_71 : f32 to vector<48x1xf32>
    %236 = arith.addf %234, %235 : vector<48x1xf32>
    %237 = math.rsqrt %236 : vector<48x1xf32>
    %238 = vector.broadcast %237 : vector<48x1xf32> to vector<48x32xf32>
    %239 = arith.mulf %229, %238 : vector<48x32xf32>
    %240 = vector.broadcast %222 : vector<1x32xf32> to vector<48x32xf32>
    %241 = arith.mulf %239, %240 : vector<48x32xf32>
    %242 = vector.broadcast %223 : vector<1x32xf32> to vector<48x32xf32>
    %243 = arith.addf %241, %242 : vector<48x32xf32>
    %c0_72 = arith.constant 0 : index
    %c0_73 = arith.constant 0 : index
    %244 = vector.load %arg15[%c0_72, %c0_73] : memref<32x96xbf16, #tpu.memory_space<vmem>>, vector<32x96xbf16>
    %c0_74 = arith.constant 0 : index
    %c0_75 = arith.constant 0 : index
    %245 = vector.load %arg16[%c0_74, %c0_75] : memref<1x96xf32, #tpu.memory_space<vmem>>, vector<1x96xf32>
    %246 = arith.truncf %243 : vector<48x32xf32> to vector<48x32xbf16>
    %247 = vector.extract_strided_slice %244 {offsets = [0, 0], sizes = [32, 32], strides = [1, 1]} : vector<32x96xbf16> to vector<32x32xbf16>
    %cst_76 = arith.constant dense<0.000000e+00> : vector<48x32xf32>
    %248 = tpu.matmul %246, %247, %cst_76 {dimension_numbers = #tpu.dot_dimension_numbers<[1], [0], [0], [1], [0, 0, 1, 1], [], []>} : vector<48x32xbf16>, vector<32x32xbf16>, vector<48x32xf32> -> vector<48x32xf32>
    %249 = vector.extract_strided_slice %245 {offsets = [0, 0], sizes = [1, 32], strides = [1, 1]} : vector<1x96xf32> to vector<1x32xf32>
    %250 = vector.broadcast %249 : vector<1x32xf32> to vector<48x32xf32>
    %251 = arith.addf %248, %250 : vector<48x32xf32>
    %c0_77 = arith.constant 0 : index
    %c0_78 = arith.constant 0 : index
    %252 = vector.load %arg1[%c0_77, %c0_78] : memref<16x32xf32, #tpu.memory_space<vmem>>, vector<16x32xf32>
    %253 = arith.truncf %252 : vector<16x32xf32> to vector<16x32xbf16>
    %254 = vector.extract_strided_slice %244 {offsets = [0, 32], sizes = [32, 64], strides = [1, 1]} : vector<32x96xbf16> to vector<32x64xbf16>
    %cst_79 = arith.constant dense<0.000000e+00> : vector<16x64xf32>
    %255 = tpu.matmul %253, %254, %cst_79 {dimension_numbers = #tpu.dot_dimension_numbers<[1], [0], [0], [1], [0, 0, 1, 1], [], []>} : vector<16x32xbf16>, vector<32x64xbf16>, vector<16x64xf32> -> vector<16x64xf32>
    %256 = vector.extract_strided_slice %245 {offsets = [0, 32], sizes = [1, 64], strides = [1, 1]} : vector<1x96xf32> to vector<1x64xf32>
    %257 = vector.broadcast %256 : vector<1x64xf32> to vector<16x64xf32>
    %258 = arith.addf %255, %257 : vector<16x64xf32>
    %259 = vector.extract_strided_slice %258 {offsets = [0, 0], sizes = [16, 32], strides = [1, 1]} : vector<16x64xf32> to vector<16x32xf32>
    %260 = vector.extract_strided_slice %258 {offsets = [0, 32], sizes = [16, 32], strides = [1, 1]} : vector<16x64xf32> to vector<16x32xf32>
    %c0_80 = arith.constant 0 : index
    %c0_81 = arith.constant 0 : index
    %261 = vector.load %arg17[%c0_80, %c0_81] : memref<32x32xbf16, #tpu.memory_space<vmem>>, vector<32x32xbf16>
    %262 = arith.truncf %251 : vector<48x32xf32> to vector<48x32xbf16>
    %263 = arith.truncf %259 : vector<16x32xf32> to vector<16x32xbf16>
    %264 = arith.truncf %260 : vector<16x32xf32> to vector<16x32xbf16>
    %265 = vector.extract_strided_slice %262 {offsets = [0, 0], sizes = [48, 16], strides = [1, 1]} : vector<48x32xbf16> to vector<48x16xbf16>
    %266 = vector.extract_strided_slice %263 {offsets = [0, 0], sizes = [16, 16], strides = [1, 1]} : vector<16x32xbf16> to vector<16x16xbf16>
    %cst_82 = arith.constant dense<0.000000e+00> : vector<48x16xf32>
    %267 = tpu.matmul %265, %266, %cst_82 {dimension_numbers = #tpu.dot_dimension_numbers<[1], [1], [0], [0], [0, 0, 1, 0], [], []>} : vector<48x16xbf16>, vector<16x16xbf16>, vector<48x16xf32> -> vector<48x16xf32>
    %268 = arith.addf %267, %41 : vector<48x16xf32>
    %cst_83 = arith.constant dense<0xFF800000> : vector<48xf32>
    %269 = vector.multi_reduction <maximumf>, %268, %cst_83 [1] : vector<48x16xf32> to vector<48xf32>
    %270 = vector.shape_cast %269 : vector<48xf32> to vector<48x1xf32>
    %271 = vector.broadcast %270 : vector<48x1xf32> to vector<48x16xf32>
    %272 = arith.subf %268, %271 : vector<48x16xf32>
    %273 = math.exp %272 : vector<48x16xf32>
    %cst_84 = arith.constant dense<0.000000e+00> : vector<48xf32>
    %274 = vector.multi_reduction <add>, %273, %cst_84 [1] : vector<48x16xf32> to vector<48xf32>
    %275 = vector.shape_cast %274 : vector<48xf32> to vector<48x1xf32>
    %276 = tpu.reciprocal %275 {approx = true} : vector<48x1xf32> -> vector<48x1xf32>
    %277 = vector.broadcast %276 : vector<48x1xf32> to vector<48x16xf32>
    %278 = arith.mulf %273, %277 : vector<48x16xf32>
    %279 = arith.truncf %278 : vector<48x16xf32> to vector<48x16xbf16>
    %280 = vector.extract_strided_slice %264 {offsets = [0, 0], sizes = [16, 16], strides = [1, 1]} : vector<16x32xbf16> to vector<16x16xbf16>
    %cst_85 = arith.constant dense<0.000000e+00> : vector<48x16xf32>
    %281 = tpu.matmul %279, %280, %cst_85 {dimension_numbers = #tpu.dot_dimension_numbers<[1], [0], [0], [1], [0, 0, 1, 1], [], []>} : vector<48x16xbf16>, vector<16x16xbf16>, vector<48x16xf32> -> vector<48x16xf32>
    %282 = arith.truncf %281 : vector<48x16xf32> to vector<48x16xbf16>
    %283 = vector.extract_strided_slice %261 {offsets = [0, 0], sizes = [16, 32], strides = [1, 1]} : vector<32x32xbf16> to vector<16x32xbf16>
    %cst_86 = arith.constant dense<0.000000e+00> : vector<48x32xf32>
    %284 = tpu.matmul %282, %283, %cst_86 {dimension_numbers = #tpu.dot_dimension_numbers<[1], [0], [0], [1], [0, 0, 1, 1], [], []>} : vector<48x16xbf16>, vector<16x32xbf16>, vector<48x32xf32> -> vector<48x32xf32>
    %285 = vector.extract_strided_slice %262 {offsets = [0, 16], sizes = [48, 16], strides = [1, 1]} : vector<48x32xbf16> to vector<48x16xbf16>
    %286 = vector.extract_strided_slice %263 {offsets = [0, 16], sizes = [16, 16], strides = [1, 1]} : vector<16x32xbf16> to vector<16x16xbf16>
    %cst_87 = arith.constant dense<0.000000e+00> : vector<48x16xf32>
    %287 = tpu.matmul %285, %286, %cst_87 {dimension_numbers = #tpu.dot_dimension_numbers<[1], [1], [0], [0], [0, 0, 1, 0], [], []>} : vector<48x16xbf16>, vector<16x16xbf16>, vector<48x16xf32> -> vector<48x16xf32>
    %288 = arith.addf %287, %41 : vector<48x16xf32>
    %cst_88 = arith.constant dense<0xFF800000> : vector<48xf32>
    %289 = vector.multi_reduction <maximumf>, %288, %cst_88 [1] : vector<48x16xf32> to vector<48xf32>
    %290 = vector.shape_cast %289 : vector<48xf32> to vector<48x1xf32>
    %291 = vector.broadcast %290 : vector<48x1xf32> to vector<48x16xf32>
    %292 = arith.subf %288, %291 : vector<48x16xf32>
    %293 = math.exp %292 : vector<48x16xf32>
    %cst_89 = arith.constant dense<0.000000e+00> : vector<48xf32>
    %294 = vector.multi_reduction <add>, %293, %cst_89 [1] : vector<48x16xf32> to vector<48xf32>
    %295 = vector.shape_cast %294 : vector<48xf32> to vector<48x1xf32>
    %296 = tpu.reciprocal %295 {approx = true} : vector<48x1xf32> -> vector<48x1xf32>
    %297 = vector.broadcast %296 : vector<48x1xf32> to vector<48x16xf32>
    %298 = arith.mulf %293, %297 : vector<48x16xf32>
    %299 = arith.truncf %298 : vector<48x16xf32> to vector<48x16xbf16>
    %300 = vector.extract_strided_slice %264 {offsets = [0, 16], sizes = [16, 16], strides = [1, 1]} : vector<16x32xbf16> to vector<16x16xbf16>
    %cst_90 = arith.constant dense<0.000000e+00> : vector<48x16xf32>
    %301 = tpu.matmul %299, %300, %cst_90 {dimension_numbers = #tpu.dot_dimension_numbers<[1], [0], [0], [1], [0, 0, 1, 1], [], []>} : vector<48x16xbf16>, vector<16x16xbf16>, vector<48x16xf32> -> vector<48x16xf32>
    %302 = arith.truncf %301 : vector<48x16xf32> to vector<48x16xbf16>
    %303 = vector.extract_strided_slice %261 {offsets = [16, 0], sizes = [16, 32], strides = [1, 1]} : vector<32x32xbf16> to vector<16x32xbf16>
    %cst_91 = arith.constant dense<0.000000e+00> : vector<48x32xf32>
    %304 = tpu.matmul %302, %303, %cst_91 {dimension_numbers = #tpu.dot_dimension_numbers<[1], [0], [0], [1], [0, 0, 1, 1], [], []>} : vector<48x16xbf16>, vector<16x32xbf16>, vector<48x32xf32> -> vector<48x32xf32>
    %305 = arith.addf %284, %304 : vector<48x32xf32>
    %306 = arith.addf %221, %305 : vector<48x32xf32>
    %c0_92 = arith.constant 0 : index
    %c0_93 = arith.constant 0 : index
    %307 = vector.load %arg18[%c0_92, %c0_93] : memref<1x32xf32, #tpu.memory_space<vmem>>, vector<1x32xf32>
    %308 = vector.broadcast %307 : vector<1x32xf32> to vector<48x32xf32>
    %309 = arith.addf %306, %308 : vector<48x32xf32>
    %310 = vector.extract_strided_slice %0 {offsets = [6, 0], sizes = [1, 32], strides = [1, 1]} : vector<8x32xf32> to vector<1x32xf32>
    %311 = vector.extract_strided_slice %0 {offsets = [7, 0], sizes = [1, 32], strides = [1, 1]} : vector<8x32xf32> to vector<1x32xf32>
    %cst_94 = arith.constant dense<0.000000e+00> : vector<48xf32>
    %312 = vector.multi_reduction <add>, %309, %cst_94 [1] : vector<48x32xf32> to vector<48xf32>
    %313 = vector.shape_cast %312 : vector<48xf32> to vector<48x1xf32>
    %cst_95 = arith.constant 3.200000e+01 : f32
    %314 = vector.broadcast %cst_95 : f32 to vector<48x1xf32>
    %315 = arith.divf %313, %314 : vector<48x1xf32>
    %316 = vector.broadcast %315 : vector<48x1xf32> to vector<48x32xf32>
    %317 = arith.subf %309, %316 : vector<48x32xf32>
    %318 = arith.mulf %317, %317 : vector<48x32xf32>
    %cst_96 = arith.constant dense<0.000000e+00> : vector<48xf32>
    %319 = vector.multi_reduction <add>, %318, %cst_96 [1] : vector<48x32xf32> to vector<48xf32>
    %320 = vector.shape_cast %319 : vector<48xf32> to vector<48x1xf32>
    %cst_97 = arith.constant 3.200000e+01 : f32
    %321 = vector.broadcast %cst_97 : f32 to vector<48x1xf32>
    %322 = arith.divf %320, %321 : vector<48x1xf32>
    %cst_98 = arith.constant 9.99999974E-6 : f32
    %323 = vector.broadcast %cst_98 : f32 to vector<48x1xf32>
    %324 = arith.addf %322, %323 : vector<48x1xf32>
    %325 = math.rsqrt %324 : vector<48x1xf32>
    %326 = vector.broadcast %325 : vector<48x1xf32> to vector<48x32xf32>
    %327 = arith.mulf %317, %326 : vector<48x32xf32>
    %328 = vector.broadcast %310 : vector<1x32xf32> to vector<48x32xf32>
    %329 = arith.mulf %327, %328 : vector<48x32xf32>
    %330 = vector.broadcast %311 : vector<1x32xf32> to vector<48x32xf32>
    %331 = arith.addf %329, %330 : vector<48x32xf32>
    %332 = arith.truncf %331 : vector<48x32xf32> to vector<48x32xbf16>
    %c0_99 = arith.constant 0 : index
    %c0_100 = arith.constant 0 : index
    %333 = vector.load %arg19[%c0_99, %c0_100] : memref<32x128xbf16, #tpu.memory_space<vmem>>, vector<32x128xbf16>
    %cst_101 = arith.constant dense<0.000000e+00> : vector<48x128xf32>
    %334 = tpu.matmul %332, %333, %cst_101 {dimension_numbers = #tpu.dot_dimension_numbers<[1], [0], [0], [1], [0, 0, 1, 1], [], []>} : vector<48x32xbf16>, vector<32x128xbf16>, vector<48x128xf32> -> vector<48x128xf32>
    %c0_102 = arith.constant 0 : index
    %c0_103 = arith.constant 0 : index
    %335 = vector.load %arg20[%c0_102, %c0_103] : memref<1x128xf32, #tpu.memory_space<vmem>>, vector<1x128xf32>
    %336 = vector.broadcast %335 : vector<1x128xf32> to vector<48x128xf32>
    %337 = arith.addf %334, %336 : vector<48x128xf32>
    %cst_104 = arith.constant 0.000000e+00 : f32
    %338 = vector.broadcast %cst_104 : f32 to vector<48x128xf32>
    %339 = arith.maximumf %337, %338 : vector<48x128xf32>
    %340 = arith.truncf %339 : vector<48x128xf32> to vector<48x128xbf16>
    %c0_105 = arith.constant 0 : index
    %c0_106 = arith.constant 0 : index
    %341 = vector.load %arg21[%c0_105, %c0_106] : memref<128x32xbf16, #tpu.memory_space<vmem>>, vector<128x32xbf16>
    %cst_107 = arith.constant dense<0.000000e+00> : vector<48x32xf32>
    %342 = tpu.matmul %340, %341, %cst_107 {dimension_numbers = #tpu.dot_dimension_numbers<[1], [0], [0], [1], [0, 0, 1, 1], [], []>} : vector<48x128xbf16>, vector<128x32xbf16>, vector<48x32xf32> -> vector<48x32xf32>
    %343 = arith.addf %309, %342 : vector<48x32xf32>
    %c0_108 = arith.constant 0 : index
    %c0_109 = arith.constant 0 : index
    %344 = vector.load %arg22[%c0_108, %c0_109] : memref<1x32xf32, #tpu.memory_space<vmem>>, vector<1x32xf32>
    %345 = vector.broadcast %344 : vector<1x32xf32> to vector<48x32xf32>
    %346 = arith.addf %343, %345 : vector<48x32xf32>
    %cst_110 = arith.constant -1.000000e+06 : f32
    %cst_111 = arith.constant 1.000000e+06 : f32
    %347 = vector.broadcast %cst_110 : f32 to vector<48x32xf32>
    %348 = arith.maximumf %347, %346 : vector<48x32xf32>
    %349 = vector.broadcast %cst_111 : f32 to vector<48x32xf32>
    %350 = arith.minimumf %349, %348 : vector<48x32xf32>
    %c0_112 = arith.constant 0 : index
    %c0_113 = arith.constant 0 : index
    %351 = vector.load %arg23[%c0_112, %c0_113] : memref<48x32xf32, #tpu.memory_space<vmem>>, vector<48x32xf32>
    tpu.vector_store %arg23[%c0_112, %c0_113], %350 {strides = array<i32>} : memref<48x32xf32, #tpu.memory_space<vmem>>, vector<48x32xf32>,
    return
  }
}

</mosaic_0001>

<llo_original>
// kernel: tile.7
$region0: #{tile.7}
  %s0 = inlined_call_operand.vmem [shape: f32[8,6,32], index: 0, kind: input, shape index: {}]
  %s1 = inlined_call_operand.vmem [shape: f32[48,32], index: 1, kind: output, shape index: {}]
  %v2 = vld [vmem:[%s0] sm:$0x3f]
  %vm3 = vcmask 261120
  %4 = vst.msk [vmem:[%s1] sm:$0x3f] %vm3, %v2
  %s5 = scalar_lea.vmem %s0, 8
  %v6 = vld [vmem:[%s5] sm:$0x3f]
  %vm7 = vcmask 261120
  %s8 = scalar_lea.vmem %s1, 6
  %9 = vst.msk [vmem:[%s8] sm:$0x3f] %vm7, %v6
  %s10 = scalar_lea.vmem %s0, 16
  %v11 = vld [vmem:[%s10] sm:$0x3f]
  %vm12 = vcmask 261120
  %s13 = scalar_lea.vmem %s1, 12
  %14 = vst.msk [vmem:[%s13] sm:$0x3f] %vm12, %v11
  %s15 = scalar_lea.vmem %s0, 24
  %v16 = vld [vmem:[%s15] sm:$0x3f]
  %vm17 = vcmask 261120
  %s18 = scalar_lea.vmem %s1, 18
  %19 = vst.msk [vmem:[%s18] sm:$0x3f] %vm17, %v16
  %s20 = scalar_lea.vmem %s0, 32
  %v21 = vld [vmem:[%s20] sm:$0x3f]
  %vm22 = vcmask 261120
  %s23 = scalar_lea.vmem %s1, 24
  %24 = vst.msk [vmem:[%s23] sm:$0x3f] %vm22, %v21
  %s25 = scalar_lea.vmem %s0, 40
  %v26 = vld [vmem:[%s25] sm:$0x3f]
  %vm27 = vcmask 261120
  %s28 = scalar_lea.vmem %s1, 30
  %29 = vst.msk [vmem:[%s28] sm:$0x3f] %vm27, %v26
  %s30 = scalar_lea.vmem %s0, 48
  %v31 = vld [vmem:[%s30] sm:$0x3f]
  %vm32 = vcmask 261120
  %s33 = scalar_lea.vmem %s1, 36
  %34 = vst.msk [vmem:[%s33] sm:$0x3f] %vm32, %v31
  %s35 = scalar_lea.vmem %s0, 56
  %v36 = vld [vmem:[%s35] sm:$0x3f]
  %vm37 = vcmask 261120
  %s38 = scalar_lea.vmem %s1, 42
  %39 = vst.msk [vmem:[%s38] sm:$0x3f] %vm37, %v36

// kernel: decoder_layer_forward.1
$region0: #{decoder_layer_forward.1}
  #allocation0 [shape = 'u32[]', space=smem, size = 0x4, offset = 0x4, fixed_abs, tag = 'smem constant byte address 0x4 - core index']
  #allocation1 [shape = 'u32[144,128]{1,0:T(1,128)}', space=vmem, size = 0x12000, scoped, tag = 'internal scratch']
  %s0 = inlined_call_operand.vmem [shape: f32[48,32], index: 0, kind: input, shape index: {}]
  %s1 = inlined_call_operand.vmem [shape: f32[16,32], index: 1, kind: input, shape index: {}]
  %s2 = inlined_call_operand.vmem [shape: f32[48,4], index: 2, kind: input, shape index: {}]
  %s3 = inlined_call_operand.vmem [shape: f32[4,48], index: 3, kind: input, shape index: {}]
  %s4 = inlined_call_operand.vmem [shape: f32[2,16], index: 4, kind: input, shape index: {}]
  %s5 = inlined_call_operand.vmem [shape: f32[48,32], index: 5, kind: input, shape index: {}]
  %s6 = inlined_call_operand.vmem [shape: f32[8,32], index: 6, kind: input, shape index: {}]
  %s7 = inlined_call_operand.vmem [shape: bf16[32,96], index: 7, kind: input, shape index: {}]
  %s8 = inlined_call_operand.vmem [shape: f32[1,96], index: 8, kind: input, shape index: {}]
  %s9 = inlined_call_operand.vmem [shape: bf16[32,32], index: 9, kind: input, shape index: {}]
  %s10 = inlined_call_operand.vmem [shape: f32[1,32], index: 10, kind: input, shape index: {}]
  %s11 = inlined_call_operand.vmem [shape: bf16[32,96], index: 11, kind: input, shape index: {}]
  %s12 = inlined_call_operand.vmem [shape: f32[1,96], index: 12, kind: input, shape index: {}]
  %s13 = inlined_call_operand.vmem [shape: bf16[32,32], index: 13, kind: input, shape index: {}]
  %s14 = inlined_call_operand.vmem [shape: f32[1,32], index: 14, kind: input, shape index: {}]
  %s15 = inlined_call_operand.vmem [shape: bf16[32,96], index: 15, kind: input, shape index: {}]
  %s16 = inlined_call_operand.vmem [shape: f32[1,96], index: 16, kind: input, shape index: {}]
  %s17 = inlined_call_operand.vmem [shape: bf16[32,32], index: 17, kind: input, shape index: {}]
  %s18 = inlined_call_operand.vmem [shape: f32[1,32], index: 18, kind: input, shape index: {}]
  %s19 = inlined_call_operand.vmem [shape: bf16[32,128], index: 19, kind: input, shape index: {}]
  %s20 = inlined_call_operand.vmem [shape: f32[1,128], index: 20, kind: input, shape index: {}]
  %s21 = inlined_call_operand.vmem [shape: bf16[128,32], index: 21, kind: input, shape index: {}]
  %s22 = inlined_call_operand.vmem [shape: f32[1,32], index: 22, kind: input, shape index: {}]
  %s23 = inlined_call_operand.vmem [shape: f32[48,32], index: 23, kind: output, shape index: {}]
  %s24 = sld [smem:[#allocation0]]
  $region102: #{decoder_layer_forward.1} parent=0
    _
  %s26 = ssub.s32 1, %s24
  %s27 = scalar_select 0, %s26, %s24
  // Predicated region
  $region2: #{decoder_layer_forward.1} parent=0 // pred_check
    _
  $region3: #{decoder_layer_forward.1} parent=0 // pred_check_branch
    %29 = sbr.rel (0) target = $region5
  $region4: #{decoder_layer_forward.1} parent=0 // pred_region
    _
  $region5: #{decoder_layer_forward.1} parent=0 // pred_fallthru
    _
  // Predicated region
  $region6: #{decoder_layer_forward.1} parent=0 // pred_check
    _
  $region7: #{decoder_layer_forward.1} parent=0 // pred_check_branch
    %31 = sbr.rel (0) target = $region9
  $region8: #{decoder_layer_forward.1} parent=0 // pred_region
    _
  $region9: #{decoder_layer_forward.1} parent=0 // pred_fallthru
    _
  // Predicated region
  $region10: #{decoder_layer_forward.1} parent=0 // pred_check
    _
  $region11: #{decoder_layer_forward.1} parent=0 // pred_check_branch
    %33 = sbr.rel (0) target = $region13
  $region12: #{decoder_layer_forward.1} parent=0 // pred_region
    _
  $region13: #{decoder_layer_forward.1} parent=0 // pred_fallthru
    _
  // Predicated region
  $region14: #{decoder_layer_forward.1} parent=0 // pred_check
    _
  $region15: #{decoder_layer_forward.1} parent=0 // pred_check_branch
    %35 = sbr.rel (0) target = $region17
  $region16: #{decoder_layer_forward.1} parent=0 // pred_region
    _
  $region17: #{decoder_layer_forward.1} parent=0 // pred_fallthru
    _
  // Predicated region
  $region18: #{decoder_layer_forward.1} parent=0 // pred_check
    _
  $region19: #{decoder_layer_forward.1} parent=0 // pred_check_branch
    %37 = sbr.rel (0) target = $region21
  $region20: #{decoder_layer_forward.1} parent=0 // pred_region
    _
  $region21: #{decoder_layer_forward.1} parent=0 // pred_fallthru
    _
  // Predicated region
  $region22: #{decoder_layer_forward.1} parent=0 // pred_check
    _
  $region23: #{decoder_layer_forward.1} parent=0 // pred_check_branch
    %39 = sbr.rel (0) target = $region25
  $region24: #{decoder_layer_forward.1} parent=0 // pred_region
    _
  $region25: #{decoder_layer_forward.1} parent=0 // pred_fallthru
    _
  // Predicated region
  $region26: #{decoder_layer_forward.1} parent=0 // pred_check
    _
  $region27: #{decoder_layer_forward.1} parent=0 // pred_check_branch
    %41 = sbr.rel (0) target = $region29
  $region28: #{decoder_layer_forward.1} parent=0 // pred_region
    _
  $region29: #{decoder_layer_forward.1} parent=0 // pred_fallthru
    _
  // Predicated region
  $region30: #{decoder_layer_forward.1} parent=0 // pred_check
    _
  $region31: #{decoder_layer_forward.1} parent=0 // pred_check_branch
    %43 = sbr.rel (0) target = $region33
  $region32: #{decoder_layer_forward.1} parent=0 // pred_region
    _
  $region33: #{decoder_layer_forward.1} parent=0 // pred_fallthru
    _
  // Predicated region
  $region34: #{decoder_layer_forward.1} parent=0 // pred_check
    _
  $region35: #{decoder_layer_forward.1} parent=0 // pred_check_branch
    %45 = sbr.rel (0) target = $region37
  $region36: #{decoder_layer_forward.1} parent=0 // pred_region
    _
  $region37: #{decoder_layer_forward.1} parent=0 // pred_fallthru
    _
  // Predicated region
  $region38: #{decoder_layer_forward.1} parent=0 // pred_check
    _
  $region39: #{decoder_layer_forward.1} parent=0 // pred_check_branch
    %47 = sbr.rel (0) target = $region41
  $region40: #{decoder_layer_forward.1} parent=0 // pred_region
    _
  $region41: #{decoder_layer_forward.1} parent=0 // pred_fallthru
    _
  // Predicated region
  $region42: #{decoder_layer_forward.1} parent=0 // pred_check
    _
  $region43: #{decoder_layer_forward.1} parent=0 // pred_check_branch
    %49 = sbr.rel (0) target = $region45
  $region44: #{decoder_layer_forward.1} parent=0 // pred_region
    _
  $region45: #{decoder_layer_forward.1} parent=0 // pred_fallthru
    _
  // Predicated region
  $region46: #{decoder_layer_forward.1} parent=0 // pred_check
    _
  $region47: #{decoder_layer_forward.1} parent=0 // pred_check_branch
    %51 = sbr.rel (0) target = $region49
  $region48: #{decoder_layer_forward.1} parent=0 // pred_region
    _
  $region49: #{decoder_layer_forward.1} parent=0 // pred_fallthru
    _
  // Predicated region
  $region50: #{decoder_layer_forward.1} parent=0 // pred_check
    _
  $region51: #{decoder_layer_forward.1} parent=0 // pred_check_branch
    %53 = sbr.rel (0) target = $region53
  $region52: #{decoder_layer_forward.1} parent=0 // pred_region
    _
  $region53: #{decoder_layer_forward.1} parent=0 // pred_fallthru
    _
  // Predicated region
  $region54: #{decoder_layer_forward.1} parent=0 // pred_check
    _
  $region55: #{decoder_layer_forward.1} parent=0 // pred_check_branch
    %55 = sbr.rel (0) target = $region57
  $region56: #{decoder_layer_forward.1} parent=0 // pred_region
    _
  $region57: #{decoder_layer_forward.1} parent=0 // pred_fallthru
    _
  // Predicated region
  $region58: #{decoder_layer_forward.1} parent=0 // pred_check
    _
  $region59: #{decoder_layer_forward.1} parent=0 // pred_check_branch
    %57 = sbr.rel (0) target = $region61
  $region60: #{decoder_layer_forward.1} parent=0 // pred_region
    _
  $region61: #{decoder_layer_forward.1} parent=0 // pred_fallthru
    _
  // Predicated region
  $region62: #{decoder_layer_forward.1} parent=0 // pred_check
    _
  $region63: #{decoder_layer_forward.1} parent=0 // pred_check_branch
    %59 = sbr.rel (0) target = $region65
  $region64: #{decoder_layer_forward.1} parent=0 // pred_region
    _
  $region65: #{decoder_layer_forward.1} parent=0 // pred_fallthru
    _
  // Predicated region
  $region66: #{decoder_layer_forward.1} parent=0 // pred_check
    _
  $region67: #{decoder_layer_forward.1} parent=0 // pred_check_branch
    %61 = sbr.rel (0) target = $region69
  $region68: #{decoder_layer_forward.1} parent=0 // pred_region
    _
  $region69: #{decoder_layer_forward.1} parent=0 // pred_fallthru
    _
  // Predicated region
  $region70: #{decoder_layer_forward.1} parent=0 // pred_check
    _
  $region71: #{decoder_layer_forward.1} parent=0 // pred_check_branch
    %63 = sbr.rel (0) target = $region73
  $region72: #{decoder_layer_forward.1} parent=0 // pred_region
    _
  $region73: #{decoder_layer_forward.1} parent=0 // pred_fallthru
    _
  // Predicated region
  $region74: #{decoder_layer_forward.1} parent=0 // pred_check
    _
  $region75: #{decoder_layer_forward.1} parent=0 // pred_check_branch
    %65 = sbr.rel (0) target = $region77
  $region76: #{decoder_layer_forward.1} parent=0 // pred_region
    _
  $region77: #{decoder_layer_forward.1} parent=0 // pred_fallthru
    _
  // Predicated region
  $region78: #{decoder_layer_forward.1} parent=0 // pred_check
    _
  $region79: #{decoder_layer_forward.1} parent=0 // pred_check_branch
    %67 = sbr.rel (0) target = $region81
  $region80: #{decoder_layer_forward.1} parent=0 // pred_region
    _
  $region81: #{decoder_layer_forward.1} parent=0 // pred_fallthru
    _
  // Predicated region
  $region82: #{decoder_layer_forward.1} parent=0 // pred_check
    _
  $region83: #{decoder_layer_forward.1} parent=0 // pred_check_branch
    %69 = sbr.rel (0) target = $region85
  $region84: #{decoder_layer_forward.1} parent=0 // pred_region
    _
  $region85: #{decoder_layer_forward.1} parent=0 // pred_fallthru
    _
  // Predicated region
  $region86: #{decoder_layer_forward.1} parent=0 // pred_check
    _
  $region87: #{decoder_layer_forward.1} parent=0 // pred_check_branch
    %71 = sbr.rel (0) target = $region89
  $region88: #{decoder_layer_forward.1} parent=0 // pred_region
    _
  $region89: #{decoder_layer_forward.1} parent=0 // pred_fallthru
    _
  // Predicated region
  $region90: #{decoder_layer_forward.1} parent=0 // pred_check
    _
  $region91: #{decoder_layer_forward.1} parent=0 // pred_check_branch
    %73 = sbr.rel (0) target = $region93
  $region92: #{decoder_layer_forward.1} parent=0 // pred_region
    _
  $region93: #{decoder_layer_forward.1} parent=0 // pred_fallthru
    _
  %v75 = vld [vmem:[%s6] sm:$0xff]
  %v76 = vld [vmem:[%s2] sm:$0xff]
  %v77 = vld [vmem:[%s2 + $0x8] sm:$0xff]
  %v78 = vld [vmem:[%s2 + $0x10] sm:$0xff]
  %v79 = vld [vmem:[%s2 + $0x18] sm:$0xff]
  %v80 = vld [vmem:[%s2 + $0x20] sm:$0xff]
  %v81 = vld [vmem:[%s2 + $0x28] sm:$0xff]
  %v82 = vld [vmem:[%s3] sm:$0xf]
  %v83 = vld [vmem:[%s4] sm:$0x3]
  %85 = vset.pattern.permute.xlu0 0
  %86 = vperm.xlu0 %85, %v76
  %v87 = vpop.permute.xlu0 %86
  %90 = vset.pattern.permute.xlu0 0
  %91 = vperm.xlu0 %90, %v77
  %v92 = vpop.permute.xlu0 %91
  %95 = vset.pattern.permute.xlu0 0
  %96 = vperm.xlu0 %95, %v78
  %v97 = vpop.permute.xlu0 %96
  %100 = vset.pattern.permute.xlu0 0
  %101 = vperm.xlu0 %100, %v79
  %v102 = vpop.permute.xlu0 %101
  %105 = vset.pattern.permute.xlu0 0
  %106 = vperm.xlu0 %105, %v80
  %v107 = vpop.permute.xlu0 %106
  %110 = vset.pattern.permute.xlu0 0
  %111 = vperm.xlu0 %110, %v81
  %v112 = vpop.permute.xlu0 %111
  %v114 = vlaneseq
  %v115 = vshrl.u32 %v114, 7
  %v116 = vsub.s32 0, %v115
  %v117 = vrot.slane %v82, %v116
  %vm118 = vcmp.eq.f32.partialorder %v87, %v117
  %vm119 = vcmp.eq.f32.partialorder %v92, %v117
  %vm120 = vcmp.eq.f32.partialorder %v97, %v117
  %vm121 = vcmp.eq.f32.partialorder %v102, %v117
  %vm122 = vcmp.eq.f32.partialorder %v107, %v117
  %vm123 = vcmp.eq.f32.partialorder %v112, %v117
  %124 = vset.pattern.permute.xlu0 2
  %125 = vperm.xlu0 %124, %v76
  %v126 = vpop.permute.xlu0 %125
  %128 = vset.pattern.permute.xlu0 2
  %129 = vperm.xlu0 %128, %v77
  %v130 = vpop.permute.xlu0 %129
  %132 = vset.pattern.permute.xlu0 2
  %133 = vperm.xlu0 %132, %v78
  %v134 = vpop.permute.xlu0 %133
  %136 = vset.pattern.permute.xlu0 2
  %137 = vperm.xlu0 %136, %v79
  %v138 = vpop.permute.xlu0 %137
  %140 = vset.pattern.permute.xlu0 2
  %141 = vperm.xlu0 %140, %v80
  %v142 = vpop.permute.xlu0 %141
  %144 = vset.pattern.permute.xlu0 2
  %145 = vperm.xlu0 %144, %v81
  %v146 = vpop.permute.xlu0 %145
  %v148 = vlaneseq
  %v149 = vshrl.u32 %v148, 7
  %v150 = vsub.s32 2, %v149
  %v151 = vrot.slane %v82, %v150
  %vm152 = vcmp.eq.f32.partialorder %v126, %v151
  %vm153 = vcmp.eq.f32.partialorder %v130, %v151
  %vm154 = vcmp.eq.f32.partialorder %v134, %v151
  %vm155 = vcmp.eq.f32.partialorder %v138, %v151
  %vm156 = vcmp.eq.f32.partialorder %v142, %v151
  %vm157 = vcmp.eq.f32.partialorder %v146, %v151
  %vm158 = vmand %vm118, %vm152
  %vm159 = vmand %vm119, %vm153
  %vm160 = vmand %vm120, %vm154
  %vm161 = vmand %vm121, %vm155
  %vm162 = vmand %vm122, %vm156
  %vm163 = vmand %vm123, %vm157
  %v164 = vlaneseq
  %v165 = vshrl.u32 %v164, 7
  %v166 = vsub.s32 3, %v165
  %v167 = vrot.slane %v82, %v166
  %v168 = vsel %vm158, %v167, -1e+09
  %v169 = vsel %vm159, %v167, -1e+09
  %v170 = vsel %vm160, %v167, -1e+09
  %v171 = vsel %vm161, %v167, -1e+09
  %v172 = vsel %vm162, %v167, -1e+09
  %v173 = vsel %vm163, %v167, -1e+09
  %174 = vset.pattern.permute.xlu0 1
  %175 = vperm.xlu0 %174, %v76
  %v176 = vpop.permute.xlu0 %175
  %178 = vset.pattern.permute.xlu0 1
  %179 = vperm.xlu0 %178, %v77
  %v180 = vpop.permute.xlu0 %179
  %182 = vset.pattern.permute.xlu0 1
  %183 = vperm.xlu0 %182, %v78
  %v184 = vpop.permute.xlu0 %183
  %186 = vset.pattern.permute.xlu0 1
  %187 = vperm.xlu0 %186, %v79
  %v188 = vpop.permute.xlu0 %187
  %190 = vset.pattern.permute.xlu0 1
  %191 = vperm.xlu0 %190, %v80
  %v192 = vpop.permute.xlu0 %191
  %194 = vset.pattern.permute.xlu0 1
  %195 = vperm.xlu0 %194, %v81
  %v196 = vpop.permute.xlu0 %195
  %v198 = vlaneseq
  %v199 = vshrl.u32 %v198, 7
  %v200 = vsub.s32 1, %v199
  %v201 = vrot.slane %v82, %v200
  %vm202 = vcmp.eq.f32.partialorder %v176, %v201
  %vm203 = vcmp.eq.f32.partialorder %v180, %v201
  %vm204 = vcmp.eq.f32.partialorder %v184, %v201
  %vm205 = vcmp.eq.f32.partialorder %v188, %v201
  %vm206 = vcmp.eq.f32.partialorder %v192, %v201
  %vm207 = vcmp.eq.f32.partialorder %v196, %v201
  %vm208 = vmand %vm118, %vm202
  %vm209 = vmand %vm119, %vm203
  %vm210 = vmand %vm120, %vm204
  %vm211 = vmand %vm121, %vm205
  %vm212 = vmand %vm122, %vm206
  %vm213 = vmand %vm123, %vm207
  %v214 = vsel %vm208, 0.0, -1e+09
  %v215 = vsel %vm209, 0.0, -1e+09
  %v216 = vsel %vm210, 0.0, -1e+09
  %v217 = vsel %vm211, 0.0, -1e+09
  %v218 = vsel %vm212, 0.0, -1e+09
  %v219 = vsel %vm213, 0.0, -1e+09
  %v220 = vlaneseq
  %v221 = vshrl.u32 %v220, 7
  %v222 = vsub.s32 0, %v221
  %v223 = vrot.slane %v83, %v222
  %vm224 = vcmp.eq.f32.partialorder %v87, %v223
  %vm225 = vcmp.eq.f32.partialorder %v92, %v223
  %vm226 = vcmp.eq.f32.partialorder %v97, %v223
  %vm227 = vcmp.eq.f32.partialorder %v102, %v223
  %vm228 = vcmp.eq.f32.partialorder %v107, %v223
  %vm229 = vcmp.eq.f32.partialorder %v112, %v223
  %v230 = vlaneseq
  %v231 = vshrl.u32 %v230, 7
  %v232 = vsub.s32 1, %v231
  %v233 = vrot.slane %v83, %v232
  %v234 = vsel %vm224, %v233, -1e+09
  %v235 = vsel %vm225, %v233, -1e+09
  %v236 = vsel %vm226, %v233, -1e+09
  %v237 = vsel %vm227, %v233, -1e+09
  %v238 = vsel %vm228, %v233, -1e+09
  %v239 = vsel %vm229, %v233, -1e+09
  %v240 = vld [vmem:[%s0] sm:$0xff]
  %v241 = vld [vmem:[%s0 + $0x8] sm:$0xff]
  %v242 = vld [vmem:[%s0 + $0x10] sm:$0xff]
  %v243 = vld [vmem:[%s0 + $0x18] sm:$0xff]
  %v244 = vld [vmem:[%s0 + $0x20] sm:$0xff]
  %v245 = vld [vmem:[%s0 + $0x28] sm:$0xff]
  %v246 = vmax.f32 %v240, -1000000.0
  %v247 = vmax.f32 %v241, -1000000.0
  %v248 = vmax.f32 %v242, -1000000.0
  %v249 = vmax.f32 %v243, -1000000.0
  %v250 = vmax.f32 %v244, -1000000.0
  %v251 = vmax.f32 %v245, -1000000.0
  %v252 = vmin.f32 %v246, 1000000.0
  %v253 = vmin.f32 %v247, 1000000.0
  %v254 = vmin.f32 %v248, 1000000.0
  %v255 = vmin.f32 %v249, 1000000.0
  %v256 = vmin.f32 %v250, 1000000.0
  %v257 = vmin.f32 %v251, 1000000.0
  %vm258 = vcmask 261120
  %v259 = vsel %vm258, %v252, 0.0
  %260 = vadd.xlane.f32.xlu0 %v259
  %v261 = vpop.xlane.xlu0 %260
  %v262 = vsel %vm258, %v253, 0.0
  %263 = vadd.xlane.f32.xlu0 %v262
  %v264 = vpop.xlane.xlu0 %263
  %v265 = vsel %vm258, %v254, 0.0
  %266 = vadd.xlane.f32.xlu0 %v265
  %v267 = vpop.xlane.xlu0 %266
  %v268 = vsel %vm258, %v255, 0.0
  %269 = vadd.xlane.f32.xlu0 %v268
  %v270 = vpop.xlane.xlu0 %269
  %v271 = vsel %vm258, %v256, 0.0
  %272 = vadd.xlane.f32.xlu0 %v271
  %v273 = vpop.xlane.xlu0 %272
  %v274 = vsel %vm258, %v257, 0.0
  %275 = vadd.xlane.f32.xlu0 %v274
  %v276 = vpop.xlane.xlu0 %275
  %v277 = vrcp.pop 32.0
  %v278 = vmul.f32 %v261, %v277
  %v279 = vmul.f32 %v264, %v277
  %v280 = vmul.f32 %v267, %v277
  %v281 = vmul.f32 %v270, %v277
  %v282 = vmul.f32 %v273, %v277
  %v283 = vmul.f32 %v276, %v277
  %v284 = vsub.f32 %v252, %v278
  %v285 = vsub.f32 %v253, %v279
  %v286 = vsub.f32 %v254, %v280
  %v287 = vsub.f32 %v255, %v281
  %v288 = vsub.f32 %v256, %v282
  %v289 = vsub.f32 %v257, %v283
  %v290 = vmul.f32 %v284, %v284
  %v291 = vmul.f32 %v285, %v285
  %v292 = vmul.f32 %v286, %v286
  %v293 = vmul.f32 %v287, %v287
  %v294 = vmul.f32 %v288, %v288
  %v295 = vmul.f32 %v289, %v289
  %v296 = vsel %vm258, %v290, 0.0
  %297 = vadd.xlane.f32.xlu0 %v296
  %v298 = vpop.xlane.xlu0 %297
  %v299 = vsel %vm258, %v291, 0.0
  %300 = vadd.xlane.f32.xlu0 %v299
  %v301 = vpop.xlane.xlu0 %300
  %v302 = vsel %vm258, %v292, 0.0
  %303 = vadd.xlane.f32.xlu0 %v302
  %v304 = vpop.xlane.xlu0 %303
  %v305 = vsel %vm258, %v293, 0.0
  %306 = vadd.xlane.f32.xlu0 %v305
  %v307 = vpop.xlane.xlu0 %306
  %v308 = vsel %vm258, %v294, 0.0
  %309 = vadd.xlane.f32.xlu0 %v308
  %v310 = vpop.xlane.xlu0 %309
  %v311 = vsel %vm258, %v295, 0.0
  %312 = vadd.xlane.f32.xlu0 %v311
  %v313 = vpop.xlane.xlu0 %312
  %v314 = vmul.f32 %v298, %v277
  %v315 = vmul.f32 %v301, %v277
  %v316 = vmul.f32 %v304, %v277
  %v317 = vmul.f32 %v307, %v277
  %v318 = vmul.f32 %v310, %v277
  %v319 = vmul.f32 %v313, %v277
  %v320 = vadd.f32 %v314, 1e-05
  %v321 = vadd.f32 %v315, 1e-05
  %v322 = vadd.f32 %v316, 1e-05
  %v323 = vadd.f32 %v317, 1e-05
  %v324 = vadd.f32 %v318, 1e-05
  %v325 = vadd.f32 %v319, 1e-05
  %v326 = vrsqrt.pop %v320
  %v327 = vrsqrt.pop %v321
  %v328 = vrsqrt.pop %v322
  %v329 = vrsqrt.pop %v323
  %v330 = vrsqrt.pop %v324
  %v331 = vrsqrt.pop %v325
  %v332 = vmul.f32 %v284, %v326
  %v333 = vmul.f32 %v285, %v327
  %v334 = vmul.f32 %v286, %v328
  %v335 = vmul.f32 %v287, %v329
  %v336 = vmul.f32 %v288, %v330
  %v337 = vmul.f32 %v289, %v331
  %v338 = vlaneseq
  %v339 = vshrl.u32 %v338, 7
  %v340 = vsub.s32 0, %v339
  %v341 = vrot.slane %v75, %v340
  %v342 = vmul.f32 %v332, %v341
  %v343 = vmul.f32 %v333, %v341
  %v344 = vmul.f32 %v334, %v341
  %v345 = vmul.f32 %v335, %v341
  %v346 = vmul.f32 %v336, %v341
  %v347 = vmul.f32 %v337, %v341
  %v348 = vlaneseq
  %v349 = vshrl.u32 %v348, 7
  %v350 = vsub.s32 1, %v349
  %v351 = vrot.slane %v75, %v350
  %v352 = vadd.f32 %v342, %v351
  %v353 = vadd.f32 %v343, %v351
  %v354 = vadd.f32 %v344, %v351
  %v355 = vadd.f32 %v345, %v351
  %v356 = vadd.f32 %v346, %v351
  %v357 = vadd.f32 %v347, %v351
  %v358 = vpack.c.bf16 %v353, %v352
  %v359 = vpack.c.bf16 %v355, %v354
  %v360 = vpack.c.bf16 %v357, %v356
  %v361 = vld [vmem:[%s7] sm:$0xf]
  %v362 = vld [vmem:[%s7 + $0x4] sm:$0xf]
  %v363 = vld [vmem:[%s7 + $0x8] sm:$0xf]
  %v364 = vld [vmem:[%s7 + $0xc] sm:$0xf]
  %v365 = vld [vmem:[%s8] sm:$0x1]
  %v367 = vlaneseq
  %v368 = vshrl.u32 %v367, 7
  %v369 = vsub.s32 0, %v368
  %v370 = vrot.slane %v365, %v369
  %v376 = vunpack.c.l.b16 %v361
  %v377 = vunpack.c.l.b16 %v362
  %v378 = vunpack.c.l.b16 %v363
  %v379 = vunpack.c.l.b16 %v364
  %v380 = vpack.c.b16 %v377, %v376
  %v381 = vpack.c.b16 %v379, %v378
  %v385 = vsel %vm258, %v358, 0
  %v388 = vsel %vm258, %v359, 0
  %v391 = vsel %vm258, %v360, 0
  %393 = vmatprep.subr.bf16.mxu0 0
  %394 = vmatpush1.bf16.msra.mxu0 %v380
  %395 = vmatprep.subr.bf16.mxu0 0
  %396 = vmatpush1.bf16.msra.mxu0 %v381
  %397 = vmatprep.subr.bf16.mxu0 0
  %398 = vmatpush1.bf16.msra.mxu0 0
  %399 = vmatprep.subr.bf16.mxu0 0
  %400 = vmatpush1.bf16.msra.mxu0 0
  %401 = vmatprep.subr.bf16.mxu0 0
  %402 = vmatpush1.bf16.msra.mxu0 0
  %403 = vmatprep.subr.bf16.mxu0 0
  %404 = vmatpush1.bf16.msra.mxu0 0
  %405 = vmatprep.subr.bf16.mxu0 0
  %406 = vmatpush1.bf16.msra.mxu0 0
  %407 = vmatprep.subr.bf16.mxu0 0
  %408 = vmatpush1.bf16.msra.mxu0 0
  %409 = vmatprep.subr.bf16.mxu0 0
  %410 = vmatpush1.bf16.msra.mxu0 0
  %411 = vmatprep.subr.bf16.mxu0 0
  %412 = vmatpush1.bf16.msra.mxu0 0
  %413 = vmatprep.subr.bf16.mxu0 0
  %414 = vmatpush1.bf16.msra.mxu0 0
  %415 = vmatprep.subr.bf16.mxu0 0
  %416 = vmatpush1.bf16.msra.mxu0 0
  %417 = vmatprep.subr.bf16.mxu0 0
  %418 = vmatpush1.bf16.msra.mxu0 0
  %419 = vmatprep.subr.bf16.mxu0 0
  %420 = vmatpush1.bf16.msra.mxu0 0
  %421 = vmatprep.subr.bf16.mxu0 0
  %422 = vmatpush1.bf16.msra.mxu0 0
  %423 = vmatprep.subr.bf16.mxu0 0
  %424 = vmatpush1.bf16.msra.mxu0 0
  %425 = vmatprep.mubr.bf16.mxu0 0
  %426 = vmatmul.mubr.bf16.gmra.mrb[0].mxu0 %v385
  %v427 = vpop.f32.mrb[0].mxu0
  %v428 = vadd.f32 %v370, %v427
  %v429 = vpop.f32.mrb[0].mxu0
  %v430 = vpop.f32.mrb[0].mxu0
  %v431 = vadd.f32 %v370, %v430
  %v432 = vpop.f32.mrb[0].mxu0
  %433 = vmatprep.mubr.bf16.mxu0 0
  %434 = vmatmul.mubr.bf16.gmra.mrb[0].mxu0 %v388
  %v435 = vpop.f32.mrb[0].mxu0
  %v436 = vadd.f32 %v370, %v435
  %v437 = vpop.f32.mrb[0].mxu0
  %v438 = vpop.f32.mrb[0].mxu0
  %v439 = vadd.f32 %v370, %v438
  %v440 = vpop.f32.mrb[0].mxu0
  %441 = vmatprep.mubr.bf16.mxu0 0
  %442 = vmatmul.mubr.bf16.gmra.mrb[0].mxu0 %v391
  %v443 = vpop.f32.mrb[0].mxu0
  %v444 = vadd.f32 %v370, %v443
  %v445 = vpop.f32.mrb[0].mxu0
  %v446 = vpop.f32.mrb[0].mxu0
  %v447 = vadd.f32 %v370, %v446
  %v448 = vpop.f32.mrb[0].mxu0
  %449 = vdwg.mxu0
  %v450 = vld [vmem:[%s9] sm:$0xf]
  %v451 = vld [vmem:[%s9 + $0x4] sm:$0xf]
  %v452 = vld [vmem:[%s9 + $0x8] sm:$0xf]
  %v453 = vld [vmem:[%s9 + $0xc] sm:$0xf]
  %v454 = vpack.c.bf16 %v431, %v428
  %v455 = vpack.c.bf16 %v439, %v436
  %v456 = vpack.c.bf16 %v447, %v444
  %460 = vrot.lane.b32.xlu0 %v454, 96
  %v461 = vpop.permute.xlu0 %460
  %462 = vrot.lane.b32.xlu0 %v455, 96
  %v463 = vpop.permute.xlu0 %462
  %464 = vrot.lane.b32.xlu0 %v456, 96
  %v465 = vpop.permute.xlu0 %464
  %vm466 = vcmask 130048
  %v468 = vsel %vm466, %v454, 0
  %v471 = vsel %vm466, %v455, 0
  %v474 = vsel %vm466, %v456, 0
  %v477 = vsel %vm466, %v461, 0
  %v480 = vsel %vm466, %v463, 0
  %v483 = vsel %vm466, %v465, 0
  %485 = vmatprep.subr.bf16.mxu0 0
  %486 = vmatpush1.bf16.xpose.msra.mxu0 %v477
  %487 = vmatprep.subr.bf16.mxu0 0
  %488 = vmatpush1.bf16.xpose.msra.mxu0 %v480
  %489 = vmatprep.subr.bf16.mxu0 0
  %490 = vmatpush1.bf16.xpose.msra.mxu0 %v483
  %491 = vmatprep.subr.bf16.mxu0 0
  %492 = vmatpush1.bf16.xpose.msra.mxu0 0
  %493 = vmatprep.subr.bf16.mxu0 0
  %494 = vmatpush1.bf16.xpose.msra.mxu0 0
  %495 = vmatprep.subr.bf16.mxu0 0
  %496 = vmatpush1.bf16.xpose.msra.mxu0 0
  %497 = vmatprep.subr.bf16.mxu0 0
  %498 = vmatpush1.bf16.xpose.msra.mxu0 0
  %499 = vmatprep.subr.bf16.mxu0 0
  %500 = vmatpush1.bf16.xpose.msra.mxu0 0
  %501 = vmatprep.subr.bf16.mxu0 0
  %502 = vmatpush1.bf16.xpose.msra.mxu0 0
  %503 = vmatprep.subr.bf16.mxu0 0
  %504 = vmatpush1.bf16.xpose.msra.mxu0 0
  %505 = vmatprep.subr.bf16.mxu0 0
  %506 = vmatpush1.bf16.xpose.msra.mxu0 0
  %507 = vmatprep.subr.bf16.mxu0 0
  %508 = vmatpush1.bf16.xpose.msra.mxu0 0
  %509 = vmatprep.subr.bf16.mxu0 0
  %510 = vmatpush1.bf16.xpose.msra.mxu0 0
  %511 = vmatprep.subr.bf16.mxu0 0
  %512 = vmatpush1.bf16.xpose.msra.mxu0 0
  %513 = vmatprep.subr.bf16.mxu0 0
  %514 = vmatpush1.bf16.xpose.msra.mxu0 0
  %515 = vmatprep.subr.bf16.mxu0 0
  %516 = vmatpush1.bf16.xpose.msra.mxu0 0
  %517 = vmatprep.mubr.bf16.mxu0 0
  %518 = vmatmul.mubr.bf16.gmra.mrb[0].mxu0 %v468
  %v519 = vpop.f32.mrb[0].mxu0
  %v520 = vadd.f32 %v168, %v519
  %v521 = vpop.f32.mrb[0].mxu0
  %v522 = vpop.f32.mrb[0].mxu0
  %v523 = vadd.f32 %v169, %v522
  %v524 = vpop.f32.mrb[0].mxu0
  %525 = vmatprep.mubr.bf16.mxu0 0
  %526 = vmatmul.mubr.bf16.gmra.mrb[0].mxu0 %v471
  %v527 = vpop.f32.mrb[0].mxu0
  %v528 = vadd.f32 %v170, %v527
  %v529 = vpop.f32.mrb[0].mxu0
  %v530 = vpop.f32.mrb[0].mxu0
  %v531 = vadd.f32 %v171, %v530
  %v532 = vpop.f32.mrb[0].mxu0
  %533 = vmatprep.mubr.bf16.mxu0 0
  %534 = vmatmul.mubr.bf16.gmra.mrb[0].mxu0 %v474
  %v535 = vpop.f32.mrb[0].mxu0
  %v536 = vadd.f32 %v172, %v535
  %v537 = vpop.f32.mrb[0].mxu0
  %v538 = vpop.f32.mrb[0].mxu0
  %v539 = vadd.f32 %v173, %v538
  %v540 = vpop.f32.mrb[0].mxu0
  %541 = vdwg.mxu0
  %vm542 = vcmask 392192
  %v543 = vsel %vm542, %v520, -inf
  %544 = vmax.xlane.f32.xlu0 %v543
  %v545 = vpop.xlane.xlu0 %544
  %v546 = vsel %vm542, %v523, -inf
  %547 = vmax.xlane.f32.xlu0 %v546
  %v548 = vpop.xlane.xlu0 %547
  %v549 = vsel %vm542, %v528, -inf
  %550 = vmax.xlane.f32.xlu0 %v549
  %v551 = vpop.xlane.xlu0 %550
  %v552 = vsel %vm542, %v531, -inf
  %553 = vmax.xlane.f32.xlu0 %v552
  %v554 = vpop.xlane.xlu0 %553
  %v555 = vsel %vm542, %v536, -inf
  %556 = vmax.xlane.f32.xlu0 %v555
  %v557 = vpop.xlane.xlu0 %556
  %v558 = vsel %vm542, %v539, -inf
  %559 = vmax.xlane.f32.xlu0 %v558
  %v560 = vpop.xlane.xlu0 %559
  %v561 = vsub.f32 %v520, %v545
  %v562 = vsub.f32 %v523, %v548
  %v563 = vsub.f32 %v528, %v551
  %v564 = vsub.f32 %v531, %v554
  %v565 = vsub.f32 %v536, %v557
  %v566 = vsub.f32 %v539, %v560
  %v567 = vmul.f32 %v561, 1.442695
  %v568 = vpow.pop %v567
  %v569 = vmul.f32 %v562, 1.442695
  %v570 = vpow.pop %v569
  %v571 = vmul.f32 %v563, 1.442695
  %v572 = vpow.pop %v571
  %v573 = vmul.f32 %v564, 1.442695
  %v574 = vpow.pop %v573
  %v575 = vmul.f32 %v565, 1.442695
  %v576 = vpow.pop %v575
  %v577 = vmul.f32 %v566, 1.442695
  %v578 = vpow.pop %v577
  %v579 = vsel %vm542, %v568, 0.0
  %580 = vadd.xlane.f32.xlu0 %v579
  %v581 = vpop.xlane.xlu0 %580
  %v582 = vsel %vm542, %v570, 0.0
  %583 = vadd.xlane.f32.xlu0 %v582
  %v584 = vpop.xlane.xlu0 %583
  %v585 = vsel %vm542, %v572, 0.0
  %586 = vadd.xlane.f32.xlu0 %v585
  %v587 = vpop.xlane.xlu0 %586
  %v588 = vsel %vm542, %v574, 0.0
  %589 = vadd.xlane.f32.xlu0 %v588
  %v590 = vpop.xlane.xlu0 %589
  %v591 = vsel %vm542, %v576, 0.0
  %592 = vadd.xlane.f32.xlu0 %v591
  %v593 = vpop.xlane.xlu0 %592
  %v594 = vsel %vm542, %v578, 0.0
  %595 = vadd.xlane.f32.xlu0 %v594
  %v596 = vpop.xlane.xlu0 %595
  %v597 = vrcp.pop %v581
  %v598 = vrcp.pop %v584
  %v599 = vrcp.pop %v587
  %v600 = vrcp.pop %v590
  %v601 = vrcp.pop %v593
  %v602 = vrcp.pop %v596
  %v603 = vmul.f32 %v568, %v597
  %v604 = vmul.f32 %v570, %v598
  %v605 = vmul.f32 %v572, %v599
  %v606 = vmul.f32 %v574, %v600
  %v607 = vmul.f32 %v576, %v601
  %v608 = vmul.f32 %v578, %v602
  %v609 = vpack.c.bf16 %v604, %v603
  %v610 = vpack.c.bf16 %v606, %v605
  %v611 = vpack.c.bf16 %v608, %v607
  %612 = vrot.lane.b32.xlu0 %v454, 64
  %v613 = vpop.permute.xlu0 %612
  %614 = vrot.lane.b32.xlu0 %v455, 64
  %v615 = vpop.permute.xlu0 %614
  %616 = vrot.lane.b32.xlu0 %v456, 64
  %v617 = vpop.permute.xlu0 %616
  %v622 = vsel %vm542, %v609, 0
  %v625 = vsel %vm542, %v610, 0
  %v628 = vsel %vm542, %v611, 0
  %630 = vmatprep.subr.bf16.mxu0 0
  %631 = vmatpush1.bf16.msra.mxu0 %v613
  %632 = vmatprep.subr.bf16.mxu0 0
  %633 = vmatpush1.bf16.msra.mxu0 %v615
  %634 = vmatprep.subr.bf16.mxu0 0
  %635 = vmatpush1.bf16.msra.mxu0 %v617
  %636 = vmatprep.subr.bf16.mxu0 0
  %637 = vmatpush1.bf16.msra.mxu0 0
  %638 = vmatprep.subr.bf16.mxu0 0
  %639 = vmatpush1.bf16.msra.mxu0 0
  %640 = vmatprep.subr.bf16.mxu0 0
  %641 = vmatpush1.bf16.msra.mxu0 0
  %642 = vmatprep.subr.bf16.mxu0 0
  %643 = vmatpush1.bf16.msra.mxu0 0
  %644 = vmatprep.subr.bf16.mxu0 0
  %645 = vmatpush1.bf16.msra.mxu0 0
  %646 = vmatprep.subr.bf16.mxu0 0
  %647 = vmatpush1.bf16.msra.mxu0 0
  %648 = vmatprep.subr.bf16.mxu0 0
  %649 = vmatpush1.bf16.msra.mxu0 0
  %650 = vmatprep.subr.bf16.mxu0 0
  %651 = vmatpush1.bf16.msra.mxu0 0
  %652 = vmatprep.subr.bf16.mxu0 0
  %653 = vmatpush1.bf16.msra.mxu0 0
  %654 = vmatprep.subr.bf16.mxu0 0
  %655 = vmatpush1.bf16.msra.mxu0 0
  %656 = vmatprep.subr.bf16.mxu0 0
  %657 = vmatpush1.bf16.msra.mxu0 0
  %658 = vmatprep.subr.bf16.mxu0 0
  %659 = vmatpush1.bf16.msra.mxu0 0
  %660 = vmatprep.subr.bf16.mxu0 0
  %661 = vmatpush1.bf16.msra.mxu0 0
  %662 = vmatprep.mubr.bf16.mxu0 0
  %663 = vmatmul.mubr.bf16.gmra.mrb[0].mxu0 %v622
  %v664 = vpop.f32.mrb[0].mxu0
  %v665 = vadd.f32 0.0, %v664
  %v666 = vpop.f32.mrb[0].mxu0
  %v667 = vpop.f32.mrb[0].mxu0
  %v668 = vadd.f32 0.0, %v667
  %v669 = vpop.f32.mrb[0].mxu0
  %670 = vmatprep.mubr.bf16.mxu0 0
  %671 = vmatmul.mubr.bf16.gmra.mrb[0].mxu0 %v625
  %v672 = vpop.f32.mrb[0].mxu0
  %v673 = vadd.f32 0.0, %v672
  %v674 = vpop.f32.mrb[0].mxu0
  %v675 = vpop.f32.mrb[0].mxu0
  %v676 = vadd.f32 0.0, %v675
  %v677 = vpop.f32.mrb[0].mxu0
  %678 = vmatprep.mubr.bf16.mxu0 0
  %679 = vmatmul.mubr.bf16.gmra.mrb[0].mxu0 %v628
  %v680 = vpop.f32.mrb[0].mxu0
  %v681 = vadd.f32 0.0, %v680
  %v682 = vpop.f32.mrb[0].mxu0
  %v683 = vpop.f32.mrb[0].mxu0
  %v684 = vadd.f32 0.0, %v683
  %v685 = vpop.f32.mrb[0].mxu0
  %686 = vdwg.mxu0
  %v687 = vpack.c.bf16 %v668, %v665
  %v688 = vpack.c.bf16 %v676, %v673
  %v689 = vpack.c.bf16 %v684, %v681
  %690 = vrot.lane.b32.xlu0 %v454, 112
  %v691 = vpop.permute.xlu0 %690
  %692 = vrot.lane.b32.xlu0 %v455, 112
  %v693 = vpop.permute.xlu0 %692
  %694 = vrot.lane.b32.xlu0 %v456, 112
  %v695 = vpop.permute.xlu0 %694
  %696 = vrot.lane.b32.xlu0 %v454, 80
  %v697 = vpop.permute.xlu0 %696
  %698 = vrot.lane.b32.xlu0 %v455, 80
  %v699 = vpop.permute.xlu0 %698
  %700 = vrot.lane.b32.xlu0 %v456, 80
  %v701 = vpop.permute.xlu0 %700
  %v703 = vsel %vm466, %v691, 0
  %v706 = vsel %vm466, %v693, 0
  %v709 = vsel %vm466, %v695, 0
  %v712 = vsel %vm466, %v697, 0
  %v715 = vsel %vm466, %v699, 0
  %v718 = vsel %vm466, %v701, 0
  %720 = vmatprep.subr.bf16.mxu0 0
  %721 = vmatpush1.bf16.xpose.msra.mxu0 %v712
  %722 = vmatprep.subr.bf16.mxu0 0
  %723 = vmatpush1.bf16.xpose.msra.mxu0 %v715
  %724 = vmatprep.subr.bf16.mxu0 0
  %725 = vmatpush1.bf16.xpose.msra.mxu0 %v718
  %726 = vmatprep.subr.bf16.mxu0 0
  %727 = vmatpush1.bf16.xpose.msra.mxu0 0
  %728 = vmatprep.subr.bf16.mxu0 0
  %729 = vmatpush1.bf16.xpose.msra.mxu0 0
  %730 = vmatprep.subr.bf16.mxu0 0
  %731 = vmatpush1.bf16.xpose.msra.mxu0 0
  %732 = vmatprep.subr.bf16.mxu0 0
  %733 = vmatpush1.bf16.xpose.msra.mxu0 0
  %734 = vmatprep.subr.bf16.mxu0 0
  %735 = vmatpush1.bf16.xpose.msra.mxu0 0
  %736 = vmatprep.subr.bf16.mxu0 0
  %737 = vmatpush1.bf16.xpose.msra.mxu0 0
  %738 = vmatprep.subr.bf16.mxu0 0
  %739 = vmatpush1.bf16.xpose.msra.mxu0 0
  %740 = vmatprep.subr.bf16.mxu0 0
  %741 = vmatpush1.bf16.xpose.msra.mxu0 0
  %742 = vmatprep.subr.bf16.mxu0 0
  %743 = vmatpush1.bf16.xpose.msra.mxu0 0
  %744 = vmatprep.subr.bf16.mxu0 0
  %745 = vmatpush1.bf16.xpose.msra.mxu0 0
  %746 = vmatprep.subr.bf16.mxu0 0
  %747 = vmatpush1.bf16.xpose.msra.mxu0 0
  %748 = vmatprep.subr.bf16.mxu0 0
  %749 = vmatpush1.bf16.xpose.msra.mxu0 0
  %750 = vmatprep.subr.bf16.mxu0 0
  %751 = vmatpush1.bf16.xpose.msra.mxu0 0
  %752 = vmatprep.mubr.bf16.mxu0 0
  %753 = vmatmul.mubr.bf16.gmra.mrb[0].mxu0 %v703
  %v754 = vpop.f32.mrb[0].mxu0
  %v755 = vadd.f32 %v168, %v754
  %v756 = vpop.f32.mrb[0].mxu0
  %v757 = vpop.f32.mrb[0].mxu0
  %v758 = vadd.f32 %v169, %v757
  %v759 = vpop.f32.mrb[0].mxu0
  %760 = vmatprep.mubr.bf16.mxu0 0
  %761 = vmatmul.mubr.bf16.gmra.mrb[0].mxu0 %v706
  %v762 = vpop.f32.mrb[0].mxu0
  %v763 = vadd.f32 %v170, %v762
  %v764 = vpop.f32.mrb[0].mxu0
  %v765 = vpop.f32.mrb[0].mxu0
  %v766 = vadd.f32 %v171, %v765
  %v767 = vpop.f32.mrb[0].mxu0
  %768 = vmatprep.mubr.bf16.mxu0 0
  %769 = vmatmul.mubr.bf16.gmra.mrb[0].mxu0 %v709
  %v770 = vpop.f32.mrb[0].mxu0
  %v771 = vadd.f32 %v172, %v770
  %v772 = vpop.f32.mrb[0].mxu0
  %v773 = vpop.f32.mrb[0].mxu0
  %v774 = vadd.f32 %v173, %v773
  %v775 = vpop.f32.mrb[0].mxu0
  %776 = vdwg.mxu0
  %v777 = vsel %vm542, %v755, -inf
  %778 = vmax.xlane.f32.xlu0 %v777
  %v779 = vpop.xlane.xlu0 %778
  %v780 = vsel %vm542, %v758, -inf
  %781 = vmax.xlane.f32.xlu0 %v780
  %v782 = vpop.xlane.xlu0 %781
  %v783 = vsel %vm542, %v763, -inf
  %784 = vmax.xlane.f32.xlu0 %v783
  %v785 = vpop.xlane.xlu0 %784
  %v786 = vsel %vm542, %v766, -inf
  %787 = vmax.xlane.f32.xlu0 %v786
  %v788 = vpop.xlane.xlu0 %787
  %v789 = vsel %vm542, %v771, -inf
  %790 = vmax.xlane.f32.xlu0 %v789
  %v791 = vpop.xlane.xlu0 %790
  %v792 = vsel %vm542, %v774, -inf
  %793 = vmax.xlane.f32.xlu0 %v792
  %v794 = vpop.xlane.xlu0 %793
  %v795 = vsub.f32 %v755, %v779
  %v796 = vsub.f32 %v758, %v782
  %v797 = vsub.f32 %v763, %v785
  %v798 = vsub.f32 %v766, %v788
  %v799 = vsub.f32 %v771, %v791
  %v800 = vsub.f32 %v774, %v794
  %v801 = vmul.f32 %v795, 1.442695
  %v802 = vpow.pop %v801
  %v803 = vmul.f32 %v796, 1.442695
  %v804 = vpow.pop %v803
  %v805 = vmul.f32 %v797, 1.442695
  %v806 = vpow.pop %v805
  %v807 = vmul.f32 %v798, 1.442695
  %v808 = vpow.pop %v807
  %v809 = vmul.f32 %v799, 1.442695
  %v810 = vpow.pop %v809
  %v811 = vmul.f32 %v800, 1.442695
  %v812 = vpow.pop %v811
  %v813 = vsel %vm542, %v802, 0.0
  %814 = vadd.xlane.f32.xlu0 %v813
  %v815 = vpop.xlane.xlu0 %814
  %v816 = vsel %vm542, %v804, 0.0
  %817 = vadd.xlane.f32.xlu0 %v816
  %v818 = vpop.xlane.xlu0 %817
  %v819 = vsel %vm542, %v806, 0.0
  %820 = vadd.xlane.f32.xlu0 %v819
  %v821 = vpop.xlane.xlu0 %820
  %v822 = vsel %vm542, %v808, 0.0
  %823 = vadd.xlane.f32.xlu0 %v822
  %v824 = vpop.xlane.xlu0 %823
  %v825 = vsel %vm542, %v810, 0.0
  %826 = vadd.xlane.f32.xlu0 %v825
  %v827 = vpop.xlane.xlu0 %826
  %v828 = vsel %vm542, %v812, 0.0
  %829 = vadd.xlane.f32.xlu0 %v828
  %v830 = vpop.xlane.xlu0 %829
  %v831 = vrcp.pop %v815
  %v832 = vrcp.pop %v818
  %v833 = vrcp.pop %v821
  %v834 = vrcp.pop %v824
  %v835 = vrcp.pop %v827
  %v836 = vrcp.pop %v830
  %v837 = vmul.f32 %v802, %v831
  %v838 = vmul.f32 %v804, %v832
  %v839 = vmul.f32 %v806, %v833
  %v840 = vmul.f32 %v808, %v834
  %v841 = vmul.f32 %v810, %v835
  %v842 = vmul.f32 %v812, %v836
  %v843 = vpack.c.bf16 %v838, %v837
  %v844 = vpack.c.bf16 %v840, %v839
  %v845 = vpack.c.bf16 %v842, %v841
  %846 = vrot.lane.b32.xlu0 %v454, 48
  %v847 = vpop.permute.xlu0 %846
  %848 = vrot.lane.b32.xlu0 %v455, 48
  %v849 = vpop.permute.xlu0 %848
  %850 = vrot.lane.b32.xlu0 %v456, 48
  %v851 = vpop.permute.xlu0 %850
  %v856 = vsel %vm542, %v843, 0
  %v859 = vsel %vm542, %v844, 0
  %v862 = vsel %vm542, %v845, 0
  %864 = vmatprep.subr.bf16.mxu0 0
  %865 = vmatpush1.bf16.msra.mxu0 %v847
  %866 = vmatprep.subr.bf16.mxu0 0
  %867 = vmatpush1.bf16.msra.mxu0 %v849
  %868 = vmatprep.subr.bf16.mxu0 0
  %869 = vmatpush1.bf16.msra.mxu0 %v851
  %870 = vmatprep.subr.bf16.mxu0 0
  %871 = vmatpush1.bf16.msra.mxu0 0
  %872 = vmatprep.subr.bf16.mxu0 0
  %873 = vmatpush1.bf16.msra.mxu0 0
  %874 = vmatprep.subr.bf16.mxu0 0
  %875 = vmatpush1.bf16.msra.mxu0 0
  %876 = vmatprep.subr.bf16.mxu0 0
  %877 = vmatpush1.bf16.msra.mxu0 0
  %878 = vmatprep.subr.bf16.mxu0 0
  %879 = vmatpush1.bf16.msra.mxu0 0
  %880 = vmatprep.subr.bf16.mxu0 0
  %881 = vmatpush1.bf16.msra.mxu0 0
  %882 = vmatprep.subr.bf16.mxu0 0
  %883 = vmatpush1.bf16.msra.mxu0 0
  %884 = vmatprep.subr.bf16.mxu0 0
  %885 = vmatpush1.bf16.msra.mxu0 0
  %886 = vmatprep.subr.bf16.mxu0 0
  %887 = vmatpush1.bf16.msra.mxu0 0
  %888 = vmatprep.subr.bf16.mxu0 0
  %889 = vmatpush1.bf16.msra.mxu0 0
  %890 = vmatprep.subr.bf16.mxu0 0
  %891 = vmatpush1.bf16.msra.mxu0 0
  %892 = vmatprep.subr.bf16.mxu0 0
  %893 = vmatpush1.bf16.msra.mxu0 0
  %894 = vmatprep.subr.bf16.mxu0 0
  %895 = vmatpush1.bf16.msra.mxu0 0
  %896 = vmatprep.mubr.bf16.mxu0 0
  %897 = vmatmul.mubr.bf16.gmra.mrb[0].mxu0 %v856
  %v898 = vpop.f32.mrb[0].mxu0
  %v899 = vadd.f32 0.0, %v898
  %v900 = vpop.f32.mrb[0].mxu0
  %v901 = vpop.f32.mrb[0].mxu0
  %v902 = vadd.f32 0.0, %v901
  %v903 = vpop.f32.mrb[0].mxu0
  %904 = vmatprep.mubr.bf16.mxu0 0
  %905 = vmatmul.mubr.bf16.gmra.mrb[0].mxu0 %v859
  %v906 = vpop.f32.mrb[0].mxu0
  %v907 = vadd.f32 0.0, %v906
  %v908 = vpop.f32.mrb[0].mxu0
  %v909 = vpop.f32.mrb[0].mxu0
  %v910 = vadd.f32 0.0, %v909
  %v911 = vpop.f32.mrb[0].mxu0
  %912 = vmatprep.mubr.bf16.mxu0 0
  %913 = vmatmul.mubr.bf16.gmra.mrb[0].mxu0 %v862
  %v914 = vpop.f32.mrb[0].mxu0
  %v915 = vadd.f32 0.0, %v914
  %v916 = vpop.f32.mrb[0].mxu0
  %v917 = vpop.f32.mrb[0].mxu0
  %v918 = vadd.f32 0.0, %v917
  %v919 = vpop.f32.mrb[0].mxu0
  %920 = vdwg.mxu0
  %v921 = vpack.c.bf16 %v902, %v899
  %v922 = vpack.c.bf16 %v910, %v907
  %v923 = vpack.c.bf16 %v918, %v915
  %v926 = vunpack.c.l.b16 %v452
  %v927 = vunpack.c.l.b16 %v453
  %v928 = vpack.c.b16 %v927, %v926
  %v931 = vsel %vm466, %v921, 0
  %v934 = vsel %vm466, %v922, 0
  %v937 = vsel %vm466, %v923, 0
  %939 = vmatprep.subr.bf16.mxu0 0
  %940 = vmatpush1.bf16.msra.mxu0 %v928
  %941 = vmatprep.subr.bf16.mxu0 0
  %942 = vmatpush1.bf16.msra.mxu0 0
  %943 = vmatprep.subr.bf16.mxu0 0
  %944 = vmatpush1.bf16.msra.mxu0 0
  %945 = vmatprep.subr.bf16.mxu0 0
  %946 = vmatpush1.bf16.msra.mxu0 0
  %947 = vmatprep.subr.bf16.mxu0 0
  %948 = vmatpush1.bf16.msra.mxu0 0
  %949 = vmatprep.subr.bf16.mxu0 0
  %950 = vmatpush1.bf16.msra.mxu0 0
  %951 = vmatprep.subr.bf16.mxu0 0
  %952 = vmatpush1.bf16.msra.mxu0 0
  %953 = vmatprep.subr.bf16.mxu0 0
  %954 = vmatpush1.bf16.msra.mxu0 0
  %955 = vmatprep.subr.bf16.mxu0 0
  %956 = vmatpush1.bf16.msra.mxu0 0
  %957 = vmatprep.subr.bf16.mxu0 0
  %958 = vmatpush1.bf16.msra.mxu0 0
  %959 = vmatprep.subr.bf16.mxu0 0
  %960 = vmatpush1.bf16.msra.mxu0 0
  %961 = vmatprep.subr.bf16.mxu0 0
  %962 = vmatpush1.bf16.msra.mxu0 0
  %963 = vmatprep.subr.bf16.mxu0 0
  %964 = vmatpush1.bf16.msra.mxu0 0
  %965 = vmatprep.subr.bf16.mxu0 0
  %966 = vmatpush1.bf16.msra.mxu0 0
  %967 = vmatprep.subr.bf16.mxu0 0
  %968 = vmatpush1.bf16.msra.mxu0 0
  %969 = vmatprep.subr.bf16.mxu0 0
  %970 = vmatpush1.bf16.msra.mxu0 0
  %971 = vmatprep.mubr.bf16.mxu0 0
  %972 = vmatmul.mubr.bf16.gmra.mrb[0].mxu0 %v931
  %v973 = vpop.f32.mrb[0].mxu0
  %v974 = vadd.f32 0.0, %v973
  %v975 = vpop.f32.mrb[0].mxu0
  %v976 = vpop.f32.mrb[0].mxu0
  %v977 = vadd.f32 0.0, %v976
  %v978 = vpop.f32.mrb[0].mxu0
  %979 = vmatprep.mubr.bf16.mxu0 0
  %980 = vmatmul.mubr.bf16.gmra.mrb[0].mxu0 %v934
  %v981 = vpop.f32.mrb[0].mxu0
  %v982 = vadd.f32 0.0, %v981
  %v983 = vpop.f32.mrb[0].mxu0
  %v984 = vpop.f32.mrb[0].mxu0
  %v985 = vadd.f32 0.0, %v984
  %v986 = vpop.f32.mrb[0].mxu0
  %987 = vmatprep.mubr.bf16.mxu0 0
  %988 = vmatmul.mubr.bf16.gmra.mrb[0].mxu0 %v937
  %v989 = vpop.f32.mrb[0].mxu0
  %v990 = vadd.f32 0.0, %v989
  %v991 = vpop.f32.mrb[0].mxu0
  %v992 = vpop.f32.mrb[0].mxu0
  %v993 = vadd.f32 0.0, %v992
  %v994 = vpop.f32.mrb[0].mxu0
  %995 = vdwg.mxu0
  %v998 = vunpack.c.l.b16 %v450
  %v999 = vunpack.c.l.b16 %v451
  %v1000 = vpack.c.b16 %v999, %v998
  %v1003 = vsel %vm466, %v687, 0
  %v1006 = vsel %vm466, %v688, 0
  %v1009 = vsel %vm466, %v689, 0
  %1011 = vmatprep.subr.bf16.mxu0 0
  %1012 = vmatpush1.bf16.msra.mxu0 %v1000
  %1013 = vmatprep.subr.bf16.mxu0 0
  %1014 = vmatpush1.bf16.msra.mxu0 0
  %1015 = vmatprep.subr.bf16.mxu0 0
  %1016 = vmatpush1.bf16.msra.mxu0 0
  %1017 = vmatprep.subr.bf16.mxu0 0
  %1018 = vmatpush1.bf16.msra.mxu0 0
  %1019 = vmatprep.subr.bf16.mxu0 0
  %1020 = vmatpush1.bf16.msra.mxu0 0
  %1021 = vmatprep.subr.bf16.mxu0 0
  %1022 = vmatpush1.bf16.msra.mxu0 0
  %1023 = vmatprep.subr.bf16.mxu0 0
  %1024 = vmatpush1.bf16.msra.mxu0 0
  %1025 = vmatprep.subr.bf16.mxu0 0
  %1026 = vmatpush1.bf16.msra.mxu0 0
  %1027 = vmatprep.subr.bf16.mxu0 0
  %1028 = vmatpush1.bf16.msra.mxu0 0
  %1029 = vmatprep.subr.bf16.mxu0 0
  %1030 = vmatpush1.bf16.msra.mxu0 0
  %1031 = vmatprep.subr.bf16.mxu0 0
  %1032 = vmatpush1.bf16.msra.mxu0 0
  %1033 = vmatprep.subr.bf16.mxu0 0
  %1034 = vmatpush1.bf16.msra.mxu0 0
  %1035 = vmatprep.subr.bf16.mxu0 0
  %1036 = vmatpush1.bf16.msra.mxu0 0
  %1037 = vmatprep.subr.bf16.mxu0 0
  %1038 = vmatpush1.bf16.msra.mxu0 0
  %1039 = vmatprep.subr.bf16.mxu0 0
  %1040 = vmatpush1.bf16.msra.mxu0 0
  %1041 = vmatprep.subr.bf16.mxu0 0
  %1042 = vmatpush1.bf16.msra.mxu0 0
  %1043 = vmatprep.mubr.bf16.mxu0 0
  %1044 = vmatmul.mubr.bf16.gmra.mrb[0].mxu0 %v1003
  %v1045 = vpop.f32.mrb[0].mxu0
  %v1046 = vadd.f32 %v974, %v1045
  %v1047 = vpop.f32.mrb[0].mxu0
  %v1048 = vpop.f32.mrb[0].mxu0
  %v1049 = vadd.f32 %v977, %v1048
  %v1050 = vpop.f32.mrb[0].mxu0
  %1051 = vmatprep.mubr.bf16.mxu0 0
  %1052 = vmatmul.mubr.bf16.gmra.mrb[0].mxu0 %v1006
  %v1053 = vpop.f32.mrb[0].mxu0
  %v1054 = vadd.f32 %v982, %v1053
  %v1055 = vpop.f32.mrb[0].mxu0
  %v1056 = vpop.f32.mrb[0].mxu0
  %v1057 = vadd.f32 %v985, %v1056
  %v1058 = vpop.f32.mrb[0].mxu0
  %1059 = vmatprep.mubr.bf16.mxu0 0
  %1060 = vmatmul.mubr.bf16.gmra.mrb[0].mxu0 %v1009
  %v1061 = vpop.f32.mrb[0].mxu0
  %v1062 = vadd.f32 %v990, %v1061
  %v1063 = vpop.f32.mrb[0].mxu0
  %v1064 = vpop.f32.mrb[0].mxu0
  %v1065 = vadd.f32 %v993, %v1064
  %v1066 = vpop.f32.mrb[0].mxu0
  %1067 = vdwg.mxu0
  %v1068 = vadd.f32 %v252, %v1046
  %v1069 = vadd.f32 %v253, %v1049
  %v1070 = vadd.f32 %v254, %v1054
  %v1071 = vadd.f32 %v255, %v1057
  %v1072 = vadd.f32 %v256, %v1062
  %v1073 = vadd.f32 %v257, %v1065
  %v1074 = vld [vmem:[%s10] sm:$0x1]
  %v1076 = vlaneseq
  %v1077 = vshrl.u32 %v1076, 7
  %v1078 = vsub.s32 0, %v1077
  %v1079 = vrot.slane %v1074, %v1078
  %v1081 = vadd.f32 %v1068, %v1079
  %v1082 = vadd.f32 %v1069, %v1079
  %v1083 = vadd.f32 %v1070, %v1079
  %v1084 = vadd.f32 %v1071, %v1079
  %v1085 = vadd.f32 %v1072, %v1079
  %v1086 = vadd.f32 %v1073, %v1079
  %v1087 = vmax.f32 %v1081, -1000000.0
  %v1088 = vmax.f32 %v1082, -1000000.0
  %v1089 = vmax.f32 %v1083, -1000000.0
  %v1090 = vmax.f32 %v1084, -1000000.0
  %v1091 = vmax.f32 %v1085, -1000000.0
  %v1092 = vmax.f32 %v1086, -1000000.0
  %v1093 = vmin.f32 %v1087, 1000000.0
  %v1094 = vmin.f32 %v1088, 1000000.0
  %v1095 = vmin.f32 %v1089, 1000000.0
  %v1096 = vmin.f32 %v1090, 1000000.0
  %v1097 = vmin.f32 %v1091, 1000000.0
  %v1098 = vmin.f32 %v1092, 1000000.0
  %v1099 = vsel %vm258, %v1093, 0.0
  %1100 = vadd.xlane.f32.xlu0 %v1099
  %v1101 = vpop.xlane.xlu0 %1100
  %v1102 = vsel %vm258, %v1094, 0.0
  %1103 = vadd.xlane.f32.xlu0 %v1102
  %v1104 = vpop.xlane.xlu0 %1103
  %v1105 = vsel %vm258, %v1095, 0.0
  %1106 = vadd.xlane.f32.xlu0 %v1105
  %v1107 = vpop.xlane.xlu0 %1106
  %v1108 = vsel %vm258, %v1096, 0.0
  %1109 = vadd.xlane.f32.xlu0 %v1108
  %v1110 = vpop.xlane.xlu0 %1109
  %v1111 = vsel %vm258, %v1097, 0.0
  %1112 = vadd.xlane.f32.xlu0 %v1111
  %v1113 = vpop.xlane.xlu0 %1112
  %v1114 = vsel %vm258, %v1098, 0.0
  %1115 = vadd.xlane.f32.xlu0 %v1114
  %v1116 = vpop.xlane.xlu0 %1115
  %v1117 = vmul.f32 %v1101, %v277
  %v1118 = vmul.f32 %v1104, %v277
  %v1119 = vmul.f32 %v1107, %v277
  %v1120 = vmul.f32 %v1110, %v277
  %v1121 = vmul.f32 %v1113, %v277
  %v1122 = vmul.f32 %v1116, %v277
  %v1123 = vsub.f32 %v1093, %v1117
  %v1124 = vsub.f32 %v1094, %v1118
  %v1125 = vsub.f32 %v1095, %v1119
  %v1126 = vsub.f32 %v1096, %v1120
  %v1127 = vsub.f32 %v1097, %v1121
  %v1128 = vsub.f32 %v1098, %v1122
  %v1129 = vmul.f32 %v1123, %v1123
  %v1130 = vmul.f32 %v1124, %v1124
  %v1131 = vmul.f32 %v1125, %v1125
  %v1132 = vmul.f32 %v1126, %v1126
  %v1133 = vmul.f32 %v1127, %v1127
  %v1134 = vmul.f32 %v1128, %v1128
  %v1135 = vsel %vm258, %v1129, 0.0
  %1136 = vadd.xlane.f32.xlu0 %v1135
  %v1137 = vpop.xlane.xlu0 %1136
  %v1138 = vsel %vm258, %v1130, 0.0
  %1139 = vadd.xlane.f32.xlu0 %v1138
  %v1140 = vpop.xlane.xlu0 %1139
  %v1141 = vsel %vm258, %v1131, 0.0
  %1142 = vadd.xlane.f32.xlu0 %v1141
  %v1143 = vpop.xlane.xlu0 %1142
  %v1144 = vsel %vm258, %v1132, 0.0
  %1145 = vadd.xlane.f32.xlu0 %v1144
  %v1146 = vpop.xlane.xlu0 %1145
  %v1147 = vsel %vm258, %v1133, 0.0
  %1148 = vadd.xlane.f32.xlu0 %v1147
  %v1149 = vpop.xlane.xlu0 %1148
  %v1150 = vsel %vm258, %v1134, 0.0
  %1151 = vadd.xlane.f32.xlu0 %v1150
  %v1152 = vpop.xlane.xlu0 %1151
  %v1153 = vmul.f32 %v1137, %v277
  %v1154 = vmul.f32 %v1140, %v277
  %v1155 = vmul.f32 %v1143, %v277
  %v1156 = vmul.f32 %v1146, %v277
  %v1157 = vmul.f32 %v1149, %v277
  %v1158 = vmul.f32 %v1152, %v277
  %v1159 = vadd.f32 %v1153, 1e-05
  %v1160 = vadd.f32 %v1154, 1e-05
  %v1161 = vadd.f32 %v1155, 1e-05
  %v1162 = vadd.f32 %v1156, 1e-05
  %v1163 = vadd.f32 %v1157, 1e-05
  %v1164 = vadd.f32 %v1158, 1e-05
  %v1165 = vrsqrt.pop %v1159
  %v1166 = vrsqrt.pop %v1160
  %v1167 = vrsqrt.pop %v1161
  %v1168 = vrsqrt.pop %v1162
  %v1169 = vrsqrt.pop %v1163
  %v1170 = vrsqrt.pop %v1164
  %v1171 = vmul.f32 %v1123, %v1165
  %v1172 = vmul.f32 %v1124, %v1166
  %v1173 = vmul.f32 %v1125, %v1167
  %v1174 = vmul.f32 %v1126, %v1168
  %v1175 = vmul.f32 %v1127, %v1169
  %v1176 = vmul.f32 %v1128, %v1170
  %v1177 = vlaneseq
  %v1178 = vshrl.u32 %v1177, 7
  %v1179 = vsub.s32 2, %v1178
  %v1180 = vrot.slane %v75, %v1179
  %v1181 = vmul.f32 %v1171, %v1180
  %v1182 = vmul.f32 %v1172, %v1180
  %v1183 = vmul.f32 %v1173, %v1180
  %v1184 = vmul.f32 %v1174, %v1180
  %v1185 = vmul.f32 %v1175, %v1180
  %v1186 = vmul.f32 %v1176, %v1180
  %v1187 = vlaneseq
  %v1188 = vshrl.u32 %v1187, 7
  %v1189 = vsub.s32 3, %v1188
  %v1190 = vrot.slane %v75, %v1189
  %v1191 = vadd.f32 %v1181, %v1190
  %v1192 = vadd.f32 %v1182, %v1190
  %v1193 = vadd.f32 %v1183, %v1190
  %v1194 = vadd.f32 %v1184, %v1190
  %v1195 = vadd.f32 %v1185, %v1190
  %v1196 = vadd.f32 %v1186, %v1190
  %v1197 = vld [vmem:[%s5] sm:$0xff]
  %v1198 = vld [vmem:[%s5 + $0x8] sm:$0xff]
  %v1199 = vld [vmem:[%s5 + $0x10] sm:$0xff]
  %v1200 = vld [vmem:[%s5 + $0x18] sm:$0xff]
  %v1201 = vld [vmem:[%s5 + $0x20] sm:$0xff]
  %v1202 = vld [vmem:[%s5 + $0x28] sm:$0xff]
  %v1203 = vadd.f32 %v1191, %v1197
  %v1204 = vadd.f32 %v1192, %v1198
  %v1205 = vadd.f32 %v1193, %v1199
  %v1206 = vadd.f32 %v1194, %v1200
  %v1207 = vadd.f32 %v1195, %v1201
  %v1208 = vadd.f32 %v1196, %v1202
  %v1209 = vpack.c.bf16 %v1204, %v1203
  %v1210 = vpack.c.bf16 %v1206, %v1205
  %v1211 = vpack.c.bf16 %v1208, %v1207
  %v1212 = vld [vmem:[%s11] sm:$0xf]
  %v1213 = vld [vmem:[%s11 + $0x4] sm:$0xf]
  %v1214 = vld [vmem:[%s11 + $0x8] sm:$0xf]
  %v1215 = vld [vmem:[%s11 + $0xc] sm:$0xf]
  %v1216 = vld [vmem:[%s12] sm:$0x1]
  %v1218 = vlaneseq
  %v1219 = vshrl.u32 %v1218, 7
  %v1220 = vsub.s32 0, %v1219
  %v1221 = vrot.slane %v1216, %v1220
  %v1227 = vunpack.c.l.b16 %v1212
  %v1228 = vunpack.c.l.b16 %v1213
  %v1229 = vunpack.c.l.b16 %v1214
  %v1230 = vunpack.c.l.b16 %v1215
  %v1231 = vpack.c.b16 %v1228, %v1227
  %v1232 = vpack.c.b16 %v1230, %v1229
  %v1236 = vsel %vm258, %v1209, 0
  %v1239 = vsel %vm258, %v1210, 0
  %v1242 = vsel %vm258, %v1211, 0
  %1244 = vmatprep.subr.bf16.mxu0 0
  %1245 = vmatpush1.bf16.msra.mxu0 %v1231
  %1246 = vmatprep.subr.bf16.mxu0 0
  %1247 = vmatpush1.bf16.msra.mxu0 %v1232
  %1248 = vmatprep.subr.bf16.mxu0 0
  %1249 = vmatpush1.bf16.msra.mxu0 0
  %1250 = vmatprep.subr.bf16.mxu0 0
  %1251 = vmatpush1.bf16.msra.mxu0 0
  %1252 = vmatprep.subr.bf16.mxu0 0
  %1253 = vmatpush1.bf16.msra.mxu0 0
  %1254 = vmatprep.subr.bf16.mxu0 0
  %1255 = vmatpush1.bf16.msra.mxu0 0
  %1256 = vmatprep.subr.bf16.mxu0 0
  %1257 = vmatpush1.bf16.msra.mxu0 0
  %1258 = vmatprep.subr.bf16.mxu0 0
  %1259 = vmatpush1.bf16.msra.mxu0 0
  %1260 = vmatprep.subr.bf16.mxu0 0
  %1261 = vmatpush1.bf16.msra.mxu0 0
  %1262 = vmatprep.subr.bf16.mxu0 0
  %1263 = vmatpush1.bf16.msra.mxu0 0
  %1264 = vmatprep.subr.bf16.mxu0 0
  %1265 = vmatpush1.bf16.msra.mxu0 0
  %1266 = vmatprep.subr.bf16.mxu0 0
  %1267 = vmatpush1.bf16.msra.mxu0 0
  %1268 = vmatprep.subr.bf16.mxu0 0
  %1269 = vmatpush1.bf16.msra.mxu0 0
  %1270 = vmatprep.subr.bf16.mxu0 0
  %1271 = vmatpush1.bf16.msra.mxu0 0
  %1272 = vmatprep.subr.bf16.mxu0 0
  %1273 = vmatpush1.bf16.msra.mxu0 0
  %1274 = vmatprep.subr.bf16.mxu0 0
  %1275 = vmatpush1.bf16.msra.mxu0 0
  %1276 = vmatprep.mubr.bf16.mxu0 0
  %1277 = vmatmul.mubr.bf16.gmra.mrb[0].mxu0 %v1236
  %v1278 = vpop.f32.mrb[0].mxu0
  %v1279 = vadd.f32 %v1221, %v1278
  %v1280 = vpop.f32.mrb[0].mxu0
  %v1281 = vpop.f32.mrb[0].mxu0
  %v1282 = vadd.f32 %v1221, %v1281
  %v1283 = vpop.f32.mrb[0].mxu0
  %1284 = vmatprep.mubr.bf16.mxu0 0
  %1285 = vmatmul.mubr.bf16.gmra.mrb[0].mxu0 %v1239
  %v1286 = vpop.f32.mrb[0].mxu0
  %v1287 = vadd.f32 %v1221, %v1286
  %v1288 = vpop.f32.mrb[0].mxu0
  %v1289 = vpop.f32.mrb[0].mxu0
  %v1290 = vadd.f32 %v1221, %v1289
  %v1291 = vpop.f32.mrb[0].mxu0
  %1292 = vmatprep.mubr.bf16.mxu0 0
  %1293 = vmatmul.mubr.bf16.gmra.mrb[0].mxu0 %v1242
  %v1294 = vpop.f32.mrb[0].mxu0
  %v1295 = vadd.f32 %v1221, %v1294
  %v1296 = vpop.f32.mrb[0].mxu0
  %v1297 = vpop.f32.mrb[0].mxu0
  %v1298 = vadd.f32 %v1221, %v1297
  %v1299 = vpop.f32.mrb[0].mxu0
  %1300 = vdwg.mxu0
  %v1301 = vpack.c.bf16 %v1192, %v1191
  %v1302 = vpack.c.bf16 %v1194, %v1193
  %v1303 = vpack.c.bf16 %v1196, %v1195
  %1304 = vrot.lane.b32.xlu0 %v1231, 64
  %v1305 = vpop.permute.xlu0 %1304
  %1306 = vrot.lane.b32.xlu0 %v1232, 64
  %v1307 = vpop.permute.xlu0 %1306
  %1310 = vrot.lane.b32.xlu0 %v1221, 64
  %v1311 = vpop.permute.xlu0 %1310
  %v1314 = vsel %vm258, %v1301, 0
  %v1317 = vsel %vm258, %v1302, 0
  %v1320 = vsel %vm258, %v1303, 0
  %1322 = vmatprep.subr.bf16.mxu0 0
  %1323 = vmatpush1.bf16.msra.mxu0 %v1305
  %1324 = vmatprep.subr.bf16.mxu0 0
  %1325 = vmatpush1.bf16.msra.mxu0 %v1307
  %1326 = vmatprep.subr.bf16.mxu0 0
  %1327 = vmatpush1.bf16.msra.mxu0 0
  %1328 = vmatprep.subr.bf16.mxu0 0
  %1329 = vmatpush1.bf16.msra.mxu0 0
  %1330 = vmatprep.subr.bf16.mxu0 0
  %1331 = vmatpush1.bf16.msra.mxu0 0
  %1332 = vmatprep.subr.bf16.mxu0 0
  %1333 = vmatpush1.bf16.msra.mxu0 0
  %1334 = vmatprep.subr.bf16.mxu0 0
  %1335 = vmatpush1.bf16.msra.mxu0 0
  %1336 = vmatprep.subr.bf16.mxu0 0
  %1337 = vmatpush1.bf16.msra.mxu0 0
  %1338 = vmatprep.subr.bf16.mxu0 0
  %1339 = vmatpush1.bf16.msra.mxu0 0
  %1340 = vmatprep.subr.bf16.mxu0 0
  %1341 = vmatpush1.bf16.msra.mxu0 0
  %1342 = vmatprep.subr.bf16.mxu0 0
  %1343 = vmatpush1.bf16.msra.mxu0 0
  %1344 = vmatprep.subr.bf16.mxu0 0
  %1345 = vmatpush1.bf16.msra.mxu0 0
  %1346 = vmatprep.subr.bf16.mxu0 0
  %1347 = vmatpush1.bf16.msra.mxu0 0
  %1348 = vmatprep.subr.bf16.mxu0 0
  %1349 = vmatpush1.bf16.msra.mxu0 0
  %1350 = vmatprep.subr.bf16.mxu0 0
  %1351 = vmatpush1.bf16.msra.mxu0 0
  %1352 = vmatprep.subr.bf16.mxu0 0
  %1353 = vmatpush1.bf16.msra.mxu0 0
  %1354 = vmatprep.mubr.bf16.mxu0 0
  %1355 = vmatmul.mubr.bf16.gmra.mrb[0].mxu0 %v1314
  %v1356 = vpop.f32.mrb[0].mxu0
  %v1357 = vadd.f32 %v1311, %v1356
  %v1358 = vpop.f32.mrb[0].mxu0
  %v1359 = vpop.f32.mrb[0].mxu0
  %v1360 = vadd.f32 %v1311, %v1359
  %v1361 = vpop.f32.mrb[0].mxu0
  %1362 = vmatprep.mubr.bf16.mxu0 0
  %1363 = vmatmul.mubr.bf16.gmra.mrb[0].mxu0 %v1317
  %v1364 = vpop.f32.mrb[0].mxu0
  %v1365 = vadd.f32 %v1311, %v1364
  %v1366 = vpop.f32.mrb[0].mxu0
  %v1367 = vpop.f32.mrb[0].mxu0
  %v1368 = vadd.f32 %v1311, %v1367
  %v1369 = vpop.f32.mrb[0].mxu0
  %1370 = vmatprep.mubr.bf16.mxu0 0
  %1371 = vmatmul.mubr.bf16.gmra.mrb[0].mxu0 %v1320
  %v1372 = vpop.f32.mrb[0].mxu0
  %v1373 = vadd.f32 %v1311, %v1372
  %v1374 = vpop.f32.mrb[0].mxu0
  %v1375 = vpop.f32.mrb[0].mxu0
  %v1376 = vadd.f32 %v1311, %v1375
  %v1377 = vpop.f32.mrb[0].mxu0
  %1378 = vdwg.mxu0
  %v1379 = vld [vmem:[%s13] sm:$0xf]
  %v1380 = vld [vmem:[%s13 + $0x4] sm:$0xf]
  %v1381 = vld [vmem:[%s13 + $0x8] sm:$0xf]
  %v1382 = vld [vmem:[%s13 + $0xc] sm:$0xf]
  %v1383 = vpack.c.bf16 %v1282, %v1279
  %v1384 = vpack.c.bf16 %v1290, %v1287
  %v1385 = vpack.c.bf16 %v1298, %v1295
  %v1386 = vpack.c.bf16 %v1360, %v1357
  %v1387 = vpack.c.bf16 %v1368, %v1365
  %v1388 = vpack.c.bf16 %v1376, %v1373
  %1392 = vrot.lane.b32.xlu0 %v1383, 96
  %v1393 = vpop.permute.xlu0 %1392
  %1394 = vrot.lane.b32.xlu0 %v1384, 96
  %v1395 = vpop.permute.xlu0 %1394
  %1396 = vrot.lane.b32.xlu0 %v1385, 96
  %v1397 = vpop.permute.xlu0 %1396
  %v1399 = vsel %vm466, %v1383, 0
  %v1402 = vsel %vm466, %v1384, 0
  %v1405 = vsel %vm466, %v1385, 0
  %v1408 = vsel %vm466, %v1393, 0
  %v1411 = vsel %vm466, %v1395, 0
  %v1414 = vsel %vm466, %v1397, 0
  %1416 = vmatprep.subr.bf16.mxu0 0
  %1417 = vmatpush1.bf16.xpose.msra.mxu0 %v1408
  %1418 = vmatprep.subr.bf16.mxu0 0
  %1419 = vmatpush1.bf16.xpose.msra.mxu0 %v1411
  %1420 = vmatprep.subr.bf16.mxu0 0
  %1421 = vmatpush1.bf16.xpose.msra.mxu0 %v1414
  %1422 = vmatprep.subr.bf16.mxu0 0
  %1423 = vmatpush1.bf16.xpose.msra.mxu0 0
  %1424 = vmatprep.subr.bf16.mxu0 0
  %1425 = vmatpush1.bf16.xpose.msra.mxu0 0
  %1426 = vmatprep.subr.bf16.mxu0 0
  %1427 = vmatpush1.bf16.xpose.msra.mxu0 0
  %1428 = vmatprep.subr.bf16.mxu0 0
  %1429 = vmatpush1.bf16.xpose.msra.mxu0 0
  %1430 = vmatprep.subr.bf16.mxu0 0
  %1431 = vmatpush1.bf16.xpose.msra.mxu0 0
  %1432 = vmatprep.subr.bf16.mxu0 0
  %1433 = vmatpush1.bf16.xpose.msra.mxu0 0
  %1434 = vmatprep.subr.bf16.mxu0 0
  %1435 = vmatpush1.bf16.xpose.msra.mxu0 0
  %1436 = vmatprep.subr.bf16.mxu0 0
  %1437 = vmatpush1.bf16.xpose.msra.mxu0 0
  %1438 = vmatprep.subr.bf16.mxu0 0
  %1439 = vmatpush1.bf16.xpose.msra.mxu0 0
  %1440 = vmatprep.subr.bf16.mxu0 0
  %1441 = vmatpush1.bf16.xpose.msra.mxu0 0
  %1442 = vmatprep.subr.bf16.mxu0 0
  %1443 = vmatpush1.bf16.xpose.msra.mxu0 0
  %1444 = vmatprep.subr.bf16.mxu0 0
  %1445 = vmatpush1.bf16.xpose.msra.mxu0 0
  %1446 = vmatprep.subr.bf16.mxu0 0
  %1447 = vmatpush1.bf16.xpose.msra.mxu0 0
  %1448 = vmatprep.mubr.bf16.mxu0 0
  %1449 = vmatmul.mubr.bf16.gmra.mrb[0].mxu0 %v1399
  %v1450 = vpop.f32.mrb[0].mxu0
  %v1451 = vadd.f32 %v214, %v1450
  %v1452 = vpop.f32.mrb[0].mxu0
  %v1453 = vpop.f32.mrb[0].mxu0
  %v1454 = vadd.f32 %v215, %v1453
  %v1455 = vpop.f32.mrb[0].mxu0
  %1456 = vmatprep.mubr.bf16.mxu0 0
  %1457 = vmatmul.mubr.bf16.gmra.mrb[0].mxu0 %v1402
  %v1458 = vpop.f32.mrb[0].mxu0
  %v1459 = vadd.f32 %v216, %v1458
  %v1460 = vpop.f32.mrb[0].mxu0
  %v1461 = vpop.f32.mrb[0].mxu0
  %v1462 = vadd.f32 %v217, %v1461
  %v1463 = vpop.f32.mrb[0].mxu0
  %1464 = vmatprep.mubr.bf16.mxu0 0
  %1465 = vmatmul.mubr.bf16.gmra.mrb[0].mxu0 %v1405
  %v1466 = vpop.f32.mrb[0].mxu0
  %v1467 = vadd.f32 %v218, %v1466
  %v1468 = vpop.f32.mrb[0].mxu0
  %v1469 = vpop.f32.mrb[0].mxu0
  %v1470 = vadd.f32 %v219, %v1469
  %v1471 = vpop.f32.mrb[0].mxu0
  %1472 = vdwg.mxu0
  %v1473 = vsel %vm542, %v1451, -inf
  %1474 = vmax.xlane.f32.xlu0 %v1473
  %v1475 = vpop.xlane.xlu0 %1474
  %v1476 = vsel %vm542, %v1454, -inf
  %1477 = vmax.xlane.f32.xlu0 %v1476
  %v1478 = vpop.xlane.xlu0 %1477
  %v1479 = vsel %vm542, %v1459, -inf
  %1480 = vmax.xlane.f32.xlu0 %v1479
  %v1481 = vpop.xlane.xlu0 %1480
  %v1482 = vsel %vm542, %v1462, -inf
  %1483 = vmax.xlane.f32.xlu0 %v1482
  %v1484 = vpop.xlane.xlu0 %1483
  %v1485 = vsel %vm542, %v1467, -inf
  %1486 = vmax.xlane.f32.xlu0 %v1485
  %v1487 = vpop.xlane.xlu0 %1486
  %v1488 = vsel %vm542, %v1470, -inf
  %1489 = vmax.xlane.f32.xlu0 %v1488
  %v1490 = vpop.xlane.xlu0 %1489
  %v1491 = vsub.f32 %v1451, %v1475
  %v1492 = vsub.f32 %v1454, %v1478
  %v1493 = vsub.f32 %v1459, %v1481
  %v1494 = vsub.f32 %v1462, %v1484
  %v1495 = vsub.f32 %v1467, %v1487
  %v1496 = vsub.f32 %v1470, %v1490
  %v1497 = vmul.f32 %v1491, 1.442695
  %v1498 = vpow.pop %v1497
  %v1499 = vmul.f32 %v1492, 1.442695
  %v1500 = vpow.pop %v1499
  %v1501 = vmul.f32 %v1493, 1.442695
  %v1502 = vpow.pop %v1501
  %v1503 = vmul.f32 %v1494, 1.442695
  %v1504 = vpow.pop %v1503
  %v1505 = vmul.f32 %v1495, 1.442695
  %v1506 = vpow.pop %v1505
  %v1507 = vmul.f32 %v1496, 1.442695
  %v1508 = vpow.pop %v1507
  %v1509 = vsel %vm542, %v1498, 0.0
  %1510 = vadd.xlane.f32.xlu0 %v1509
  %v1511 = vpop.xlane.xlu0 %1510
  %v1512 = vsel %vm542, %v1500, 0.0
  %1513 = vadd.xlane.f32.xlu0 %v1512
  %v1514 = vpop.xlane.xlu0 %1513
  %v1515 = vsel %vm542, %v1502, 0.0
  %1516 = vadd.xlane.f32.xlu0 %v1515
  %v1517 = vpop.xlane.xlu0 %1516
  %v1518 = vsel %vm542, %v1504, 0.0
  %1519 = vadd.xlane.f32.xlu0 %v1518
  %v1520 = vpop.xlane.xlu0 %1519
  %v1521 = vsel %vm542, %v1506, 0.0
  %1522 = vadd.xlane.f32.xlu0 %v1521
  %v1523 = vpop.xlane.xlu0 %1522
  %v1524 = vsel %vm542, %v1508, 0.0
  %1525 = vadd.xlane.f32.xlu0 %v1524
  %v1526 = vpop.xlane.xlu0 %1525
  %v1527 = vrcp.pop %v1511
  %v1528 = vrcp.pop %v1514
  %v1529 = vrcp.pop %v1517
  %v1530 = vrcp.pop %v1520
  %v1531 = vrcp.pop %v1523
  %v1532 = vrcp.pop %v1526
  %v1533 = vmul.f32 %v1498, %v1527
  %v1534 = vmul.f32 %v1500, %v1528
  %v1535 = vmul.f32 %v1502, %v1529
  %v1536 = vmul.f32 %v1504, %v1530
  %v1537 = vmul.f32 %v1506, %v1531
  %v1538 = vmul.f32 %v1508, %v1532
  %v1539 = vpack.c.bf16 %v1534, %v1533
  %v1540 = vpack.c.bf16 %v1536, %v1535
  %v1541 = vpack.c.bf16 %v1538, %v1537
  %v1543 = vsel %vm542, %v1539, 0
  %v1546 = vsel %vm542, %v1540, 0
  %v1549 = vsel %vm542, %v1541, 0
  %1551 = vmatprep.subr.bf16.mxu0 0
  %1552 = vmatpush1.bf16.msra.mxu0 %v1386
  %1553 = vmatprep.subr.bf16.mxu0 0
  %1554 = vmatpush1.bf16.msra.mxu0 %v1387
  %1555 = vmatprep.subr.bf16.mxu0 0
  %1556 = vmatpush1.bf16.msra.mxu0 %v1388
  %1557 = vmatprep.subr.bf16.mxu0 0
  %1558 = vmatpush1.bf16.msra.mxu0 0
  %1559 = vmatprep.subr.bf16.mxu0 0
  %1560 = vmatpush1.bf16.msra.mxu0 0
  %1561 = vmatprep.subr.bf16.mxu0 0
  %1562 = vmatpush1.bf16.msra.mxu0 0
  %1563 = vmatprep.subr.bf16.mxu0 0
  %1564 = vmatpush1.bf16.msra.mxu0 0
  %1565 = vmatprep.subr.bf16.mxu0 0
  %1566 = vmatpush1.bf16.msra.mxu0 0
  %1567 = vmatprep.subr.bf16.mxu0 0
  %1568 = vmatpush1.bf16.msra.mxu0 0
  %1569 = vmatprep.subr.bf16.mxu0 0
  %1570 = vmatpush1.bf16.msra.mxu0 0
  %1571 = vmatprep.subr.bf16.mxu0 0
  %1572 = vmatpush1.bf16.msra.mxu0 0
  %1573 = vmatprep.subr.bf16.mxu0 0
  %1574 = vmatpush1.bf16.msra.mxu0 0
  %1575 = vmatprep.subr.bf16.mxu0 0
  %1576 = vmatpush1.bf16.msra.mxu0 0
  %1577 = vmatprep.subr.bf16.mxu0 0
  %1578 = vmatpush1.bf16.msra.mxu0 0
  %1579 = vmatprep.subr.bf16.mxu0 0
  %1580 = vmatpush1.bf16.msra.mxu0 0
  %1581 = vmatprep.subr.bf16.mxu0 0
  %1582 = vmatpush1.bf16.msra.mxu0 0
  %1583 = vmatprep.mubr.bf16.mxu0 0
  %1584 = vmatmul.mubr.bf16.gmra.mrb[0].mxu0 %v1543
  %v1585 = vpop.f32.mrb[0].mxu0
  %v1586 = vadd.f32 0.0, %v1585
  %v1587 = vpop.f32.mrb[0].mxu0
  %v1588 = vpop.f32.mrb[0].mxu0
  %v1589 = vadd.f32 0.0, %v1588
  %v1590 = vpop.f32.mrb[0].mxu0
  %1591 = vmatprep.mubr.bf16.mxu0 0
  %1592 = vmatmul.mubr.bf16.gmra.mrb[0].mxu0 %v1546
  %v1593 = vpop.f32.mrb[0].mxu0
  %v1594 = vadd.f32 0.0, %v1593
  %v1595 = vpop.f32.mrb[0].mxu0
  %v1596 = vpop.f32.mrb[0].mxu0
  %v1597 = vadd.f32 0.0, %v1596
  %v1598 = vpop.f32.mrb[0].mxu0
  %1599 = vmatprep.mubr.bf16.mxu0 0
  %1600 = vmatmul.mubr.bf16.gmra.mrb[0].mxu0 %v1549
  %v1601 = vpop.f32.mrb[0].mxu0
  %v1602 = vadd.f32 0.0, %v1601
  %v1603 = vpop.f32.mrb[0].mxu0
  %v1604 = vpop.f32.mrb[0].mxu0
  %v1605 = vadd.f32 0.0, %v1604
  %v1606 = vpop.f32.mrb[0].mxu0
  %1607 = vdwg.mxu0
  %v1608 = vpack.c.bf16 %v1589, %v1586
  %v1609 = vpack.c.bf16 %v1597, %v1594
  %v1610 = vpack.c.bf16 %v1605, %v1602
  %1611 = vrot.lane.b32.xlu0 %v1383, 112
  %v1612 = vpop.permute.xlu0 %1611
  %1613 = vrot.lane.b32.xlu0 %v1384, 112
  %v1614 = vpop.permute.xlu0 %1613
  %1615 = vrot.lane.b32.xlu0 %v1385, 112
  %v1616 = vpop.permute.xlu0 %1615
  %1617 = vrot.lane.b32.xlu0 %v1383, 80
  %v1618 = vpop.permute.xlu0 %1617
  %1619 = vrot.lane.b32.xlu0 %v1384, 80
  %v1620 = vpop.permute.xlu0 %1619
  %1621 = vrot.lane.b32.xlu0 %v1385, 80
  %v1622 = vpop.permute.xlu0 %1621
  %v1624 = vsel %vm466, %v1612, 0
  %v1627 = vsel %vm466, %v1614, 0
  %v1630 = vsel %vm466, %v1616, 0
  %v1633 = vsel %vm466, %v1618, 0
  %v1636 = vsel %vm466, %v1620, 0
  %v1639 = vsel %vm466, %v1622, 0
  %1641 = vmatprep.subr.bf16.mxu0 0
  %1642 = vmatpush1.bf16.xpose.msra.mxu0 %v1633
  %1643 = vmatprep.subr.bf16.mxu0 0
  %1644 = vmatpush1.bf16.xpose.msra.mxu0 %v1636
  %1645 = vmatprep.subr.bf16.mxu0 0
  %1646 = vmatpush1.bf16.xpose.msra.mxu0 %v1639
  %1647 = vmatprep.subr.bf16.mxu0 0
  %1648 = vmatpush1.bf16.xpose.msra.mxu0 0
  %1649 = vmatprep.subr.bf16.mxu0 0
  %1650 = vmatpush1.bf16.xpose.msra.mxu0 0
  %1651 = vmatprep.subr.bf16.mxu0 0
  %1652 = vmatpush1.bf16.xpose.msra.mxu0 0
  %1653 = vmatprep.subr.bf16.mxu0 0
  %1654 = vmatpush1.bf16.xpose.msra.mxu0 0
  %1655 = vmatprep.subr.bf16.mxu0 0
  %1656 = vmatpush1.bf16.xpose.msra.mxu0 0
  %1657 = vmatprep.subr.bf16.mxu0 0
  %1658 = vmatpush1.bf16.xpose.msra.mxu0 0
  %1659 = vmatprep.subr.bf16.mxu0 0
  %1660 = vmatpush1.bf16.xpose.msra.mxu0 0
  %1661 = vmatprep.subr.bf16.mxu0 0
  %1662 = vmatpush1.bf16.xpose.msra.mxu0 0
  %1663 = vmatprep.subr.bf16.mxu0 0
  %1664 = vmatpush1.bf16.xpose.msra.mxu0 0
  %1665 = vmatprep.subr.bf16.mxu0 0
  %1666 = vmatpush1.bf16.xpose.msra.mxu0 0
  %1667 = vmatprep.subr.bf16.mxu0 0
  %1668 = vmatpush1.bf16.xpose.msra.mxu0 0
  %1669 = vmatprep.subr.bf16.mxu0 0
  %1670 = vmatpush1.bf16.xpose.msra.mxu0 0
  %1671 = vmatprep.subr.bf16.mxu0 0
  %1672 = vmatpush1.bf16.xpose.msra.mxu0 0
  %1673 = vmatprep.mubr.bf16.mxu0 0
  %1674 = vmatmul.mubr.bf16.gmra.mrb[0].mxu0 %v1624
  %v1675 = vpop.f32.mrb[0].mxu0
  %v1676 = vadd.f32 %v214, %v1675
  %v1677 = vpop.f32.mrb[0].mxu0
  %v1678 = vpop.f32.mrb[0].mxu0
  %v1679 = vadd.f32 %v215, %v1678
  %v1680 = vpop.f32.mrb[0].mxu0
  %1681 = vmatprep.mubr.bf16.mxu0 0
  %1682 = vmatmul.mubr.bf16.gmra.mrb[0].mxu0 %v1627
  %v1683 = vpop.f32.mrb[0].mxu0
  %v1684 = vadd.f32 %v216, %v1683
  %v1685 = vpop.f32.mrb[0].mxu0
  %v1686 = vpop.f32.mrb[0].mxu0
  %v1687 = vadd.f32 %v217, %v1686
  %v1688 = vpop.f32.mrb[0].mxu0
  %1689 = vmatprep.mubr.bf16.mxu0 0
  %1690 = vmatmul.mubr.bf16.gmra.mrb[0].mxu0 %v1630
  %v1691 = vpop.f32.mrb[0].mxu0
  %v1692 = vadd.f32 %v218, %v1691
  %v1693 = vpop.f32.mrb[0].mxu0
  %v1694 = vpop.f32.mrb[0].mxu0
  %v1695 = vadd.f32 %v219, %v1694
  %v1696 = vpop.f32.mrb[0].mxu0
  %1697 = vdwg.mxu0
  %v1698 = vsel %vm542, %v1676, -inf
  %1699 = vmax.xlane.f32.xlu0 %v1698
  %v1700 = vpop.xlane.xlu0 %1699
  %v1701 = vsel %vm542, %v1679, -inf
  %1702 = vmax.xlane.f32.xlu0 %v1701
  %v1703 = vpop.xlane.xlu0 %1702
  %v1704 = vsel %vm542, %v1684, -inf
  %1705 = vmax.xlane.f32.xlu0 %v1704
  %v1706 = vpop.xlane.xlu0 %1705
  %v1707 = vsel %vm542, %v1687, -inf
  %1708 = vmax.xlane.f32.xlu0 %v1707
  %v1709 = vpop.xlane.xlu0 %1708
  %v1710 = vsel %vm542, %v1692, -inf
  %1711 = vmax.xlane.f32.xlu0 %v1710
  %v1712 = vpop.xlane.xlu0 %1711
  %v1713 = vsel %vm542, %v1695, -inf
  %1714 = vmax.xlane.f32.xlu0 %v1713
  %v1715 = vpop.xlane.xlu0 %1714
  %v1716 = vsub.f32 %v1676, %v1700
  %v1717 = vsub.f32 %v1679, %v1703
  %v1718 = vsub.f32 %v1684, %v1706
  %v1719 = vsub.f32 %v1687, %v1709
  %v1720 = vsub.f32 %v1692, %v1712
  %v1721 = vsub.f32 %v1695, %v1715
  %v1722 = vmul.f32 %v1716, 1.442695
  %v1723 = vpow.pop %v1722
  %v1724 = vmul.f32 %v1717, 1.442695
  %v1725 = vpow.pop %v1724
  %v1726 = vmul.f32 %v1718, 1.442695
  %v1727 = vpow.pop %v1726
  %v1728 = vmul.f32 %v1719, 1.442695
  %v1729 = vpow.pop %v1728
  %v1730 = vmul.f32 %v1720, 1.442695
  %v1731 = vpow.pop %v1730
  %v1732 = vmul.f32 %v1721, 1.442695
  %v1733 = vpow.pop %v1732
  %v1734 = vsel %vm542, %v1723, 0.0
  %1735 = vadd.xlane.f32.xlu0 %v1734
  %v1736 = vpop.xlane.xlu0 %1735
  %v1737 = vsel %vm542, %v1725, 0.0
  %1738 = vadd.xlane.f32.xlu0 %v1737
  %v1739 = vpop.xlane.xlu0 %1738
  %v1740 = vsel %vm542, %v1727, 0.0
  %1741 = vadd.xlane.f32.xlu0 %v1740
  %v1742 = vpop.xlane.xlu0 %1741
  %v1743 = vsel %vm542, %v1729, 0.0
  %1744 = vadd.xlane.f32.xlu0 %v1743
  %v1745 = vpop.xlane.xlu0 %1744
  %v1746 = vsel %vm542, %v1731, 0.0
  %1747 = vadd.xlane.f32.xlu0 %v1746
  %v1748 = vpop.xlane.xlu0 %1747
  %v1749 = vsel %vm542, %v1733, 0.0
  %1750 = vadd.xlane.f32.xlu0 %v1749
  %v1751 = vpop.xlane.xlu0 %1750
  %v1752 = vrcp.pop %v1736
  %v1753 = vrcp.pop %v1739
  %v1754 = vrcp.pop %v1742
  %v1755 = vrcp.pop %v1745
  %v1756 = vrcp.pop %v1748
  %v1757 = vrcp.pop %v1751
  %v1758 = vmul.f32 %v1723, %v1752
  %v1759 = vmul.f32 %v1725, %v1753
  %v1760 = vmul.f32 %v1727, %v1754
  %v1761 = vmul.f32 %v1729, %v1755
  %v1762 = vmul.f32 %v1731, %v1756
  %v1763 = vmul.f32 %v1733, %v1757
  %v1764 = vpack.c.bf16 %v1759, %v1758
  %v1765 = vpack.c.bf16 %v1761, %v1760
  %v1766 = vpack.c.bf16 %v1763, %v1762
  %1770 = vrot.lane.b32.xlu0 %v1386, 112
  %v1771 = vpop.permute.xlu0 %1770
  %1772 = vrot.lane.b32.xlu0 %v1387, 112
  %v1773 = vpop.permute.xlu0 %1772
  %1774 = vrot.lane.b32.xlu0 %v1388, 112
  %v1775 = vpop.permute.xlu0 %1774
  %v1780 = vsel %vm542, %v1764, 0
  %v1783 = vsel %vm542, %v1765, 0
  %v1786 = vsel %vm542, %v1766, 0
  %1788 = vmatprep.subr.bf16.mxu0 0
  %1789 = vmatpush1.bf16.msra.mxu0 %v1771
  %1790 = vmatprep.subr.bf16.mxu0 0
  %1791 = vmatpush1.bf16.msra.mxu0 %v1773
  %1792 = vmatprep.subr.bf16.mxu0 0
  %1793 = vmatpush1.bf16.msra.mxu0 %v1775
  %1794 = vmatprep.subr.bf16.mxu0 0
  %1795 = vmatpush1.bf16.msra.mxu0 0
  %1796 = vmatprep.subr.bf16.mxu0 0
  %1797 = vmatpush1.bf16.msra.mxu0 0
  %1798 = vmatprep.subr.bf16.mxu0 0
  %1799 = vmatpush1.bf16.msra.mxu0 0
  %1800 = vmatprep.subr.bf16.mxu0 0
  %1801 = vmatpush1.bf16.msra.mxu0 0
  %1802 = vmatprep.subr.bf16.mxu0 0
  %1803 = vmatpush1.bf16.msra.mxu0 0
  %1804 = vmatprep.subr.bf16.mxu0 0
  %1805 = vmatpush1.bf16.msra.mxu0 0
  %1806 = vmatprep.subr.bf16.mxu0 0
  %1807 = vmatpush1.bf16.msra.mxu0 0
  %1808 = vmatprep.subr.bf16.mxu0 0
  %1809 = vmatpush1.bf16.msra.mxu0 0
  %1810 = vmatprep.subr.bf16.mxu0 0
  %1811 = vmatpush1.bf16.msra.mxu0 0
  %1812 = vmatprep.subr.bf16.mxu0 0
  %1813 = vmatpush1.bf16.msra.mxu0 0
  %1814 = vmatprep.subr.bf16.mxu0 0
  %1815 = vmatpush1.bf16.msra.mxu0 0
  %1816 = vmatprep.subr.bf16.mxu0 0
  %1817 = vmatpush1.bf16.msra.mxu0 0
  %1818 = vmatprep.subr.bf16.mxu0 0
  %1819 = vmatpush1.bf16.msra.mxu0 0
  %1820 = vmatprep.mubr.bf16.mxu0 0
  %1821 = vmatmul.mubr.bf16.gmra.mrb[0].mxu0 %v1780
  %v1822 = vpop.f32.mrb[0].mxu0
  %v1823 = vadd.f32 0.0, %v1822
  %v1824 = vpop.f32.mrb[0].mxu0
  %v1825 = vpop.f32.mrb[0].mxu0
  %v1826 = vadd.f32 0.0, %v1825
  %v1827 = vpop.f32.mrb[0].mxu0
  %1828 = vmatprep.mubr.bf16.mxu0 0
  %1829 = vmatmul.mubr.bf16.gmra.mrb[0].mxu0 %v1783
  %v1830 = vpop.f32.mrb[0].mxu0
  %v1831 = vadd.f32 0.0, %v1830
  %v1832 = vpop.f32.mrb[0].mxu0
  %v1833 = vpop.f32.mrb[0].mxu0
  %v1834 = vadd.f32 0.0, %v1833
  %v1835 = vpop.f32.mrb[0].mxu0
  %1836 = vmatprep.mubr.bf16.mxu0 0
  %1837 = vmatmul.mubr.bf16.gmra.mrb[0].mxu0 %v1786
  %v1838 = vpop.f32.mrb[0].mxu0
  %v1839 = vadd.f32 0.0, %v1838
  %v1840 = vpop.f32.mrb[0].mxu0
  %v1841 = vpop.f32.mrb[0].mxu0
  %v1842 = vadd.f32 0.0, %v1841
  %v1843 = vpop.f32.mrb[0].mxu0
  %1844 = vdwg.mxu0
  %v1845 = vpack.c.bf16 %v1826, %v1823
  %v1846 = vpack.c.bf16 %v1834, %v1831
  %v1847 = vpack.c.bf16 %v1842, %v1839
  %v1850 = vunpack.c.l.b16 %v1381
  %v1851 = vunpack.c.l.b16 %v1382
  %v1852 = vpack.c.b16 %v1851, %v1850
  %v1855 = vsel %vm466, %v1845, 0
  %v1858 = vsel %vm466, %v1846, 0
  %v1861 = vsel %vm466, %v1847, 0
  %1863 = vmatprep.subr.bf16.mxu0 0
  %1864 = vmatpush1.bf16.msra.mxu0 %v1852
  %1865 = vmatprep.subr.bf16.mxu0 0
  %1866 = vmatpush1.bf16.msra.mxu0 0
  %1867 = vmatprep.subr.bf16.mxu0 0
  %1868 = vmatpush1.bf16.msra.mxu0 0
  %1869 = vmatprep.subr.bf16.mxu0 0
  %1870 = vmatpush1.bf16.msra.mxu0 0
  %1871 = vmatprep.subr.bf16.mxu0 0
  %1872 = vmatpush1.bf16.msra.mxu0 0
  %1873 = vmatprep.subr.bf16.mxu0 0
  %1874 = vmatpush1.bf16.msra.mxu0 0
  %1875 = vmatprep.subr.bf16.mxu0 0
  %1876 = vmatpush1.bf16.msra.mxu0 0
  %1877 = vmatprep.subr.bf16.mxu0 0
  %1878 = vmatpush1.bf16.msra.mxu0 0
  %1879 = vmatprep.subr.bf16.mxu0 0
  %1880 = vmatpush1.bf16.msra.mxu0 0
  %1881 = vmatprep.subr.bf16.mxu0 0
  %1882 = vmatpush1.bf16.msra.mxu0 0
  %1883 = vmatprep.subr.bf16.mxu0 0
  %1884 = vmatpush1.bf16.msra.mxu0 0
  %1885 = vmatprep.subr.bf16.mxu0 0
  %1886 = vmatpush1.bf16.msra.mxu0 0
  %1887 = vmatprep.subr.bf16.mxu0 0
  %1888 = vmatpush1.bf16.msra.mxu0 0
  %1889 = vmatprep.subr.bf16.mxu0 0
  %1890 = vmatpush1.bf16.msra.mxu0 0
  %1891 = vmatprep.subr.bf16.mxu0 0
  %1892 = vmatpush1.bf16.msra.mxu0 0
  %1893 = vmatprep.subr.bf16.mxu0 0
  %1894 = vmatpush1.bf16.msra.mxu0 0
  %1895 = vmatprep.mubr.bf16.mxu0 0
  %1896 = vmatmul.mubr.bf16.gmra.mrb[0].mxu0 %v1855
  %v1897 = vpop.f32.mrb[0].mxu0
  %v1898 = vadd.f32 0.0, %v1897
  %v1899 = vpop.f32.mrb[0].mxu0
  %v1900 = vpop.f32.mrb[0].mxu0
  %v1901 = vadd.f32 0.0, %v1900
  %v1902 = vpop.f32.mrb[0].mxu0
  %1903 = vmatprep.mubr.bf16.mxu0 0
  %1904 = vmatmul.mubr.bf16.gmra.mrb[0].mxu0 %v1858
  %v1905 = vpop.f32.mrb[0].mxu0
  %v1906 = vadd.f32 0.0, %v1905
  %v1907 = vpop.f32.mrb[0].mxu0
  %v1908 = vpop.f32.mrb[0].mxu0
  %v1909 = vadd.f32 0.0, %v1908
  %v1910 = vpop.f32.mrb[0].mxu0
  %1911 = vmatprep.mubr.bf16.mxu0 0
  %1912 = vmatmul.mubr.bf16.gmra.mrb[0].mxu0 %v1861
  %v1913 = vpop.f32.mrb[0].mxu0
  %v1914 = vadd.f32 0.0, %v1913
  %v1915 = vpop.f32.mrb[0].mxu0
  %v1916 = vpop.f32.mrb[0].mxu0
  %v1917 = vadd.f32 0.0, %v1916
  %v1918 = vpop.f32.mrb[0].mxu0
  %1919 = vdwg.mxu0
  %v1922 = vunpack.c.l.b16 %v1379
  %v1923 = vunpack.c.l.b16 %v1380
  %v1924 = vpack.c.b16 %v1923, %v1922
  %v1927 = vsel %vm466, %v1608, 0
  %v1930 = vsel %vm466, %v1609, 0
  %v1933 = vsel %vm466, %v1610, 0
  %1935 = vmatprep.subr.bf16.mxu0 0
  %1936 = vmatpush1.bf16.msra.mxu0 %v1924
  %1937 = vmatprep.subr.bf16.mxu0 0
  %1938 = vmatpush1.bf16.msra.mxu0 0
  %1939 = vmatprep.subr.bf16.mxu0 0
  %1940 = vmatpush1.bf16.msra.mxu0 0
  %1941 = vmatprep.subr.bf16.mxu0 0
  %1942 = vmatpush1.bf16.msra.mxu0 0
  %1943 = vmatprep.subr.bf16.mxu0 0
  %1944 = vmatpush1.bf16.msra.mxu0 0
  %1945 = vmatprep.subr.bf16.mxu0 0
  %1946 = vmatpush1.bf16.msra.mxu0 0
  %1947 = vmatprep.subr.bf16.mxu0 0
  %1948 = vmatpush1.bf16.msra.mxu0 0
  %1949 = vmatprep.subr.bf16.mxu0 0
  %1950 = vmatpush1.bf16.msra.mxu0 0
  %1951 = vmatprep.subr.bf16.mxu0 0
  %1952 = vmatpush1.bf16.msra.mxu0 0
  %1953 = vmatprep.subr.bf16.mxu0 0
  %1954 = vmatpush1.bf16.msra.mxu0 0
  %1955 = vmatprep.subr.bf16.mxu0 0
  %1956 = vmatpush1.bf16.msra.mxu0 0
  %1957 = vmatprep.subr.bf16.mxu0 0
  %1958 = vmatpush1.bf16.msra.mxu0 0
  %1959 = vmatprep.subr.bf16.mxu0 0
  %1960 = vmatpush1.bf16.msra.mxu0 0
  %1961 = vmatprep.subr.bf16.mxu0 0
  %1962 = vmatpush1.bf16.msra.mxu0 0
  %1963 = vmatprep.subr.bf16.mxu0 0
  %1964 = vmatpush1.bf16.msra.mxu0 0
  %1965 = vmatprep.subr.bf16.mxu0 0
  %1966 = vmatpush1.bf16.msra.mxu0 0
  %1967 = vmatprep.mubr.bf16.mxu0 0
  %1968 = vmatmul.mubr.bf16.gmra.mrb[0].mxu0 %v1927
  %v1969 = vpop.f32.mrb[0].mxu0
  %v1970 = vadd.f32 %v1898, %v1969
  %v1971 = vpop.f32.mrb[0].mxu0
  %v1972 = vpop.f32.mrb[0].mxu0
  %v1973 = vadd.f32 %v1901, %v1972
  %v1974 = vpop.f32.mrb[0].mxu0
  %1975 = vmatprep.mubr.bf16.mxu0 0
  %1976 = vmatmul.mubr.bf16.gmra.mrb[0].mxu0 %v1930
  %v1977 = vpop.f32.mrb[0].mxu0
  %v1978 = vadd.f32 %v1906, %v1977
  %v1979 = vpop.f32.mrb[0].mxu0
  %v1980 = vpop.f32.mrb[0].mxu0
  %v1981 = vadd.f32 %v1909, %v1980
  %v1982 = vpop.f32.mrb[0].mxu0
  %1983 = vmatprep.mubr.bf16.mxu0 0
  %1984 = vmatmul.mubr.bf16.gmra.mrb[0].mxu0 %v1933
  %v1985 = vpop.f32.mrb[0].mxu0
  %v1986 = vadd.f32 %v1914, %v1985
  %v1987 = vpop.f32.mrb[0].mxu0
  %v1988 = vpop.f32.mrb[0].mxu0
  %v1989 = vadd.f32 %v1917, %v1988
  %v1990 = vpop.f32.mrb[0].mxu0
  %1991 = vdwg.mxu0
  %v1992 = vld [vmem:[%s14] sm:$0x1]
  %v1994 = vlaneseq
  %v1995 = vshrl.u32 %v1994, 7
  %v1996 = vsub.s32 0, %v1995
  %v1997 = vrot.slane %v1992, %v1996
  %v1999 = vadd.f32 %v1970, %v1997
  %v2000 = vadd.f32 %v1973, %v1997
  %v2001 = vadd.f32 %v1978, %v1997
  %v2002 = vadd.f32 %v1981, %v1997
  %v2003 = vadd.f32 %v1986, %v1997
  %v2004 = vadd.f32 %v1989, %v1997
  %v2005 = vadd.f32 %v1093, %v1999
  %v2006 = vadd.f32 %v1094, %v2000
  %v2007 = vadd.f32 %v1095, %v2001
  %v2008 = vadd.f32 %v1096, %v2002
  %v2009 = vadd.f32 %v1097, %v2003
  %v2010 = vadd.f32 %v1098, %v2004
  %2011 = vset.pattern.permute.xlu0 3
  %2012 = vperm.xlu0 %2011, %v76
  %v2013 = vpop.permute.xlu0 %2012
  %2015 = vset.pattern.permute.xlu0 3
  %2016 = vperm.xlu0 %2015, %v77
  %v2017 = vpop.permute.xlu0 %2016
  %2019 = vset.pattern.permute.xlu0 3
  %2020 = vperm.xlu0 %2019, %v78
  %v2021 = vpop.permute.xlu0 %2020
  %2023 = vset.pattern.permute.xlu0 3
  %2024 = vperm.xlu0 %2023, %v79
  %v2025 = vpop.permute.xlu0 %2024
  %2027 = vset.pattern.permute.xlu0 3
  %2028 = vperm.xlu0 %2027, %v80
  %v2029 = vpop.permute.xlu0 %2028
  %2031 = vset.pattern.permute.xlu0 3
  %2032 = vperm.xlu0 %2031, %v81
  %v2033 = vpop.permute.xlu0 %2032
  %v2035 = vmul.f32 %v2013, %v2005
  %v2036 = vmul.f32 %v2017, %v2006
  %v2037 = vmul.f32 %v2021, %v2007
  %v2038 = vmul.f32 %v2025, %v2008
  %v2039 = vmul.f32 %v2029, %v2009
  %v2040 = vmul.f32 %v2033, %v2010
  %v2041 = vsel %vm258, %v2035, 0.0
  %2042 = vadd.xlane.f32.xlu0 %v2041
  %v2043 = vpop.xlane.xlu0 %2042
  %v2044 = vsel %vm258, %v2036, 0.0
  %2045 = vadd.xlane.f32.xlu0 %v2044
  %v2046 = vpop.xlane.xlu0 %2045
  %v2047 = vsel %vm258, %v2037, 0.0
  %2048 = vadd.xlane.f32.xlu0 %v2047
  %v2049 = vpop.xlane.xlu0 %2048
  %v2050 = vsel %vm258, %v2038, 0.0
  %2051 = vadd.xlane.f32.xlu0 %v2050
  %v2052 = vpop.xlane.xlu0 %2051
  %v2053 = vsel %vm258, %v2039, 0.0
  %2054 = vadd.xlane.f32.xlu0 %v2053
  %v2055 = vpop.xlane.xlu0 %2054
  %v2056 = vsel %vm258, %v2040, 0.0
  %2057 = vadd.xlane.f32.xlu0 %v2056
  %v2058 = vpop.xlane.xlu0 %2057
  %v2059 = vmul.f32 %v2043, %v277
  %v2060 = vmul.f32 %v2046, %v277
  %v2061 = vmul.f32 %v2049, %v277
  %v2062 = vmul.f32 %v2052, %v277
  %v2063 = vmul.f32 %v2055, %v277
  %v2064 = vmul.f32 %v2058, %v277
  %v2065 = vsub.f32 %v2035, %v2059
  %v2066 = vsub.f32 %v2036, %v2060
  %v2067 = vsub.f32 %v2037, %v2061
  %v2068 = vsub.f32 %v2038, %v2062
  %v2069 = vsub.f32 %v2039, %v2063
  %v2070 = vsub.f32 %v2040, %v2064
  %v2071 = vmul.f32 %v2065, %v2065
  %v2072 = vmul.f32 %v2066, %v2066
  %v2073 = vmul.f32 %v2067, %v2067
  %v2074 = vmul.f32 %v2068, %v2068
  %v2075 = vmul.f32 %v2069, %v2069
  %v2076 = vmul.f32 %v2070, %v2070
  %v2077 = vsel %vm258, %v2071, 0.0
  %2078 = vadd.xlane.f32.xlu0 %v2077
  %v2079 = vpop.xlane.xlu0 %2078
  %v2080 = vsel %vm258, %v2072, 0.0
  %2081 = vadd.xlane.f32.xlu0 %v2080
  %v2082 = vpop.xlane.xlu0 %2081
  %v2083 = vsel %vm258, %v2073, 0.0
  %2084 = vadd.xlane.f32.xlu0 %v2083
  %v2085 = vpop.xlane.xlu0 %2084
  %v2086 = vsel %vm258, %v2074, 0.0
  %2087 = vadd.xlane.f32.xlu0 %v2086
  %v2088 = vpop.xlane.xlu0 %2087
  %v2089 = vsel %vm258, %v2075, 0.0
  %2090 = vadd.xlane.f32.xlu0 %v2089
  %v2091 = vpop.xlane.xlu0 %2090
  %v2092 = vsel %vm258, %v2076, 0.0
  %2093 = vadd.xlane.f32.xlu0 %v2092
  %v2094 = vpop.xlane.xlu0 %2093
  %v2095 = vmul.f32 %v2079, %v277
  %v2096 = vmul.f32 %v2082, %v277
  %v2097 = vmul.f32 %v2085, %v277
  %v2098 = vmul.f32 %v2088, %v277
  %v2099 = vmul.f32 %v2091, %v277
  %v2100 = vmul.f32 %v2094, %v277
  %v2101 = vadd.f32 %v2095, 1e-05
  %v2102 = vadd.f32 %v2096, 1e-05
  %v2103 = vadd.f32 %v2097, 1e-05
  %v2104 = vadd.f32 %v2098, 1e-05
  %v2105 = vadd.f32 %v2099, 1e-05
  %v2106 = vadd.f32 %v2100, 1e-05
  %v2107 = vrsqrt.pop %v2101
  %v2108 = vrsqrt.pop %v2102
  %v2109 = vrsqrt.pop %v2103
  %v2110 = vrsqrt.pop %v2104
  %v2111 = vrsqrt.pop %v2105
  %v2112 = vrsqrt.pop %v2106
  %v2113 = vmul.f32 %v2065, %v2107
  %v2114 = vmul.f32 %v2066, %v2108
  %v2115 = vmul.f32 %v2067, %v2109
  %v2116 = vmul.f32 %v2068, %v2110
  %v2117 = vmul.f32 %v2069, %v2111
  %v2118 = vmul.f32 %v2070, %v2112
  %v2119 = vlaneseq
  %v2120 = vshrl.u32 %v2119, 7
  %v2121 = vsub.s32 4, %v2120
  %v2122 = vrot.slane %v75, %v2121
  %v2123 = vmul.f32 %v2113, %v2122
  %v2124 = vmul.f32 %v2114, %v2122
  %v2125 = vmul.f32 %v2115, %v2122
  %v2126 = vmul.f32 %v2116, %v2122
  %v2127 = vmul.f32 %v2117, %v2122
  %v2128 = vmul.f32 %v2118, %v2122
  %v2129 = vlaneseq
  %v2130 = vshrl.u32 %v2129, 7
  %v2131 = vsub.s32 5, %v2130
  %v2132 = vrot.slane %v75, %v2131
  %v2133 = vadd.f32 %v2123, %v2132
  %v2134 = vadd.f32 %v2124, %v2132
  %v2135 = vadd.f32 %v2125, %v2132
  %v2136 = vadd.f32 %v2126, %v2132
  %v2137 = vadd.f32 %v2127, %v2132
  %v2138 = vadd.f32 %v2128, %v2132
  %v2139 = vld [vmem:[%s15] sm:$0xf]
  %v2140 = vld [vmem:[%s15 + $0x4] sm:$0xf]
  %v2141 = vld [vmem:[%s15 + $0x8] sm:$0xf]
  %v2142 = vld [vmem:[%s15 + $0xc] sm:$0xf]
  %v2143 = vld [vmem:[%s16] sm:$0x1]
  %v2144 = vpack.c.bf16 %v2134, %v2133
  %v2145 = vpack.c.bf16 %v2136, %v2135
  %v2146 = vpack.c.bf16 %v2138, %v2137
  %v2148 = vlaneseq
  %v2149 = vshrl.u32 %v2148, 7
  %v2150 = vsub.s32 0, %v2149
  %v2151 = vrot.slane %v2143, %v2150
  %v2157 = vunpack.c.l.b16 %v2139
  %v2158 = vunpack.c.l.b16 %v2140
  %v2159 = vunpack.c.l.b16 %v2141
  %v2160 = vunpack.c.l.b16 %v2142
  %v2161 = vpack.c.b16 %v2158, %v2157
  %v2162 = vpack.c.b16 %v2160, %v2159
  %v2166 = vsel %vm258, %v2144, 0
  %v2169 = vsel %vm258, %v2145, 0
  %v2172 = vsel %vm258, %v2146, 0
  %2174 = vmatprep.subr.bf16.mxu0 0
  %2175 = vmatpush1.bf16.msra.mxu0 %v2161
  %2176 = vmatprep.subr.bf16.mxu0 0
  %2177 = vmatpush1.bf16.msra.mxu0 %v2162
  %2178 = vmatprep.subr.bf16.mxu0 0
  %2179 = vmatpush1.bf16.msra.mxu0 0
  %2180 = vmatprep.subr.bf16.mxu0 0
  %2181 = vmatpush1.bf16.msra.mxu0 0
  %2182 = vmatprep.subr.bf16.mxu0 0
  %2183 = vmatpush1.bf16.msra.mxu0 0
  %2184 = vmatprep.subr.bf16.mxu0 0
  %2185 = vmatpush1.bf16.msra.mxu0 0
  %2186 = vmatprep.subr.bf16.mxu0 0
  %2187 = vmatpush1.bf16.msra.mxu0 0
  %2188 = vmatprep.subr.bf16.mxu0 0
  %2189 = vmatpush1.bf16.msra.mxu0 0
  %2190 = vmatprep.subr.bf16.mxu0 0
  %2191 = vmatpush1.bf16.msra.mxu0 0
  %2192 = vmatprep.subr.bf16.mxu0 0
  %2193 = vmatpush1.bf16.msra.mxu0 0
  %2194 = vmatprep.subr.bf16.mxu0 0
  %2195 = vmatpush1.bf16.msra.mxu0 0
  %2196 = vmatprep.subr.bf16.mxu0 0
  %2197 = vmatpush1.bf16.msra.mxu0 0
  %2198 = vmatprep.subr.bf16.mxu0 0
  %2199 = vmatpush1.bf16.msra.mxu0 0
  %2200 = vmatprep.subr.bf16.mxu0 0
  %2201 = vmatpush1.bf16.msra.mxu0 0
  %2202 = vmatprep.subr.bf16.mxu0 0
  %2203 = vmatpush1.bf16.msra.mxu0 0
  %2204 = vmatprep.subr.bf16.mxu0 0
  %2205 = vmatpush1.bf16.msra.mxu0 0
  %2206 = vmatprep.mubr.bf16.mxu0 0
  %2207 = vmatmul.mubr.bf16.gmra.mrb[0].mxu0 %v2166
  %v2208 = vpop.f32.mrb[0].mxu0
  %v2209 = vadd.f32 %v2151, %v2208
  %v2210 = vpop.f32.mrb[0].mxu0
  %v2211 = vpop.f32.mrb[0].mxu0
  %v2212 = vadd.f32 %v2151, %v2211
  %v2213 = vpop.f32.mrb[0].mxu0
  %2214 = vmatprep.mubr.bf16.mxu0 0
  %2215 = vmatmul.mubr.bf16.gmra.mrb[0].mxu0 %v2169
  %v2216 = vpop.f32.mrb[0].mxu0
  %v2217 = vadd.f32 %v2151, %v2216
  %v2218 = vpop.f32.mrb[0].mxu0
  %v2219 = vpop.f32.mrb[0].mxu0
  %v2220 = vadd.f32 %v2151, %v2219
  %v2221 = vpop.f32.mrb[0].mxu0
  %2222 = vmatprep.mubr.bf16.mxu0 0
  %2223 = vmatmul.mubr.bf16.gmra.mrb[0].mxu0 %v2172
  %v2224 = vpop.f32.mrb[0].mxu0
  %v2225 = vadd.f32 %v2151, %v2224
  %v2226 = vpop.f32.mrb[0].mxu0
  %v2227 = vpop.f32.mrb[0].mxu0
  %v2228 = vadd.f32 %v2151, %v2227
  %v2229 = vpop.f32.mrb[0].mxu0
  %2230 = vdwg.mxu0
  %v2231 = vld [vmem:[%s1] sm:$0xff]
  %v2232 = vld [vmem:[%s1 + $0x8] sm:$0xff]
  %v2233 = vpack.c.bf16 %v2232, %v2231
  %2234 = vrot.lane.b32.xlu0 %v2161, 96
  %v2235 = vpop.permute.xlu0 %2234
  %2236 = vrot.lane.b32.xlu0 %v2162, 96
  %v2237 = vpop.permute.xlu0 %2236
  %2240 = vrot.lane.b32.xlu0 %v2151, 96
  %v2241 = vpop.permute.xlu0 %2240
  %v2244 = vsel %vm258, %v2233, 0
  %2246 = vmatprep.subr.bf16.mxu0 0
  %2247 = vmatpush1.bf16.msra.mxu0 %v2235
  %2248 = vmatprep.subr.bf16.mxu0 0
  %2249 = vmatpush1.bf16.msra.mxu0 %v2237
  %2250 = vmatprep.subr.bf16.mxu0 0
  %2251 = vmatpush1.bf16.msra.mxu0 0
  %2252 = vmatprep.subr.bf16.mxu0 0
  %2253 = vmatpush1.bf16.msra.mxu0 0
  %2254 = vmatprep.subr.bf16.mxu0 0
  %2255 = vmatpush1.bf16.msra.mxu0 0
  %2256 = vmatprep.subr.bf16.mxu0 0
  %2257 = vmatpush1.bf16.msra.mxu0 0
  %2258 = vmatprep.subr.bf16.mxu0 0
  %2259 = vmatpush1.bf16.msra.mxu0 0
  %2260 = vmatprep.subr.bf16.mxu0 0
  %2261 = vmatpush1.bf16.msra.mxu0 0
  %2262 = vmatprep.subr.bf16.mxu0 0
  %2263 = vmatpush1.bf16.msra.mxu0 0
  %2264 = vmatprep.subr.bf16.mxu0 0
  %2265 = vmatpush1.bf16.msra.mxu0 0
  %2266 = vmatprep.subr.bf16.mxu0 0
  %2267 = vmatpush1.bf16.msra.mxu0 0
  %2268 = vmatprep.subr.bf16.mxu0 0
  %2269 = vmatpush1.bf16.msra.mxu0 0
  %2270 = vmatprep.subr.bf16.mxu0 0
  %2271 = vmatpush1.bf16.msra.mxu0 0
  %2272 = vmatprep.subr.bf16.mxu0 0
  %2273 = vmatpush1.bf16.msra.mxu0 0
  %2274 = vmatprep.subr.bf16.mxu0 0
  %2275 = vmatpush1.bf16.msra.mxu0 0
  %2276 = vmatprep.subr.bf16.mxu0 0
  %2277 = vmatpush1.bf16.msra.mxu0 0
  %2278 = vmatprep.mubr.bf16.mxu0 0
  %2279 = vmatmul.mubr.bf16.gmra.mrb[0].mxu0 %v2244
  %v2280 = vpop.f32.mrb[0].mxu0
  %v2281 = vadd.f32 %v2241, %v2280
  %v2282 = vpop.f32.mrb[0].mxu0
  %v2283 = vpop.f32.mrb[0].mxu0
  %v2284 = vadd.f32 %v2241, %v2283
  %v2285 = vpop.f32.mrb[0].mxu0
  %2286 = vdwg.mxu0
  %v2287 = vld [vmem:[%s17] sm:$0xf]
  %v2288 = vld [vmem:[%s17 + $0x4] sm:$0xf]
  %v2289 = vld [vmem:[%s17 + $0x8] sm:$0xf]
  %v2290 = vld [vmem:[%s17 + $0xc] sm:$0xf]
  %v2291 = vpack.c.bf16 %v2212, %v2209
  %v2292 = vpack.c.bf16 %v2220, %v2217
  %v2293 = vpack.c.bf16 %v2228, %v2225
  %v2294 = vpack.c.bf16 %v2284, %v2281
  %v2296 = vsel %vm466, %v2291, 0
  %v2299 = vsel %vm466, %v2292, 0
  %v2302 = vsel %vm466, %v2293, 0
  %v2305 = vsel %vm466, %v2294, 0
  %2307 = vmatprep.subr.bf16.mxu0 0
  %2308 = vmatpush1.bf16.xpose.msra.mxu0 %v2305
  %2309 = vmatprep.subr.bf16.mxu0 0
  %2310 = vmatpush1.bf16.xpose.msra.mxu0 0
  %2311 = vmatprep.subr.bf16.mxu0 0
  %2312 = vmatpush1.bf16.xpose.msra.mxu0 0
  %2313 = vmatprep.subr.bf16.mxu0 0
  %2314 = vmatpush1.bf16.xpose.msra.mxu0 0
  %2315 = vmatprep.subr.bf16.mxu0 0
  %2316 = vmatpush1.bf16.xpose.msra.mxu0 0
  %2317 = vmatprep.subr.bf16.mxu0 0
  %2318 = vmatpush1.bf16.xpose.msra.mxu0 0
  %2319 = vmatprep.subr.bf16.mxu0 0
  %2320 = vmatpush1.bf16.xpose.msra.mxu0 0
  %2321 = vmatprep.subr.bf16.mxu0 0
  %2322 = vmatpush1.bf16.xpose.msra.mxu0 0
  %2323 = vmatprep.subr.bf16.mxu0 0
  %2324 = vmatpush1.bf16.xpose.msra.mxu0 0
  %2325 = vmatprep.subr.bf16.mxu0 0
  %2326 = vmatpush1.bf16.xpose.msra.mxu0 0
  %2327 = vmatprep.subr.bf16.mxu0 0
  %2328 = vmatpush1.bf16.xpose.msra.mxu0 0
  %2329 = vmatprep.subr.bf16.mxu0 0
  %2330 = vmatpush1.bf16.xpose.msra.mxu0 0
  %2331 = vmatprep.subr.bf16.mxu0 0
  %2332 = vmatpush1.bf16.xpose.msra.mxu0 0
  %2333 = vmatprep.subr.bf16.mxu0 0
  %2334 = vmatpush1.bf16.xpose.msra.mxu0 0
  %2335 = vmatprep.subr.bf16.mxu0 0
  %2336 = vmatpush1.bf16.xpose.msra.mxu0 0
  %2337 = vmatprep.subr.bf16.mxu0 0
  %2338 = vmatpush1.bf16.xpose.msra.mxu0 0
  %2339 = vmatprep.mubr.bf16.mxu0 0
  %2340 = vmatmul.mubr.bf16.gmra.mrb[0].mxu0 %v2296
  %v2341 = vpop.f32.mrb[0].mxu0
  %v2342 = vadd.f32 %v234, %v2341
  %v2343 = vpop.f32.mrb[0].mxu0
  %v2344 = vpop.f32.mrb[0].mxu0
  %v2345 = vadd.f32 %v235, %v2344
  %v2346 = vpop.f32.mrb[0].mxu0
  %2347 = vmatprep.mubr.bf16.mxu0 0
  %2348 = vmatmul.mubr.bf16.gmra.mrb[0].mxu0 %v2299
  %v2349 = vpop.f32.mrb[0].mxu0
  %v2350 = vadd.f32 %v236, %v2349
  %v2351 = vpop.f32.mrb[0].mxu0
  %v2352 = vpop.f32.mrb[0].mxu0
  %v2353 = vadd.f32 %v237, %v2352
  %v2354 = vpop.f32.mrb[0].mxu0
  %2355 = vmatprep.mubr.bf16.mxu0 0
  %2356 = vmatmul.mubr.bf16.gmra.mrb[0].mxu0 %v2302
  %v2357 = vpop.f32.mrb[0].mxu0
  %v2358 = vadd.f32 %v238, %v2357
  %v2359 = vpop.f32.mrb[0].mxu0
  %v2360 = vpop.f32.mrb[0].mxu0
  %v2361 = vadd.f32 %v239, %v2360
  %v2362 = vpop.f32.mrb[0].mxu0
  %2363 = vdwg.mxu0
  %v2364 = vsel %vm466, %v2342, -inf
  %2365 = vmax.xlane.f32.xlu0 %v2364
  %v2366 = vpop.xlane.xlu0 %2365
  %v2367 = vsel %vm466, %v2345, -inf
  %2368 = vmax.xlane.f32.xlu0 %v2367
  %v2369 = vpop.xlane.xlu0 %2368
  %v2370 = vsel %vm466, %v2350, -inf
  %2371 = vmax.xlane.f32.xlu0 %v2370
  %v2372 = vpop.xlane.xlu0 %2371
  %v2373 = vsel %vm466, %v2353, -inf
  %2374 = vmax.xlane.f32.xlu0 %v2373
  %v2375 = vpop.xlane.xlu0 %2374
  %v2376 = vsel %vm466, %v2358, -inf
  %2377 = vmax.xlane.f32.xlu0 %v2376
  %v2378 = vpop.xlane.xlu0 %2377
  %v2379 = vsel %vm466, %v2361, -inf
  %2380 = vmax.xlane.f32.xlu0 %v2379
  %v2381 = vpop.xlane.xlu0 %2380
  %v2382 = vsub.f32 %v2342, %v2366
  %v2383 = vsub.f32 %v2345, %v2369
  %v2384 = vsub.f32 %v2350, %v2372
  %v2385 = vsub.f32 %v2353, %v2375
  %v2386 = vsub.f32 %v2358, %v2378
  %v2387 = vsub.f32 %v2361, %v2381
  %v2388 = vmul.f32 %v2382, 1.442695
  %v2389 = vpow.pop %v2388
  %v2390 = vmul.f32 %v2383, 1.442695
  %v2391 = vpow.pop %v2390
  %v2392 = vmul.f32 %v2384, 1.442695
  %v2393 = vpow.pop %v2392
  %v2394 = vmul.f32 %v2385, 1.442695
  %v2395 = vpow.pop %v2394
  %v2396 = vmul.f32 %v2386, 1.442695
  %v2397 = vpow.pop %v2396
  %v2398 = vmul.f32 %v2387, 1.442695
  %v2399 = vpow.pop %v2398
  %v2400 = vsel %vm466, %v2389, 0.0
  %2401 = vadd.xlane.f32.xlu0 %v2400
  %v2402 = vpop.xlane.xlu0 %2401
  %v2403 = vsel %vm466, %v2391, 0.0
  %2404 = vadd.xlane.f32.xlu0 %v2403
  %v2405 = vpop.xlane.xlu0 %2404
  %v2406 = vsel %vm466, %v2393, 0.0
  %2407 = vadd.xlane.f32.xlu0 %v2406
  %v2408 = vpop.xlane.xlu0 %2407
  %v2409 = vsel %vm466, %v2395, 0.0
  %2410 = vadd.xlane.f32.xlu0 %v2409
  %v2411 = vpop.xlane.xlu0 %2410
  %v2412 = vsel %vm466, %v2397, 0.0
  %2413 = vadd.xlane.f32.xlu0 %v2412
  %v2414 = vpop.xlane.xlu0 %2413
  %v2415 = vsel %vm466, %v2399, 0.0
  %2416 = vadd.xlane.f32.xlu0 %v2415
  %v2417 = vpop.xlane.xlu0 %2416
  %v2418 = vrcp.pop %v2402
  %v2419 = vrcp.pop %v2405
  %v2420 = vrcp.pop %v2408
  %v2421 = vrcp.pop %v2411
  %v2422 = vrcp.pop %v2414
  %v2423 = vrcp.pop %v2417
  %v2424 = vmul.f32 %v2389, %v2418
  %v2425 = vmul.f32 %v2391, %v2419
  %v2426 = vmul.f32 %v2393, %v2420
  %v2427 = vmul.f32 %v2395, %v2421
  %v2428 = vmul.f32 %v2397, %v2422
  %v2429 = vmul.f32 %v2399, %v2423
  %v2430 = vpack.c.bf16 %v2425, %v2424
  %v2431 = vpack.c.bf16 %v2427, %v2426
  %v2432 = vpack.c.bf16 %v2429, %v2428
  %2434 = vrot.lane.b32.xlu0 %v2294, 96
  %v2435 = vpop.permute.xlu0 %2434
  %v2438 = vsel %vm466, %v2430, 0
  %v2441 = vsel %vm466, %v2431, 0
  %v2444 = vsel %vm466, %v2432, 0
  %2446 = vmatprep.subr.bf16.mxu0 0
  %2447 = vmatpush1.bf16.msra.mxu0 %v2435
  %2448 = vmatprep.subr.bf16.mxu0 0
  %2449 = vmatpush1.bf16.msra.mxu0 0
  %2450 = vmatprep.subr.bf16.mxu0 0
  %2451 = vmatpush1.bf16.msra.mxu0 0
  %2452 = vmatprep.subr.bf16.mxu0 0
  %2453 = vmatpush1.bf16.msra.mxu0 0
  %2454 = vmatprep.subr.bf16.mxu0 0
  %2455 = vmatpush1.bf16.msra.mxu0 0
  %2456 = vmatprep.subr.bf16.mxu0 0
  %2457 = vmatpush1.bf16.msra.mxu0 0
  %2458 = vmatprep.subr.bf16.mxu0 0
  %2459 = vmatpush1.bf16.msra.mxu0 0
  %2460 = vmatprep.subr.bf16.mxu0 0
  %2461 = vmatpush1.bf16.msra.mxu0 0
  %2462 = vmatprep.subr.bf16.mxu0 0
  %2463 = vmatpush1.bf16.msra.mxu0 0
  %2464 = vmatprep.subr.bf16.mxu0 0
  %2465 = vmatpush1.bf16.msra.mxu0 0
  %2466 = vmatprep.subr.bf16.mxu0 0
  %2467 = vmatpush1.bf16.msra.mxu0 0
  %2468 = vmatprep.subr.bf16.mxu0 0
  %2469 = vmatpush1.bf16.msra.mxu0 0
  %2470 = vmatprep.subr.bf16.mxu0 0
  %2471 = vmatpush1.bf16.msra.mxu0 0
  %2472 = vmatprep.subr.bf16.mxu0 0
  %2473 = vmatpush1.bf16.msra.mxu0 0
  %2474 = vmatprep.subr.bf16.mxu0 0
  %2475 = vmatpush1.bf16.msra.mxu0 0
  %2476 = vmatprep.subr.bf16.mxu0 0
  %2477 = vmatpush1.bf16.msra.mxu0 0
  %2478 = vmatprep.mubr.bf16.mxu0 0
  %2479 = vmatmul.mubr.bf16.gmra.mrb[0].mxu0 %v2438
  %v2480 = vpop.f32.mrb[0].mxu0
  %v2481 = vadd.f32 0.0, %v2480
  %v2482 = vpop.f32.mrb[0].mxu0
  %v2483 = vpop.f32.mrb[0].mxu0
  %v2484 = vadd.f32 0.0, %v2483
  %v2485 = vpop.f32.mrb[0].mxu0
  %2486 = vmatprep.mubr.bf16.mxu0 0
  %2487 = vmatmul.mubr.bf16.gmra.mrb[0].mxu0 %v2441
  %v2488 = vpop.f32.mrb[0].mxu0
  %v2489 = vadd.f32 0.0, %v2488
  %v2490 = vpop.f32.mrb[0].mxu0
  %v2491 = vpop.f32.mrb[0].mxu0
  %v2492 = vadd.f32 0.0, %v2491
  %v2493 = vpop.f32.mrb[0].mxu0
  %2494 = vmatprep.mubr.bf16.mxu0 0
  %2495 = vmatmul.mubr.bf16.gmra.mrb[0].mxu0 %v2444
  %v2496 = vpop.f32.mrb[0].mxu0
  %v2497 = vadd.f32 0.0, %v2496
  %v2498 = vpop.f32.mrb[0].mxu0
  %v2499 = vpop.f32.mrb[0].mxu0
  %v2500 = vadd.f32 0.0, %v2499
  %v2501 = vpop.f32.mrb[0].mxu0
  %2502 = vdwg.mxu0
  %v2503 = vpack.c.bf16 %v2484, %v2481
  %v2504 = vpack.c.bf16 %v2492, %v2489
  %v2505 = vpack.c.bf16 %v2500, %v2497
  %2509 = vrot.lane.b32.xlu0 %v2291, 112
  %v2510 = vpop.permute.xlu0 %2509
  %2511 = vrot.lane.b32.xlu0 %v2292, 112
  %v2512 = vpop.permute.xlu0 %2511
  %2513 = vrot.lane.b32.xlu0 %v2293, 112
  %v2514 = vpop.permute.xlu0 %2513
  %2515 = vrot.lane.b32.xlu0 %v2294, 112
  %v2516 = vpop.permute.xlu0 %2515
  %v2518 = vsel %vm466, %v2510, 0
  %v2521 = vsel %vm466, %v2512, 0
  %v2524 = vsel %vm466, %v2514, 0
  %v2527 = vsel %vm466, %v2516, 0
  %2529 = vmatprep.subr.bf16.mxu0 0
  %2530 = vmatpush1.bf16.xpose.msra.mxu0 %v2527
  %2531 = vmatprep.subr.bf16.mxu0 0
  %2532 = vmatpush1.bf16.xpose.msra.mxu0 0
  %2533 = vmatprep.subr.bf16.mxu0 0
  %2534 = vmatpush1.bf16.xpose.msra.mxu0 0
  %2535 = vmatprep.subr.bf16.mxu0 0
  %2536 = vmatpush1.bf16.xpose.msra.mxu0 0
  %2537 = vmatprep.subr.bf16.mxu0 0
  %2538 = vmatpush1.bf16.xpose.msra.mxu0 0
  %2539 = vmatprep.subr.bf16.mxu0 0
  %2540 = vmatpush1.bf16.xpose.msra.mxu0 0
  %2541 = vmatprep.subr.bf16.mxu0 0
  %2542 = vmatpush1.bf16.xpose.msra.mxu0 0
  %2543 = vmatprep.subr.bf16.mxu0 0
  %2544 = vmatpush1.bf16.xpose.msra.mxu0 0
  %2545 = vmatprep.subr.bf16.mxu0 0
  %2546 = vmatpush1.bf16.xpose.msra.mxu0 0
  %2547 = vmatprep.subr.bf16.mxu0 0
  %2548 = vmatpush1.bf16.xpose.msra.mxu0 0
  %2549 = vmatprep.subr.bf16.mxu0 0
  %2550 = vmatpush1.bf16.xpose.msra.mxu0 0
  %2551 = vmatprep.subr.bf16.mxu0 0
  %2552 = vmatpush1.bf16.xpose.msra.mxu0 0
  %2553 = vmatprep.subr.bf16.mxu0 0
  %2554 = vmatpush1.bf16.xpose.msra.mxu0 0
  %2555 = vmatprep.subr.bf16.mxu0 0
  %2556 = vmatpush1.bf16.xpose.msra.mxu0 0
  %2557 = vmatprep.subr.bf16.mxu0 0
  %2558 = vmatpush1.bf16.xpose.msra.mxu0 0
  %2559 = vmatprep.subr.bf16.mxu0 0
  %2560 = vmatpush1.bf16.xpose.msra.mxu0 0
  %2561 = vmatprep.mubr.bf16.mxu0 0
  %2562 = vmatmul.mubr.bf16.gmra.mrb[0].mxu0 %v2518
  %v2563 = vpop.f32.mrb[0].mxu0
  %v2564 = vadd.f32 %v234, %v2563
  %v2565 = vpop.f32.mrb[0].mxu0
  %v2566 = vpop.f32.mrb[0].mxu0
  %v2567 = vadd.f32 %v235, %v2566
  %v2568 = vpop.f32.mrb[0].mxu0
  %2569 = vmatprep.mubr.bf16.mxu0 0
  %2570 = vmatmul.mubr.bf16.gmra.mrb[0].mxu0 %v2521
  %v2571 = vpop.f32.mrb[0].mxu0
  %v2572 = vadd.f32 %v236, %v2571
  %v2573 = vpop.f32.mrb[0].mxu0
  %v2574 = vpop.f32.mrb[0].mxu0
  %v2575 = vadd.f32 %v237, %v2574
  %v2576 = vpop.f32.mrb[0].mxu0
  %2577 = vmatprep.mubr.bf16.mxu0 0
  %2578 = vmatmul.mubr.bf16.gmra.mrb[0].mxu0 %v2524
  %v2579 = vpop.f32.mrb[0].mxu0
  %v2580 = vadd.f32 %v238, %v2579
  %v2581 = vpop.f32.mrb[0].mxu0
  %v2582 = vpop.f32.mrb[0].mxu0
  %v2583 = vadd.f32 %v239, %v2582
  %v2584 = vpop.f32.mrb[0].mxu0
  %2585 = vdwg.mxu0
  %v2586 = vsel %vm466, %v2564, -inf
  %2587 = vmax.xlane.f32.xlu0 %v2586
  %v2588 = vpop.xlane.xlu0 %2587
  %v2589 = vsel %vm466, %v2567, -inf
  %2590 = vmax.xlane.f32.xlu0 %v2589
  %v2591 = vpop.xlane.xlu0 %2590
  %v2592 = vsel %vm466, %v2572, -inf
  %2593 = vmax.xlane.f32.xlu0 %v2592
  %v2594 = vpop.xlane.xlu0 %2593
  %v2595 = vsel %vm466, %v2575, -inf
  %2596 = vmax.xlane.f32.xlu0 %v2595
  %v2597 = vpop.xlane.xlu0 %2596
  %v2598 = vsel %vm466, %v2580, -inf
  %2599 = vmax.xlane.f32.xlu0 %v2598
  %v2600 = vpop.xlane.xlu0 %2599
  %v2601 = vsel %vm466, %v2583, -inf
  %2602 = vmax.xlane.f32.xlu0 %v2601
  %v2603 = vpop.xlane.xlu0 %2602
  %v2604 = vsub.f32 %v2564, %v2588
  %v2605 = vsub.f32 %v2567, %v2591
  %v2606 = vsub.f32 %v2572, %v2594
  %v2607 = vsub.f32 %v2575, %v2597
  %v2608 = vsub.f32 %v2580, %v2600
  %v2609 = vsub.f32 %v2583, %v2603
  %v2610 = vmul.f32 %v2604, 1.442695
  %v2611 = vpow.pop %v2610
  %v2612 = vmul.f32 %v2605, 1.442695
  %v2613 = vpow.pop %v2612
  %v2614 = vmul.f32 %v2606, 1.442695
  %v2615 = vpow.pop %v2614
  %v2616 = vmul.f32 %v2607, 1.442695
  %v2617 = vpow.pop %v2616
  %v2618 = vmul.f32 %v2608, 1.442695
  %v2619 = vpow.pop %v2618
  %v2620 = vmul.f32 %v2609, 1.442695
  %v2621 = vpow.pop %v2620
  %v2622 = vsel %vm466, %v2611, 0.0
  %2623 = vadd.xlane.f32.xlu0 %v2622
  %v2624 = vpop.xlane.xlu0 %2623
  %v2625 = vsel %vm466, %v2613, 0.0
  %2626 = vadd.xlane.f32.xlu0 %v2625
  %v2627 = vpop.xlane.xlu0 %2626
  %v2628 = vsel %vm466, %v2615, 0.0
  %2629 = vadd.xlane.f32.xlu0 %v2628
  %v2630 = vpop.xlane.xlu0 %2629
  %v2631 = vsel %vm466, %v2617, 0.0
  %2632 = vadd.xlane.f32.xlu0 %v2631
  %v2633 = vpop.xlane.xlu0 %2632
  %v2634 = vsel %vm466, %v2619, 0.0
  %2635 = vadd.xlane.f32.xlu0 %v2634
  %v2636 = vpop.xlane.xlu0 %2635
  %v2637 = vsel %vm466, %v2621, 0.0
  %2638 = vadd.xlane.f32.xlu0 %v2637
  %v2639 = vpop.xlane.xlu0 %2638
  %v2640 = vrcp.pop %v2624
  %v2641 = vrcp.pop %v2627
  %v2642 = vrcp.pop %v2630
  %v2643 = vrcp.pop %v2633
  %v2644 = vrcp.pop %v2636
  %v2645 = vrcp.pop %v2639
  %v2646 = vmul.f32 %v2611, %v2640
  %v2647 = vmul.f32 %v2613, %v2641
  %v2648 = vmul.f32 %v2615, %v2642
  %v2649 = vmul.f32 %v2617, %v2643
  %v2650 = vmul.f32 %v2619, %v2644
  %v2651 = vmul.f32 %v2621, %v2645
  %v2652 = vpack.c.bf16 %v2647, %v2646
  %v2653 = vpack.c.bf16 %v2649, %v2648
  %v2654 = vpack.c.bf16 %v2651, %v2650
  %2655 = vrot.lane.b32.xlu0 %v2294, 80
  %v2656 = vpop.permute.xlu0 %2655
  %v2659 = vsel %vm466, %v2652, 0
  %v2662 = vsel %vm466, %v2653, 0
  %v2665 = vsel %vm466, %v2654, 0
  %2667 = vmatprep.subr.bf16.mxu0 0
  %2668 = vmatpush1.bf16.msra.mxu0 %v2656
  %2669 = vmatprep.subr.bf16.mxu0 0
  %2670 = vmatpush1.bf16.msra.mxu0 0
  %2671 = vmatprep.subr.bf16.mxu0 0
  %2672 = vmatpush1.bf16.msra.mxu0 0
  %2673 = vmatprep.subr.bf16.mxu0 0
  %2674 = vmatpush1.bf16.msra.mxu0 0
  %2675 = vmatprep.subr.bf16.mxu0 0
  %2676 = vmatpush1.bf16.msra.mxu0 0
  %2677 = vmatprep.subr.bf16.mxu0 0
  %2678 = vmatpush1.bf16.msra.mxu0 0
  %2679 = vmatprep.subr.bf16.mxu0 0
  %2680 = vmatpush1.bf16.msra.mxu0 0
  %2681 = vmatprep.subr.bf16.mxu0 0
  %2682 = vmatpush1.bf16.msra.mxu0 0
  %2683 = vmatprep.subr.bf16.mxu0 0
  %2684 = vmatpush1.bf16.msra.mxu0 0
  %2685 = vmatprep.subr.bf16.mxu0 0
  %2686 = vmatpush1.bf16.msra.mxu0 0
  %2687 = vmatprep.subr.bf16.mxu0 0
  %2688 = vmatpush1.bf16.msra.mxu0 0
  %2689 = vmatprep.subr.bf16.mxu0 0
  %2690 = vmatpush1.bf16.msra.mxu0 0
  %2691 = vmatprep.subr.bf16.mxu0 0
  %2692 = vmatpush1.bf16.msra.mxu0 0
  %2693 = vmatprep.subr.bf16.mxu0 0
  %2694 = vmatpush1.bf16.msra.mxu0 0
  %2695 = vmatprep.subr.bf16.mxu0 0
  %2696 = vmatpush1.bf16.msra.mxu0 0
  %2697 = vmatprep.subr.bf16.mxu0 0
  %2698 = vmatpush1.bf16.msra.mxu0 0
  %2699 = vmatprep.mubr.bf16.mxu0 0
  %2700 = vmatmul.mubr.bf16.gmra.mrb[0].mxu0 %v2659
  %v2701 = vpop.f32.mrb[0].mxu0
  %v2702 = vadd.f32 0.0, %v2701
  %v2703 = vpop.f32.mrb[0].mxu0
  %v2704 = vpop.f32.mrb[0].mxu0
  %v2705 = vadd.f32 0.0, %v2704
  %v2706 = vpop.f32.mrb[0].mxu0
  %2707 = vmatprep.mubr.bf16.mxu0 0
  %2708 = vmatmul.mubr.bf16.gmra.mrb[0].mxu0 %v2662
  %v2709 = vpop.f32.mrb[0].mxu0
  %v2710 = vadd.f32 0.0, %v2709
  %v2711 = vpop.f32.mrb[0].mxu0
  %v2712 = vpop.f32.mrb[0].mxu0
  %v2713 = vadd.f32 0.0, %v2712
  %v2714 = vpop.f32.mrb[0].mxu0
  %2715 = vmatprep.mubr.bf16.mxu0 0
  %2716 = vmatmul.mubr.bf16.gmra.mrb[0].mxu0 %v2665
  %v2717 = vpop.f32.mrb[0].mxu0
  %v2718 = vadd.f32 0.0, %v2717
  %v2719 = vpop.f32.mrb[0].mxu0
  %v2720 = vpop.f32.mrb[0].mxu0
  %v2721 = vadd.f32 0.0, %v2720
  %v2722 = vpop.f32.mrb[0].mxu0
  %2723 = vdwg.mxu0
  %v2724 = vpack.c.bf16 %v2705, %v2702
  %v2725 = vpack.c.bf16 %v2713, %v2710
  %v2726 = vpack.c.bf16 %v2721, %v2718
  %v2729 = vunpack.c.l.b16 %v2289
  %v2730 = vunpack.c.l.b16 %v2290
  %v2731 = vpack.c.b16 %v2730, %v2729
  %v2734 = vsel %vm466, %v2724, 0
  %v2737 = vsel %vm466, %v2725, 0
  %v2740 = vsel %vm466, %v2726, 0
  %2742 = vmatprep.subr.bf16.mxu0 0
  %2743 = vmatpush1.bf16.msra.mxu0 %v2731
  %2744 = vmatprep.subr.bf16.mxu0 0
  %2745 = vmatpush1.bf16.msra.mxu0 0
  %2746 = vmatprep.subr.bf16.mxu0 0
  %2747 = vmatpush1.bf16.msra.mxu0 0
  %2748 = vmatprep.subr.bf16.mxu0 0
  %2749 = vmatpush1.bf16.msra.mxu0 0
  %2750 = vmatprep.subr.bf16.mxu0 0
  %2751 = vmatpush1.bf16.msra.mxu0 0
  %2752 = vmatprep.subr.bf16.mxu0 0
  %2753 = vmatpush1.bf16.msra.mxu0 0
  %2754 = vmatprep.subr.bf16.mxu0 0
  %2755 = vmatpush1.bf16.msra.mxu0 0
  %2756 = vmatprep.subr.bf16.mxu0 0
  %2757 = vmatpush1.bf16.msra.mxu0 0
  %2758 = vmatprep.subr.bf16.mxu0 0
  %2759 = vmatpush1.bf16.msra.mxu0 0
  %2760 = vmatprep.subr.bf16.mxu0 0
  %2761 = vmatpush1.bf16.msra.mxu0 0
  %2762 = vmatprep.subr.bf16.mxu0 0
  %2763 = vmatpush1.bf16.msra.mxu0 0
  %2764 = vmatprep.subr.bf16.mxu0 0
  %2765 = vmatpush1.bf16.msra.mxu0 0
  %2766 = vmatprep.subr.bf16.mxu0 0
  %2767 = vmatpush1.bf16.msra.mxu0 0
  %2768 = vmatprep.subr.bf16.mxu0 0
  %2769 = vmatpush1.bf16.msra.mxu0 0
  %2770 = vmatprep.subr.bf16.mxu0 0
  %2771 = vmatpush1.bf16.msra.mxu0 0
  %2772 = vmatprep.subr.bf16.mxu0 0
  %2773 = vmatpush1.bf16.msra.mxu0 0
  %2774 = vmatprep.mubr.bf16.mxu0 0
  %2775 = vmatmul.mubr.bf16.gmra.mrb[0].mxu0 %v2734
  %v2776 = vpop.f32.mrb[0].mxu0
  %v2777 = vadd.f32 0.0, %v2776
  %v2778 = vpop.f32.mrb[0].mxu0
  %v2779 = vpop.f32.mrb[0].mxu0
  %v2780 = vadd.f32 0.0, %v2779
  %v2781 = vpop.f32.mrb[0].mxu0
  %2782 = vmatprep.mubr.bf16.mxu0 0
  %2783 = vmatmul.mubr.bf16.gmra.mrb[0].mxu0 %v2737
  %v2784 = vpop.f32.mrb[0].mxu0
  %v2785 = vadd.f32 0.0, %v2784
  %v2786 = vpop.f32.mrb[0].mxu0
  %v2787 = vpop.f32.mrb[0].mxu0
  %v2788 = vadd.f32 0.0, %v2787
  %v2789 = vpop.f32.mrb[0].mxu0
  %2790 = vmatprep.mubr.bf16.mxu0 0
  %2791 = vmatmul.mubr.bf16.gmra.mrb[0].mxu0 %v2740
  %v2792 = vpop.f32.mrb[0].mxu0
  %v2793 = vadd.f32 0.0, %v2792
  %v2794 = vpop.f32.mrb[0].mxu0
  %v2795 = vpop.f32.mrb[0].mxu0
  %v2796 = vadd.f32 0.0, %v2795
  %v2797 = vpop.f32.mrb[0].mxu0
  %2798 = vdwg.mxu0
  %v2801 = vunpack.c.l.b16 %v2287
  %v2802 = vunpack.c.l.b16 %v2288
  %v2803 = vpack.c.b16 %v2802, %v2801
  %v2806 = vsel %vm466, %v2503, 0
  %v2809 = vsel %vm466, %v2504, 0
  %v2812 = vsel %vm466, %v2505, 0
  %2814 = vmatprep.subr.bf16.mxu0 0
  %2815 = vmatpush1.bf16.msra.mxu0 %v2803
  %2816 = vmatprep.subr.bf16.mxu0 0
  %2817 = vmatpush1.bf16.msra.mxu0 0
  %2818 = vmatprep.subr.bf16.mxu0 0
  %2819 = vmatpush1.bf16.msra.mxu0 0
  %2820 = vmatprep.subr.bf16.mxu0 0
  %2821 = vmatpush1.bf16.msra.mxu0 0
  %2822 = vmatprep.subr.bf16.mxu0 0
  %2823 = vmatpush1.bf16.msra.mxu0 0
  %2824 = vmatprep.subr.bf16.mxu0 0
  %2825 = vmatpush1.bf16.msra.mxu0 0
  %2826 = vmatprep.subr.bf16.mxu0 0
  %2827 = vmatpush1.bf16.msra.mxu0 0
  %2828 = vmatprep.subr.bf16.mxu0 0
  %2829 = vmatpush1.bf16.msra.mxu0 0
  %2830 = vmatprep.subr.bf16.mxu0 0
  %2831 = vmatpush1.bf16.msra.mxu0 0
  %2832 = vmatprep.subr.bf16.mxu0 0
  %2833 = vmatpush1.bf16.msra.mxu0 0
  %2834 = vmatprep.subr.bf16.mxu0 0
  %2835 = vmatpush1.bf16.msra.mxu0 0
  %2836 = vmatprep.subr.bf16.mxu0 0
  %2837 = vmatpush1.bf16.msra.mxu0 0
  %2838 = vmatprep.subr.bf16.mxu0 0
  %2839 = vmatpush1.bf16.msra.mxu0 0
  %2840 = vmatprep.subr.bf16.mxu0 0
  %2841 = vmatpush1.bf16.msra.mxu0 0
  %2842 = vmatprep.subr.bf16.mxu0 0
  %2843 = vmatpush1.bf16.msra.mxu0 0
  %2844 = vmatprep.subr.bf16.mxu0 0
  %2845 = vmatpush1.bf16.msra.mxu0 0
  %2846 = vmatprep.mubr.bf16.mxu0 0
  %2847 = vmatmul.mubr.bf16.gmra.mrb[0].mxu0 %v2806
  %v2848 = vpop.f32.mrb[0].mxu0
  %v2849 = vadd.f32 %v2777, %v2848
  %v2850 = vpop.f32.mrb[0].mxu0
  %v2851 = vpop.f32.mrb[0].mxu0
  %v2852 = vadd.f32 %v2780, %v2851
  %v2853 = vpop.f32.mrb[0].mxu0
  %2854 = vmatprep.mubr.bf16.mxu0 0
  %2855 = vmatmul.mubr.bf16.gmra.mrb[0].mxu0 %v2809
  %v2856 = vpop.f32.mrb[0].mxu0
  %v2857 = vadd.f32 %v2785, %v2856
  %v2858 = vpop.f32.mrb[0].mxu0
  %v2859 = vpop.f32.mrb[0].mxu0
  %v2860 = vadd.f32 %v2788, %v2859
  %v2861 = vpop.f32.mrb[0].mxu0
  %2862 = vmatprep.mubr.bf16.mxu0 0
  %2863 = vmatmul.mubr.bf16.gmra.mrb[0].mxu0 %v2812
  %v2864 = vpop.f32.mrb[0].mxu0
  %v2865 = vadd.f32 %v2793, %v2864
  %v2866 = vpop.f32.mrb[0].mxu0
  %v2867 = vpop.f32.mrb[0].mxu0
  %v2868 = vadd.f32 %v2796, %v2867
  %v2869 = vpop.f32.mrb[0].mxu0
  %2870 = vdwg.mxu0
  %v2871 = vadd.f32 %v2035, %v2849
  %v2872 = vadd.f32 %v2036, %v2852
  %v2873 = vadd.f32 %v2037, %v2857
  %v2874 = vadd.f32 %v2038, %v2860
  %v2875 = vadd.f32 %v2039, %v2865
  %v2876 = vadd.f32 %v2040, %v2868
  %v2877 = vld [vmem:[%s18] sm:$0x1]
  %v2879 = vlaneseq
  %v2880 = vshrl.u32 %v2879, 7
  %v2881 = vsub.s32 0, %v2880
  %v2882 = vrot.slane %v2877, %v2881
  %v2884 = vadd.f32 %v2871, %v2882
  %v2885 = vadd.f32 %v2872, %v2882
  %v2886 = vadd.f32 %v2873, %v2882
  %v2887 = vadd.f32 %v2874, %v2882
  %v2888 = vadd.f32 %v2875, %v2882
  %v2889 = vadd.f32 %v2876, %v2882
  %v2890 = vsel %vm258, %v2884, 0.0
  %2891 = vadd.xlane.f32.xlu0 %v2890
  %v2892 = vpop.xlane.xlu0 %2891
  %v2893 = vsel %vm258, %v2885, 0.0
  %2894 = vadd.xlane.f32.xlu0 %v2893
  %v2895 = vpop.xlane.xlu0 %2894
  %v2896 = vsel %vm258, %v2886, 0.0
  %2897 = vadd.xlane.f32.xlu0 %v2896
  %v2898 = vpop.xlane.xlu0 %2897
  %v2899 = vsel %vm258, %v2887, 0.0
  %2900 = vadd.xlane.f32.xlu0 %v2899
  %v2901 = vpop.xlane.xlu0 %2900
  %v2902 = vsel %vm258, %v2888, 0.0
  %2903 = vadd.xlane.f32.xlu0 %v2902
  %v2904 = vpop.xlane.xlu0 %2903
  %v2905 = vsel %vm258, %v2889, 0.0
  %2906 = vadd.xlane.f32.xlu0 %v2905
  %v2907 = vpop.xlane.xlu0 %2906
  %v2908 = vmul.f32 %v2892, %v277
  %v2909 = vmul.f32 %v2895, %v277
  %v2910 = vmul.f32 %v2898, %v277
  %v2911 = vmul.f32 %v2901, %v277
  %v2912 = vmul.f32 %v2904, %v277
  %v2913 = vmul.f32 %v2907, %v277
  %v2914 = vsub.f32 %v2884, %v2908
  %v2915 = vsub.f32 %v2885, %v2909
  %v2916 = vsub.f32 %v2886, %v2910
  %v2917 = vsub.f32 %v2887, %v2911
  %v2918 = vsub.f32 %v2888, %v2912
  %v2919 = vsub.f32 %v2889, %v2913
  %v2920 = vmul.f32 %v2914, %v2914
  %v2921 = vmul.f32 %v2915, %v2915
  %v2922 = vmul.f32 %v2916, %v2916
  %v2923 = vmul.f32 %v2917, %v2917
  %v2924 = vmul.f32 %v2918, %v2918
  %v2925 = vmul.f32 %v2919, %v2919
  %v2926 = vsel %vm258, %v2920, 0.0
  %2927 = vadd.xlane.f32.xlu0 %v2926
  %v2928 = vpop.xlane.xlu0 %2927
  %v2929 = vsel %vm258, %v2921, 0.0
  %2930 = vadd.xlane.f32.xlu0 %v2929
  %v2931 = vpop.xlane.xlu0 %2930
  %v2932 = vsel %vm258, %v2922, 0.0
  %2933 = vadd.xlane.f32.xlu0 %v2932
  %v2934 = vpop.xlane.xlu0 %2933
  %v2935 = vsel %vm258, %v2923, 0.0
  %2936 = vadd.xlane.f32.xlu0 %v2935
  %v2937 = vpop.xlane.xlu0 %2936
  %v2938 = vsel %vm258, %v2924, 0.0
  %2939 = vadd.xlane.f32.xlu0 %v2938
  %v2940 = vpop.xlane.xlu0 %2939
  %v2941 = vsel %vm258, %v2925, 0.0
  %2942 = vadd.xlane.f32.xlu0 %v2941
  %v2943 = vpop.xlane.xlu0 %2942
  %v2944 = vmul.f32 %v2928, %v277
  %v2945 = vmul.f32 %v2931, %v277
  %v2946 = vmul.f32 %v2934, %v277
  %v2947 = vmul.f32 %v2937, %v277
  %v2948 = vmul.f32 %v2940, %v277
  %v2949 = vmul.f32 %v2943, %v277
  %v2950 = vadd.f32 %v2944, 1e-05
  %v2951 = vadd.f32 %v2945, 1e-05
  %v2952 = vadd.f32 %v2946, 1e-05
  %v2953 = vadd.f32 %v2947, 1e-05
  %v2954 = vadd.f32 %v2948, 1e-05
  %v2955 = vadd.f32 %v2949, 1e-05
  %v2956 = vrsqrt.pop %v2950
  %v2957 = vrsqrt.pop %v2951
  %v2958 = vrsqrt.pop %v2952
  %v2959 = vrsqrt.pop %v2953
  %v2960 = vrsqrt.pop %v2954
  %v2961 = vrsqrt.pop %v2955
  %v2962 = vmul.f32 %v2914, %v2956
  %v2963 = vmul.f32 %v2915, %v2957
  %v2964 = vmul.f32 %v2916, %v2958
  %v2965 = vmul.f32 %v2917, %v2959
  %v2966 = vmul.f32 %v2918, %v2960
  %v2967 = vmul.f32 %v2919, %v2961
  %v2968 = vlaneseq
  %v2969 = vshrl.u32 %v2968, 7
  %v2970 = vsub.s32 6, %v2969
  %v2971 = vrot.slane %v75, %v2970
  %v2972 = vmul.f32 %v2962, %v2971
  %v2973 = vmul.f32 %v2963, %v2971
  %v2974 = vmul.f32 %v2964, %v2971
  %v2975 = vmul.f32 %v2965, %v2971
  %v2976 = vmul.f32 %v2966, %v2971
  %v2977 = vmul.f32 %v2967, %v2971
  %v2978 = vlaneseq
  %v2979 = vshrl.u32 %v2978, 7
  %v2980 = vsub.s32 7, %v2979
  %v2981 = vrot.slane %v75, %v2980
  %v2982 = vadd.f32 %v2972, %v2981
  %v2983 = vadd.f32 %v2973, %v2981
  %v2984 = vadd.f32 %v2974, %v2981
  %v2985 = vadd.f32 %v2975, %v2981
  %v2986 = vadd.f32 %v2976, %v2981
  %v2987 = vadd.f32 %v2977, %v2981
  %v2988 = vpack.c.bf16 %v2983, %v2982
  %v2989 = vpack.c.bf16 %v2985, %v2984
  %v2990 = vpack.c.bf16 %v2987, %v2986
  %v2991 = vld [vmem:[%s19] sm:$0xf]
  %v2992 = vld [vmem:[%s19 + $0x4] sm:$0xf]
  %v2993 = vld [vmem:[%s19 + $0x8] sm:$0xf]
  %v2994 = vld [vmem:[%s19 + $0xc] sm:$0xf]
  %v2995 = vld [vmem:[%s20] sm:$0x1]
  %v2997 = vlaneseq
  %v2998 = vshrl.u32 %v2997, 7
  %v2999 = vsub.s32 0, %v2998
  %v3000 = vrot.slane %v2995, %v2999
  %v3006 = vunpack.c.l.b16 %v2991
  %v3007 = vunpack.c.l.b16 %v2992
  %v3008 = vunpack.c.l.b16 %v2993
  %v3009 = vunpack.c.l.b16 %v2994
  %v3010 = vpack.c.b16 %v3007, %v3006
  %v3011 = vpack.c.b16 %v3009, %v3008
  %v3015 = vsel %vm258, %v2988, 0
  %v3018 = vsel %vm258, %v2989, 0
  %v3021 = vsel %vm258, %v2990, 0
  %3023 = vmatprep.subr.bf16.mxu0 0
  %3024 = vmatpush1.bf16.msra.mxu0 %v3010
  %3025 = vmatprep.subr.bf16.mxu0 0
  %3026 = vmatpush1.bf16.msra.mxu0 %v3011
  %3027 = vmatprep.subr.bf16.mxu0 0
  %3028 = vmatpush1.bf16.msra.mxu0 0
  %3029 = vmatprep.subr.bf16.mxu0 0
  %3030 = vmatpush1.bf16.msra.mxu0 0
  %3031 = vmatprep.subr.bf16.mxu0 0
  %3032 = vmatpush1.bf16.msra.mxu0 0
  %3033 = vmatprep.subr.bf16.mxu0 0
  %3034 = vmatpush1.bf16.msra.mxu0 0
  %3035 = vmatprep.subr.bf16.mxu0 0
  %3036 = vmatpush1.bf16.msra.mxu0 0
  %3037 = vmatprep.subr.bf16.mxu0 0
  %3038 = vmatpush1.bf16.msra.mxu0 0
  %3039 = vmatprep.subr.bf16.mxu0 0
  %3040 = vmatpush1.bf16.msra.mxu0 0
  %3041 = vmatprep.subr.bf16.mxu0 0
  %3042 = vmatpush1.bf16.msra.mxu0 0
  %3043 = vmatprep.subr.bf16.mxu0 0
  %3044 = vmatpush1.bf16.msra.mxu0 0
  %3045 = vmatprep.subr.bf16.mxu0 0
  %3046 = vmatpush1.bf16.msra.mxu0 0
  %3047 = vmatprep.subr.bf16.mxu0 0
  %3048 = vmatpush1.bf16.msra.mxu0 0
  %3049 = vmatprep.subr.bf16.mxu0 0
  %3050 = vmatpush1.bf16.msra.mxu0 0
  %3051 = vmatprep.subr.bf16.mxu0 0
  %3052 = vmatpush1.bf16.msra.mxu0 0
  %3053 = vmatprep.subr.bf16.mxu0 0
  %3054 = vmatpush1.bf16.msra.mxu0 0
  %3055 = vmatprep.mubr.bf16.mxu0 0
  %3056 = vmatmul.mubr.bf16.gmra.mrb[0].mxu0 %v3015
  %v3057 = vpop.f32.mrb[0].mxu0
  %v3058 = vadd.f32 %v3000, %v3057
  %v3059 = vpop.f32.mrb[0].mxu0
  %v3060 = vpop.f32.mrb[0].mxu0
  %v3061 = vadd.f32 %v3000, %v3060
  %v3062 = vpop.f32.mrb[0].mxu0
  %3063 = vmatprep.mubr.bf16.mxu0 0
  %3064 = vmatmul.mubr.bf16.gmra.mrb[0].mxu0 %v3018
  %v3065 = vpop.f32.mrb[0].mxu0
  %v3066 = vadd.f32 %v3000, %v3065
  %v3067 = vpop.f32.mrb[0].mxu0
  %v3068 = vpop.f32.mrb[0].mxu0
  %v3069 = vadd.f32 %v3000, %v3068
  %v3070 = vpop.f32.mrb[0].mxu0
  %3071 = vmatprep.mubr.bf16.mxu0 0
  %3072 = vmatmul.mubr.bf16.gmra.mrb[0].mxu0 %v3021
  %v3073 = vpop.f32.mrb[0].mxu0
  %v3074 = vadd.f32 %v3000, %v3073
  %v3075 = vpop.f32.mrb[0].mxu0
  %v3076 = vpop.f32.mrb[0].mxu0
  %v3077 = vadd.f32 %v3000, %v3076
  %v3078 = vpop.f32.mrb[0].mxu0
  %3079 = vdwg.mxu0
  %v3080 = vmax.f32 %v3058, 0.0
  %v3081 = vmax.f32 %v3061, 0.0
  %v3082 = vmax.f32 %v3066, 0.0
  %v3083 = vmax.f32 %v3069, 0.0
  %v3084 = vmax.f32 %v3074, 0.0
  %v3085 = vmax.f32 %v3077, 0.0
  %v3086 = vpack.c.bf16 %v3081, %v3080
  %v3087 = vpack.c.bf16 %v3083, %v3082
  %v3088 = vpack.c.bf16 %v3085, %v3084
  %v3089 = vld [vmem:[%s21] sm:$0xf]
  %v3090 = vld [vmem:[%s21 + $0x4] sm:$0xf]
  %v3091 = vld [vmem:[%s21 + $0x8] sm:$0xf]
  %v3092 = vld [vmem:[%s21 + $0xc] sm:$0xf]
  %v3093 = vld [vmem:[%s21 + $0x10] sm:$0xf]
  %v3094 = vld [vmem:[%s21 + $0x14] sm:$0xf]
  %v3095 = vld [vmem:[%s21 + $0x18] sm:$0xf]
  %v3096 = vld [vmem:[%s21 + $0x1c] sm:$0xf]
  %v3097 = vld [vmem:[%s21 + $0x20] sm:$0xf]
  %v3098 = vld [vmem:[%s21 + $0x24] sm:$0xf]
  %v3099 = vld [vmem:[%s21 + $0x28] sm:$0xf]
  %v3100 = vld [vmem:[%s21 + $0x2c] sm:$0xf]
  %v3101 = vld [vmem:[%s21 + $0x30] sm:$0xf]
  %v3102 = vld [vmem:[%s21 + $0x34] sm:$0xf]
  %v3103 = vld [vmem:[%s21 + $0x38] sm:$0xf]
  %v3104 = vld [vmem:[%s21 + $0x3c] sm:$0xf]
  %v3121 = vunpack.c.l.b16 %v3089
  %v3122 = vunpack.c.l.b16 %v3090
  %v3123 = vunpack.c.l.b16 %v3091
  %v3124 = vunpack.c.l.b16 %v3092
  %v3125 = vunpack.c.l.b16 %v3093
  %v3126 = vunpack.c.l.b16 %v3094
  %v3127 = vunpack.c.l.b16 %v3095
  %v3128 = vunpack.c.l.b16 %v3096
  %v3129 = vunpack.c.l.b16 %v3097
  %v3130 = vunpack.c.l.b16 %v3098
  %v3131 = vunpack.c.l.b16 %v3099
  %v3132 = vunpack.c.l.b16 %v3100
  %v3133 = vunpack.c.l.b16 %v3101
  %v3134 = vunpack.c.l.b16 %v3102
  %v3135 = vunpack.c.l.b16 %v3103
  %v3136 = vunpack.c.l.b16 %v3104
  %v3137 = vpack.c.b16 %v3122, %v3121
  %v3138 = vpack.c.b16 %v3124, %v3123
  %v3139 = vpack.c.b16 %v3126, %v3125
  %v3140 = vpack.c.b16 %v3128, %v3127
  %v3141 = vpack.c.b16 %v3130, %v3129
  %v3142 = vpack.c.b16 %v3132, %v3131
  %v3143 = vpack.c.b16 %v3134, %v3133
  %v3144 = vpack.c.b16 %v3136, %v3135
  %3153 = vmatprep.subr.bf16.mxu0 0
  %3154 = vmatpush1.bf16.msra.mxu0 %v3137
  %3155 = vmatprep.subr.bf16.mxu0 0
  %3156 = vmatpush1.bf16.msra.mxu0 %v3138
  %3157 = vmatprep.subr.bf16.mxu0 0
  %3158 = vmatpush1.bf16.msra.mxu0 %v3139
  %3159 = vmatprep.subr.bf16.mxu0 0
  %3160 = vmatpush1.bf16.msra.mxu0 %v3140
  %3161 = vmatprep.subr.bf16.mxu0 0
  %3162 = vmatpush1.bf16.msra.mxu0 %v3141
  %3163 = vmatprep.subr.bf16.mxu0 0
  %3164 = vmatpush1.bf16.msra.mxu0 %v3142
  %3165 = vmatprep.subr.bf16.mxu0 0
  %3166 = vmatpush1.bf16.msra.mxu0 %v3143
  %3167 = vmatprep.subr.bf16.mxu0 0
  %3168 = vmatpush1.bf16.msra.mxu0 %v3144
  %3169 = vmatprep.subr.bf16.mxu0 0
  %3170 = vmatpush1.bf16.msra.mxu0 0
  %3171 = vmatprep.subr.bf16.mxu0 0
  %3172 = vmatpush1.bf16.msra.mxu0 0
  %3173 = vmatprep.subr.bf16.mxu0 0
  %3174 = vmatpush1.bf16.msra.mxu0 0
  %3175 = vmatprep.subr.bf16.mxu0 0
  %3176 = vmatpush1.bf16.msra.mxu0 0
  %3177 = vmatprep.subr.bf16.mxu0 0
  %3178 = vmatpush1.bf16.msra.mxu0 0
  %3179 = vmatprep.subr.bf16.mxu0 0
  %3180 = vmatpush1.bf16.msra.mxu0 0
  %3181 = vmatprep.subr.bf16.mxu0 0
  %3182 = vmatpush1.bf16.msra.mxu0 0
  %3183 = vmatprep.subr.bf16.mxu0 0
  %3184 = vmatpush1.bf16.msra.mxu0 0
  %3185 = vmatprep.mubr.bf16.mxu0 0
  %3186 = vmatmul.mubr.bf16.gmra.mrb[0].mxu0 %v3086
  %v3187 = vpop.f32.mrb[0].mxu0
  %v3188 = vadd.f32 0.0, %v3187
  %v3189 = vpop.f32.mrb[0].mxu0
  %v3190 = vpop.f32.mrb[0].mxu0
  %v3191 = vadd.f32 0.0, %v3190
  %v3192 = vpop.f32.mrb[0].mxu0
  %3193 = vmatprep.mubr.bf16.mxu0 0
  %3194 = vmatmul.mubr.bf16.gmra.mrb[0].mxu0 %v3087
  %v3195 = vpop.f32.mrb[0].mxu0
  %v3196 = vadd.f32 0.0, %v3195
  %v3197 = vpop.f32.mrb[0].mxu0
  %v3198 = vpop.f32.mrb[0].mxu0
  %v3199 = vadd.f32 0.0, %v3198
  %v3200 = vpop.f32.mrb[0].mxu0
  %3201 = vmatprep.mubr.bf16.mxu0 0
  %3202 = vmatmul.mubr.bf16.gmra.mrb[0].mxu0 %v3088
  %v3203 = vpop.f32.mrb[0].mxu0
  %v3204 = vadd.f32 0.0, %v3203
  %v3205 = vpop.f32.mrb[0].mxu0
  %v3206 = vpop.f32.mrb[0].mxu0
  %v3207 = vadd.f32 0.0, %v3206
  %v3208 = vpop.f32.mrb[0].mxu0
  %3209 = vdwg.mxu0
  %v3210 = vadd.f32 %v2884, %v3188
  %v3211 = vadd.f32 %v2885, %v3191
  %v3212 = vadd.f32 %v2886, %v3196
  %v3213 = vadd.f32 %v2887, %v3199
  %v3214 = vadd.f32 %v2888, %v3204
  %v3215 = vadd.f32 %v2889, %v3207
  %v3216 = vld [vmem:[%s22] sm:$0x1]
  %v3218 = vlaneseq
  %v3219 = vshrl.u32 %v3218, 7
  %v3220 = vsub.s32 0, %v3219
  %v3221 = vrot.slane %v3216, %v3220
  %v3223 = vadd.f32 %v3210, %v3221
  %v3224 = vadd.f32 %v3211, %v3221
  %v3225 = vadd.f32 %v3212, %v3221
  %v3226 = vadd.f32 %v3213, %v3221
  %v3227 = vadd.f32 %v3214, %v3221
  %v3228 = vadd.f32 %v3215, %v3221
  %v3229 = vmax.f32 %v3223, -1000000.0
  %v3230 = vmax.f32 %v3224, -1000000.0
  %v3231 = vmax.f32 %v3225, -1000000.0
  %v3232 = vmax.f32 %v3226, -1000000.0
  %v3233 = vmax.f32 %v3227, -1000000.0
  %v3234 = vmax.f32 %v3228, -1000000.0
  %v3235 = vmin.f32 %v3229, 1000000.0
  %v3236 = vmin.f32 %v3230, 1000000.0
  %v3237 = vmin.f32 %v3231, 1000000.0
  %v3238 = vmin.f32 %v3232, 1000000.0
  %v3239 = vmin.f32 %v3233, 1000000.0
  %v3240 = vmin.f32 %v3234, 1000000.0
  %3241 = vst.msk [vmem:[%s23] sm:$0xff] %vm258, %v3235
  %3242 = vst.msk [vmem:[%s23 + $0x8] sm:$0xff] %vm258, %v3236
  %3243 = vst.msk [vmem:[%s23 + $0x10] sm:$0xff] %vm258, %v3237
  %3244 = vst.msk [vmem:[%s23 + $0x18] sm:$0xff] %vm258, %v3238
  %3245 = vst.msk [vmem:[%s23 + $0x20] sm:$0xff] %vm258, %v3239
  %3246 = vst.msk [vmem:[%s23 + $0x28] sm:$0xff] %vm258, %v3240
  // Predicated region
  $region94: #{decoder_layer_forward.1} parent=0 // pred_check
    _
  $region95: #{decoder_layer_forward.1} parent=0 // pred_check_branch
    %3248 = sbr.rel (0) target = $region97
  $region96: #{decoder_layer_forward.1} parent=0 // pred_region
    _
  $region97: #{decoder_layer_forward.1} parent=0 // pred_fallthru
    _
  // Predicated region
  $region98: #{decoder_layer_forward.1} parent=0 // pred_check
    _
  $region99: #{decoder_layer_forward.1} parent=0 // pred_check_branch
    %3250 = sbr.rel (0) target = $region101
  $region100: #{decoder_layer_forward.1} parent=0 // pred_region
    _
  $region101: #{decoder_layer_forward.1} parent=0 // pred_fallthru
    _

</llo_original>
